<compile_context>
chip_gen: v6e
topology: v6e:2x2x1
jax: 0.10.0
libtpu: 0.0.40
codegen_flags: <defaults>
</compile_context>

<pallas_src>
import jax
import jax.numpy as jnp
from jax import lax
from jax.experimental import pallas as pl
from jax.experimental.pallas import tpu as pltpu


# ----------------------------------------------------------------------------
# Pallas kernel
# ----------------------------------------------------------------------------
def make_kernel(num_layers: int, T: int, B_tile: int, H: int):
    """Kernel closed over static sizes (B_tile is the padded per-grid-step batch).

    Ref order (inputs):
      x (T, B_tile, I), x_static (B_tile, S), w_s (S, H), b_s (1, H),
      [w_ih_l (in_l, 4H), w_hh_l (H, 4H), b_l (1, 4H)] * num_layers,
      w_out (1, H), b_out (1, 1)
    Outputs: out (T, B_tile)
    Scratch: seq_buf (T, B_tile, H)   -- hidden-state sequence of the current layer
             xproj   (T, B_tile, 4H)  -- hoisted input projection of the current layer
    """
    unroll = T if T < 8 else 8              # bounded unroll (LLO overlap w/o vreg blowup)
    lane_aligned_gates = (H % 128 == 0)

    def kernel(*refs):
        x_ref, xs_ref, w_s_ref, b_s_ref = refs[0:4]
        layer_refs = refs[4 : 4 + 3 * num_layers]
        w_out_ref, b_out_ref = refs[4 + 3 * num_layers : 6 + 3 * num_layers]
        out_ref = refs[6 + 3 * num_layers]
        seq_buf, xproj = refs[7 + 3 * num_layers : 9 + 3 * num_layers]

        # h0 = Linear(static_size, hidden)(x_static); c0 = h0 (same initial state
        # for every layer, matching the PyTorch .repeat(num_layers, 1, 1)).
        h0 = (
            jnp.dot(xs_ref[...], w_s_ref[...], preferred_element_type=jnp.float32)
            + b_s_ref[...]
        )  # (B_tile, H)

        # Stacked LSTM: layer l consumes layer (l-1)'s full output sequence.
        for l in range(num_layers):
            wih = layer_refs[3 * l][...]
            whh = layer_refs[3 * l + 1][...]
            b = layer_refs[3 * l + 2][...]

            # Hoisted input projection: one bulk MXU GEMM over all timesteps, kept
            # off the serial h->h critical path. seq_buf is fully consumed here
            # before the step loop below overwrites it.
            seq_in = x_ref[...] if l == 0 else seq_buf[...]        # (T, B_tile, in_l)
            in_dim = seq_in.shape[-1]
            proj = (
                jnp.dot(
                    seq_in.reshape(T * B_tile, in_dim),
                    wih,
                    preferred_element_type=jnp.float32,
                )
                + b
            )                                                      # (T*B_tile, 4H)
            xproj[...] = proj.reshape(T, B_tile, 4 * H)
            # TODO(synk): for long T on v7x (64 MiB VMEM), chunk this projection over
            # time windows with a double-buffered xproj scratch so the GEMM overlaps
            # the recurrence; optionally cast GEMM inputs to bf16 on v6e/v7x.

            def step(t, carry, whh=whh):
                h, c = carry
                gates = xproj[t] + jnp.dot(
                    h, whh, preferred_element_type=jnp.float32
                )                                                  # (B_tile, 4H) i,f,g,o
                if lane_aligned_gates:
                    # Lane-aligned per-gate activations: 4H (not 8H) EUP columns/step.
                    if_sig = jax.nn.sigmoid(gates[:, 0 : 2 * H])
                    i_g = if_sig[:, 0:H]
                    f_g = if_sig[:, H : 2 * H]
                    g_g = jnp.tanh(gates[:, 2 * H : 3 * H])
                    o_g = jax.nn.sigmoid(gates[:, 3 * H : 4 * H])
                else:
                    # Small H: gate slices would be lane-masked -> activate whole vreg.
                    sig = jax.nn.sigmoid(gates)
                    tg = jnp.tanh(gates)
                    i_g = sig[:, 0:H]
                    f_g = sig[:, H : 2 * H]
                    o_g = sig[:, 3 * H : 4 * H]
                    g_g = tg[:, 2 * H : 3 * H]
                c = f_g * c + i_g * g_g
                h = o_g * jnp.tanh(c)
                seq_buf[t] = h
                return (h, c)

            lax.fori_loop(0, T, step, (h0, h0), unroll=unroll)

        # Output Linear(H, 1), fused as one bulk mul+reduce AFTER the recurrence:
        # a single (T, B_tile) store instead of T lane-sparse masked stores.
        out_ref[...] = (
            jnp.sum(seq_buf[...] * w_out_ref[...], axis=-1) + b_out_ref[0, 0]
        )

    return kernel


# ----------------------------------------------------------------------------
# Wrapper
# ----------------------------------------------------------------------------
def pixel_lstm_forward(x, x_static, params):
    """x: (B, T, I) f32, x_static: (B, S) f32  ->  out: (B, T) f32."""
    B, T, I = x.shape
    S = x_static.shape[1]
    H = params["w_s"].shape[1]
    L = len(params["layers"])

    # Pad batch up to the f32 sublane multiple (8). Padded rows compute finite
    # garbage independently (the recurrence is batch-independent) and are sliced
    # off below. For large batches, tile the batch over a "parallel" grid axis
    # with a lane-dense (multiple-of-128) tile.
    B_pad = ((B + 7) // 8) * 8
    if B_pad > 128:
        B_tile = 128
        B_pad = ((B_pad + B_tile - 1) // B_tile) * B_tile
    else:
        B_tile = B_pad
    n_tiles = B_pad // B_tile

    if B_pad != B:
        x = jnp.pad(x, ((0, B_pad - B), (0, 0), (0, 0)))
        x_static = jnp.pad(x_static, ((0, B_pad - B), (0, 0)))

    x_tm = jnp.transpose(x, (1, 0, 2))  # (T, B_pad, I), time-major

    inputs = [x_tm, x_static, params["w_s"], params["b_s"]]
    for lyr in params["layers"]:
        inputs += [lyr["w_ih"], lyr["w_hh"], lyr["b"]]
    inputs += [params["w_out"], params["b_out"]]

    def full_spec(a):
        # Weights/biases: whole array in VMEM, same block for every grid step.
        return pl.BlockSpec(a.shape, lambda i, _nd=a.ndim: (0,) * _nd)

    in_specs = [
        pl.BlockSpec((T, B_tile, I), lambda i: (0, i, 0)),  # x (batch-tiled)
        pl.BlockSpec((B_tile, S), lambda i: (i, 0)),        # x_static (batch-tiled)
    ] + [full_spec(a) for a in inputs[2:]]

    # TODO(synk): nn.LSTM inter-layer dropout is a training-only op; dropout=0.0 here.
    out_tb = pl.pallas_call(
        make_kernel(L, T, B_tile, H),
        out_shape=jax.ShapeDtypeStruct((T, B_pad), jnp.float32),
        grid_spec=pltpu.PrefetchScalarGridSpec(
            num_scalar_prefetch=0,
            grid=(n_tiles,),
            in_specs=in_specs,
            out_specs=pl.BlockSpec((T, B_tile), lambda i: (0, i)),
            scratch_shapes=[
                pltpu.VMEM((T, B_tile, H), jnp.float32),       # layer output sequence
                pltpu.VMEM((T, B_tile, 4 * H), jnp.float32),   # hoisted input projection
            ],
        ),
        compiler_params=pltpu.CompilerParams(
            # "parallel": shards batch tiles across v7x's two TensorCores.
            dimension_semantics=("parallel",),
            # 32 MiB = scoped default on v6e/v7x, doubles v5e's default; raise
            # (<=~56 MiB on v7x, <=~112 MiB on v5e/v6e) only with bigger tiles.
            vmem_limit_bytes=32 * 1024 * 1024,
        ),
    )(*inputs)
    return out_tb.T[:B]  # (B, T)


# ----------------------------------------------------------------------------
# Deterministic parameter init (same shapes nn.LSTM / nn.Linear would create)
# ----------------------------------------------------------------------------
def init_params(key, input_size, static_size, hidden_size, num_layers):
    scale = 1.0 / jnp.sqrt(hidden_size)
    keys = iter(jax.random.split(key, 3 * num_layers + 4))

    def u(k, shape):
        return jax.random.uniform(k, shape, jnp.float32, -scale, scale)

    params = {
        "w_s": u(next(keys), (static_size, hidden_size)),
        "b_s": u(next(keys), (1, hidden_size)),
        "layers": [],
        "w_out": None,
        "b_out": None,
    }
    for l in range(num_layers):
        in_dim = input_size if l == 0 else hidden_size
        params["layers"].append(
            dict(
                w_ih=u(next(keys), (in_dim, 4 * hidden_size)),
                w_hh=u(next(keys), (hidden_size, 4 * hidden_size)),
                # combined bias (bias_ih + bias_hh in PyTorch)
                b=u(next(keys), (1, 4 * hidden_size)),
            )
        )
    params["w_out"] = u(next(keys), (1, hidden_size))
    params["b_out"] = u(next(keys), (1, 1))
    return params


# ----------------------------------------------------------------------------
# Pure-JAX reference (mirrors the PyTorch forward) for validation
# ----------------------------------------------------------------------------
def reference_forward(x, x_static, params):
    H = params["w_s"].shape[1]
    h0 = x_static @ params["w_s"] + params["b_s"]
    seq = x  # (B, T, feat)
    for lyr in params["layers"]:
        def step(carry, xt, lyr=lyr):
            h, c = carry
            gates = xt @ lyr["w_ih"] + h @ lyr["w_hh"] + lyr["b"]
            i_g = jax.nn.sigmoid(gates[:, :H])
            f_g = jax.nn.sigmoid(gates[:, H : 2 * H])
            g_g = jnp.tanh(gates[:, 2 * H : 3 * H])
            o_g = jax.nn.sigmoid(gates[:, 3 * H :])
            c = f_g * c + i_g * g_g
            h = o_g * jnp.tanh(c)
            return (h, c), h

        _, outs = lax.scan(step, (h0, h0), jnp.transpose(seq, (1, 0, 2)))
        seq = jnp.transpose(outs, (1, 0, 2))  # (B, T, H)
    out = jnp.sum(seq * params["w_out"][None], axis=-1) + params["b_out"][0, 0]
    return out  # (B, T)


# ----------------------------------------------------------------------------
if __name__ == "__main__":
    B, T = 2, 8
    INPUT_SIZE, STATIC_SIZE, HIDDEN_SIZE, NUM_LAYERS = 4, 6, 32, 2

    root = jax.random.PRNGKey(0)
    kx, ks, kp = jax.random.split(root, 3)
    x = jax.random.normal(kx, (B, T, INPUT_SIZE), jnp.float32)
    x_static = jax.random.normal(ks, (B, STATIC_SIZE), jnp.float32)
    params = init_params(kp, INPUT_SIZE, STATIC_SIZE, HIDDEN_SIZE, NUM_LAYERS)

    out = pixel_lstm_forward(x, x_static, params)
    out = jax.block_until_ready(out)

    ref = jax.block_until_ready(reference_forward(x, x_static, params))
    assert out.shape == (B, T)
    assert jnp.allclose(out, ref, atol=1e-4, rtol=1e-4)

    print("KERNEL_OK")
</pallas_src>

<mosaic_0001>
module attributes {stable_mosaic.version = 11 : i64} {
  func.func @kernel(%arg0: i32, %arg1: memref<8x8x4xf32, #tpu.memory_space<vmem>>, %arg2: memref<8x6xf32, #tpu.memory_space<vmem>>, %arg3: memref<6x32xf32, #tpu.memory_space<vmem>>, %arg4: memref<1x32xf32, #tpu.memory_space<vmem>>, %arg5: memref<4x128xf32, #tpu.memory_space<vmem>>, %arg6: memref<32x128xf32, #tpu.memory_space<vmem>>, %arg7: memref<1x128xf32, #tpu.memory_space<vmem>>, %arg8: memref<32x128xf32, #tpu.memory_space<vmem>>, %arg9: memref<32x128xf32, #tpu.memory_space<vmem>>, %arg10: memref<1x128xf32, #tpu.memory_space<vmem>>, %arg11: memref<1x32xf32, #tpu.memory_space<vmem>>, %arg12: memref<1x1xf32, #tpu.memory_space<vmem>>, %arg13: memref<8x8xf32, #tpu.memory_space<vmem>>, %arg14: memref<8x8x32xf32, #tpu.memory_space<vmem>>, %arg15: memref<8x8x128xf32, #tpu.memory_space<vmem>>) attributes {dimension_semantics = [#tpu.dimension_semantics<parallel>], iteration_bounds = array<i64: 1>, scalar_prefetch = 0 : i64, scratch_operands = 2 : i64, tpu.core_type = #tpu.core_type<tc>, window_params = [{transform_indices = @transform_0, window_bounds = array<i64: 8, 8, 4>}, {transform_indices = @transform_1, window_bounds = array<i64: 8, 6>}, {pipeline_mode = #tpu.pipeline_mode<synchronous>, transform_indices = @transform_2, window_bounds = array<i64: 6, 32>}, {pipeline_mode = #tpu.pipeline_mode<synchronous>, transform_indices = @transform_3, window_bounds = array<i64: 1, 32>}, {pipeline_mode = #tpu.pipeline_mode<synchronous>, transform_indices = @transform_4, window_bounds = array<i64: 4, 128>}, {pipeline_mode = #tpu.pipeline_mode<synchronous>, transform_indices = @transform_5, window_bounds = array<i64: 32, 128>}, {pipeline_mode = #tpu.pipeline_mode<synchronous>, transform_indices = @transform_6, window_bounds = array<i64: 1, 128>}, {pipeline_mode = #tpu.pipeline_mode<synchronous>, transform_indices = @transform_7, window_bounds = array<i64: 32, 128>}, {pipeline_mode = #tpu.pipeline_mode<synchronous>, transform_indices = @transform_8, window_bounds = array<i64: 32, 128>}, {pipeline_mode = #tpu.pipeline_mode<synchronous>, transform_indices = @transform_9, window_bounds = array<i64: 1, 128>}, {pipeline_mode = #tpu.pipeline_mode<synchronous>, transform_indices = @transform_10, window_bounds = array<i64: 1, 32>}, {pipeline_mode = #tpu.pipeline_mode<synchronous>, transform_indices = @transform_11, window_bounds = array<i64: 1, 1>}, {transform_indices = @transform_12, window_bounds = array<i64: 8, 8>}]} {
    %c0 = arith.constant 0 : index
    %c0_0 = arith.constant 0 : index
    %0 = vector.load %arg2[%c0, %c0_0] : memref<8x6xf32, #tpu.memory_space<vmem>>, vector<8x6xf32>
    %c0_1 = arith.constant 0 : index
    %c0_2 = arith.constant 0 : index
    %1 = vector.load %arg3[%c0_1, %c0_2] : memref<6x32xf32, #tpu.memory_space<vmem>>, vector<6x32xf32>
    %cst = arith.constant dense<0.000000e+00> : vector<8x32xf32>
    %2 = tpu.matmul %0, %1, %cst {dimension_numbers = #tpu.dot_dimension_numbers<[1], [0], [0], [1], [0, 0, 1, 1], [], []>} : vector<8x6xf32>, vector<6x32xf32>, vector<8x32xf32> -> vector<8x32xf32>
    %c0_3 = arith.constant 0 : index
    %c0_4 = arith.constant 0 : index
    %3 = vector.load %arg4[%c0_3, %c0_4] : memref<1x32xf32, #tpu.memory_space<vmem>>, vector<1x32xf32>
    %4 = vector.broadcast %3 : vector<1x32xf32> to vector<8x32xf32>
    %5 = arith.addf %2, %4 : vector<8x32xf32>
    %c0_5 = arith.constant 0 : index
    %c0_6 = arith.constant 0 : index
    %6 = vector.load %arg5[%c0_5, %c0_6] : memref<4x128xf32, #tpu.memory_space<vmem>>, vector<4x128xf32>
    %c0_7 = arith.constant 0 : index
    %c0_8 = arith.constant 0 : index
    %7 = vector.load %arg6[%c0_7, %c0_8] : memref<32x128xf32, #tpu.memory_space<vmem>>, vector<32x128xf32>
    %c0_9 = arith.constant 0 : index
    %c0_10 = arith.constant 0 : index
    %8 = vector.load %arg7[%c0_9, %c0_10] : memref<1x128xf32, #tpu.memory_space<vmem>>, vector<1x128xf32>
    %c0_11 = arith.constant 0 : index
    %c0_12 = arith.constant 0 : index
    %c0_13 = arith.constant 0 : index
    %9 = vector.load %arg1[%c0_11, %c0_12, %c0_13] : memref<8x8x4xf32, #tpu.memory_space<vmem>>, vector<8x8x4xf32>
    %10 = vector.shape_cast %9 : vector<8x8x4xf32> to vector<64x4xf32>
    %cst_14 = arith.constant dense<0.000000e+00> : vector<64x128xf32>
    %11 = tpu.matmul %10, %6, %cst_14 {dimension_numbers = #tpu.dot_dimension_numbers<[1], [0], [0], [1], [0, 0, 1, 1], [], []>} : vector<64x4xf32>, vector<4x128xf32>, vector<64x128xf32> -> vector<64x128xf32>
    %12 = vector.broadcast %8 : vector<1x128xf32> to vector<64x128xf32>
    %13 = arith.addf %11, %12 : vector<64x128xf32>
    %14 = vector.shape_cast %13 : vector<64x128xf32> to vector<8x8x128xf32>
    %c0_15 = arith.constant 0 : index
    %c0_16 = arith.constant 0 : index
    %c0_17 = arith.constant 0 : index
    %15 = vector.load %arg15[%c0_15, %c0_16, %c0_17] : memref<8x8x128xf32, #tpu.memory_space<vmem>>, vector<8x8x128xf32>
    tpu.vector_store %arg15[%c0_15, %c0_16, %c0_17], %14 {strides = array<i32>} : memref<8x8x128xf32, #tpu.memory_space<vmem>>, vector<8x8x128xf32>,
    %c0_i32 = arith.constant 0 : i32
    %16 = arith.index_cast %c0_i32 : i32 to index
    %c0_18 = arith.constant 0 : index
    %c0_19 = arith.constant 0 : index
    %17 = vector.load %arg15[%16, %c0_18, %c0_19] : memref<8x8x128xf32, #tpu.memory_space<vmem>>, vector<1x8x128xf32>
    %18 = vector.shape_cast %17 : vector<1x8x128xf32> to vector<8x128xf32>
    %cst_20 = arith.constant dense<0.000000e+00> : vector<8x128xf32>
    %19 = tpu.matmul %5, %7, %cst_20 {dimension_numbers = #tpu.dot_dimension_numbers<[1], [0], [0], [1], [0, 0, 1, 1], [], []>} : vector<8x32xf32>, vector<32x128xf32>, vector<8x128xf32> -> vector<8x128xf32>
    %20 = arith.addf %18, %19 : vector<8x128xf32>
    %21 = arith.negf %20 : vector<8x128xf32>
    %22 = math.exp %21 : vector<8x128xf32>
    %cst_21 = arith.constant 1.000000e+00 : f32
    %23 = vector.broadcast %cst_21 : f32 to vector<8x128xf32>
    %24 = arith.addf %23, %22 : vector<8x128xf32>
    %25 = arith.divf %23, %24 : vector<8x128xf32>
    %26 = math.tanh %20 : vector<8x128xf32>
    %27 = vector.extract_strided_slice %25 {offsets = [0, 0], sizes = [8, 32], strides = [1, 1]} : vector<8x128xf32> to vector<8x32xf32>
    %28 = vector.extract_strided_slice %25 {offsets = [0, 32], sizes = [8, 32], strides = [1, 1]} : vector<8x128xf32> to vector<8x32xf32>
    %29 = vector.extract_strided_slice %25 {offsets = [0, 96], sizes = [8, 32], strides = [1, 1]} : vector<8x128xf32> to vector<8x32xf32>
    %30 = vector.extract_strided_slice %26 {offsets = [0, 64], sizes = [8, 32], strides = [1, 1]} : vector<8x128xf32> to vector<8x32xf32>
    %31 = arith.mulf %28, %5 : vector<8x32xf32>
    %32 = arith.mulf %27, %30 : vector<8x32xf32>
    %33 = arith.addf %31, %32 : vector<8x32xf32>
    %34 = math.tanh %33 : vector<8x32xf32>
    %35 = arith.mulf %29, %34 : vector<8x32xf32>
    %36 = arith.index_cast %c0_i32 : i32 to index
    %c0_22 = arith.constant 0 : index
    %c0_23 = arith.constant 0 : index
    %37 = vector.load %arg14[%36, %c0_22, %c0_23] : memref<8x8x32xf32, #tpu.memory_space<vmem>>, vector<1x8x32xf32>
    %38 = vector.shape_cast %37 : vector<1x8x32xf32> to vector<8x32xf32>
    %39 = vector.shape_cast %35 : vector<8x32xf32> to vector<1x8x32xf32>
    tpu.vector_store %arg14[%36, %c0_22, %c0_23], %39 {strides = array<i32>} : memref<8x8x32xf32, #tpu.memory_space<vmem>>, vector<1x8x32xf32>,
    %c1_i32 = arith.constant 1 : i32
    %40 = arith.index_cast %c1_i32 : i32 to index
    %c0_24 = arith.constant 0 : index
    %c0_25 = arith.constant 0 : index
    %41 = vector.load %arg15[%40, %c0_24, %c0_25] : memref<8x8x128xf32, #tpu.memory_space<vmem>>, vector<1x8x128xf32>
    %42 = vector.shape_cast %41 : vector<1x8x128xf32> to vector<8x128xf32>
    %cst_26 = arith.constant dense<0.000000e+00> : vector<8x128xf32>
    %43 = tpu.matmul %35, %7, %cst_26 {dimension_numbers = #tpu.dot_dimension_numbers<[1], [0], [0], [1], [0, 0, 1, 1], [], []>} : vector<8x32xf32>, vector<32x128xf32>, vector<8x128xf32> -> vector<8x128xf32>
    %44 = arith.addf %42, %43 : vector<8x128xf32>
    %45 = arith.negf %44 : vector<8x128xf32>
    %46 = math.exp %45 : vector<8x128xf32>
    %cst_27 = arith.constant 1.000000e+00 : f32
    %47 = vector.broadcast %cst_27 : f32 to vector<8x128xf32>
    %48 = arith.addf %47, %46 : vector<8x128xf32>
    %49 = arith.divf %47, %48 : vector<8x128xf32>
    %50 = math.tanh %44 : vector<8x128xf32>
    %51 = vector.extract_strided_slice %49 {offsets = [0, 0], sizes = [8, 32], strides = [1, 1]} : vector<8x128xf32> to vector<8x32xf32>
    %52 = vector.extract_strided_slice %49 {offsets = [0, 32], sizes = [8, 32], strides = [1, 1]} : vector<8x128xf32> to vector<8x32xf32>
    %53 = vector.extract_strided_slice %49 {offsets = [0, 96], sizes = [8, 32], strides = [1, 1]} : vector<8x128xf32> to vector<8x32xf32>
    %54 = vector.extract_strided_slice %50 {offsets = [0, 64], sizes = [8, 32], strides = [1, 1]} : vector<8x128xf32> to vector<8x32xf32>
    %55 = arith.mulf %52, %33 : vector<8x32xf32>
    %56 = arith.mulf %51, %54 : vector<8x32xf32>
    %57 = arith.addf %55, %56 : vector<8x32xf32>
    %58 = math.tanh %57 : vector<8x32xf32>
    %59 = arith.mulf %53, %58 : vector<8x32xf32>
    %60 = arith.index_cast %c1_i32 : i32 to index
    %c0_28 = arith.constant 0 : index
    %c0_29 = arith.constant 0 : index
    %61 = vector.load %arg14[%60, %c0_28, %c0_29] : memref<8x8x32xf32, #tpu.memory_space<vmem>>, vector<1x8x32xf32>
    %62 = vector.shape_cast %61 : vector<1x8x32xf32> to vector<8x32xf32>
    %63 = vector.shape_cast %59 : vector<8x32xf32> to vector<1x8x32xf32>
    tpu.vector_store %arg14[%60, %c0_28, %c0_29], %63 {strides = array<i32>} : memref<8x8x32xf32, #tpu.memory_space<vmem>>, vector<1x8x32xf32>,
    %c2_i32 = arith.constant 2 : i32
    %64 = arith.index_cast %c2_i32 : i32 to index
    %c0_30 = arith.constant 0 : index
    %c0_31 = arith.constant 0 : index
    %65 = vector.load %arg15[%64, %c0_30, %c0_31] : memref<8x8x128xf32, #tpu.memory_space<vmem>>, vector<1x8x128xf32>
    %66 = vector.shape_cast %65 : vector<1x8x128xf32> to vector<8x128xf32>
    %cst_32 = arith.constant dense<0.000000e+00> : vector<8x128xf32>
    %67 = tpu.matmul %59, %7, %cst_32 {dimension_numbers = #tpu.dot_dimension_numbers<[1], [0], [0], [1], [0, 0, 1, 1], [], []>} : vector<8x32xf32>, vector<32x128xf32>, vector<8x128xf32> -> vector<8x128xf32>
    %68 = arith.addf %66, %67 : vector<8x128xf32>
    %69 = arith.negf %68 : vector<8x128xf32>
    %70 = math.exp %69 : vector<8x128xf32>
    %cst_33 = arith.constant 1.000000e+00 : f32
    %71 = vector.broadcast %cst_33 : f32 to vector<8x128xf32>
    %72 = arith.addf %71, %70 : vector<8x128xf32>
    %73 = arith.divf %71, %72 : vector<8x128xf32>
    %74 = math.tanh %68 : vector<8x128xf32>
    %75 = vector.extract_strided_slice %73 {offsets = [0, 0], sizes = [8, 32], strides = [1, 1]} : vector<8x128xf32> to vector<8x32xf32>
    %76 = vector.extract_strided_slice %73 {offsets = [0, 32], sizes = [8, 32], strides = [1, 1]} : vector<8x128xf32> to vector<8x32xf32>
    %77 = vector.extract_strided_slice %73 {offsets = [0, 96], sizes = [8, 32], strides = [1, 1]} : vector<8x128xf32> to vector<8x32xf32>
    %78 = vector.extract_strided_slice %74 {offsets = [0, 64], sizes = [8, 32], strides = [1, 1]} : vector<8x128xf32> to vector<8x32xf32>
    %79 = arith.mulf %76, %57 : vector<8x32xf32>
    %80 = arith.mulf %75, %78 : vector<8x32xf32>
    %81 = arith.addf %79, %80 : vector<8x32xf32>
    %82 = math.tanh %81 : vector<8x32xf32>
    %83 = arith.mulf %77, %82 : vector<8x32xf32>
    %84 = arith.index_cast %c2_i32 : i32 to index
    %c0_34 = arith.constant 0 : index
    %c0_35 = arith.constant 0 : index
    %85 = vector.load %arg14[%84, %c0_34, %c0_35] : memref<8x8x32xf32, #tpu.memory_space<vmem>>, vector<1x8x32xf32>
    %86 = vector.shape_cast %85 : vector<1x8x32xf32> to vector<8x32xf32>
    %87 = vector.shape_cast %83 : vector<8x32xf32> to vector<1x8x32xf32>
    tpu.vector_store %arg14[%84, %c0_34, %c0_35], %87 {strides = array<i32>} : memref<8x8x32xf32, #tpu.memory_space<vmem>>, vector<1x8x32xf32>,
    %c3_i32 = arith.constant 3 : i32
    %88 = arith.index_cast %c3_i32 : i32 to index
    %c0_36 = arith.constant 0 : index
    %c0_37 = arith.constant 0 : index
    %89 = vector.load %arg15[%88, %c0_36, %c0_37] : memref<8x8x128xf32, #tpu.memory_space<vmem>>, vector<1x8x128xf32>
    %90 = vector.shape_cast %89 : vector<1x8x128xf32> to vector<8x128xf32>
    %cst_38 = arith.constant dense<0.000000e+00> : vector<8x128xf32>
    %91 = tpu.matmul %83, %7, %cst_38 {dimension_numbers = #tpu.dot_dimension_numbers<[1], [0], [0], [1], [0, 0, 1, 1], [], []>} : vector<8x32xf32>, vector<32x128xf32>, vector<8x128xf32> -> vector<8x128xf32>
    %92 = arith.addf %90, %91 : vector<8x128xf32>
    %93 = arith.negf %92 : vector<8x128xf32>
    %94 = math.exp %93 : vector<8x128xf32>
    %cst_39 = arith.constant 1.000000e+00 : f32
    %95 = vector.broadcast %cst_39 : f32 to vector<8x128xf32>
    %96 = arith.addf %95, %94 : vector<8x128xf32>
    %97 = arith.divf %95, %96 : vector<8x128xf32>
    %98 = math.tanh %92 : vector<8x128xf32>
    %99 = vector.extract_strided_slice %97 {offsets = [0, 0], sizes = [8, 32], strides = [1, 1]} : vector<8x128xf32> to vector<8x32xf32>
    %100 = vector.extract_strided_slice %97 {offsets = [0, 32], sizes = [8, 32], strides = [1, 1]} : vector<8x128xf32> to vector<8x32xf32>
    %101 = vector.extract_strided_slice %97 {offsets = [0, 96], sizes = [8, 32], strides = [1, 1]} : vector<8x128xf32> to vector<8x32xf32>
    %102 = vector.extract_strided_slice %98 {offsets = [0, 64], sizes = [8, 32], strides = [1, 1]} : vector<8x128xf32> to vector<8x32xf32>
    %103 = arith.mulf %100, %81 : vector<8x32xf32>
    %104 = arith.mulf %99, %102 : vector<8x32xf32>
    %105 = arith.addf %103, %104 : vector<8x32xf32>
    %106 = math.tanh %105 : vector<8x32xf32>
    %107 = arith.mulf %101, %106 : vector<8x32xf32>
    %108 = arith.index_cast %c3_i32 : i32 to index
    %c0_40 = arith.constant 0 : index
    %c0_41 = arith.constant 0 : index
    %109 = vector.load %arg14[%108, %c0_40, %c0_41] : memref<8x8x32xf32, #tpu.memory_space<vmem>>, vector<1x8x32xf32>
    %110 = vector.shape_cast %109 : vector<1x8x32xf32> to vector<8x32xf32>
    %111 = vector.shape_cast %107 : vector<8x32xf32> to vector<1x8x32xf32>
    tpu.vector_store %arg14[%108, %c0_40, %c0_41], %111 {strides = array<i32>} : memref<8x8x32xf32, #tpu.memory_space<vmem>>, vector<1x8x32xf32>,
    %c4_i32 = arith.constant 4 : i32
    %112 = arith.index_cast %c4_i32 : i32 to index
    %c0_42 = arith.constant 0 : index
    %c0_43 = arith.constant 0 : index
    %113 = vector.load %arg15[%112, %c0_42, %c0_43] : memref<8x8x128xf32, #tpu.memory_space<vmem>>, vector<1x8x128xf32>
    %114 = vector.shape_cast %113 : vector<1x8x128xf32> to vector<8x128xf32>
    %cst_44 = arith.constant dense<0.000000e+00> : vector<8x128xf32>
    %115 = tpu.matmul %107, %7, %cst_44 {dimension_numbers = #tpu.dot_dimension_numbers<[1], [0], [0], [1], [0, 0, 1, 1], [], []>} : vector<8x32xf32>, vector<32x128xf32>, vector<8x128xf32> -> vector<8x128xf32>
    %116 = arith.addf %114, %115 : vector<8x128xf32>
    %117 = arith.negf %116 : vector<8x128xf32>
    %118 = math.exp %117 : vector<8x128xf32>
    %cst_45 = arith.constant 1.000000e+00 : f32
    %119 = vector.broadcast %cst_45 : f32 to vector<8x128xf32>
    %120 = arith.addf %119, %118 : vector<8x128xf32>
    %121 = arith.divf %119, %120 : vector<8x128xf32>
    %122 = math.tanh %116 : vector<8x128xf32>
    %123 = vector.extract_strided_slice %121 {offsets = [0, 0], sizes = [8, 32], strides = [1, 1]} : vector<8x128xf32> to vector<8x32xf32>
    %124 = vector.extract_strided_slice %121 {offsets = [0, 32], sizes = [8, 32], strides = [1, 1]} : vector<8x128xf32> to vector<8x32xf32>
    %125 = vector.extract_strided_slice %121 {offsets = [0, 96], sizes = [8, 32], strides = [1, 1]} : vector<8x128xf32> to vector<8x32xf32>
    %126 = vector.extract_strided_slice %122 {offsets = [0, 64], sizes = [8, 32], strides = [1, 1]} : vector<8x128xf32> to vector<8x32xf32>
    %127 = arith.mulf %124, %105 : vector<8x32xf32>
    %128 = arith.mulf %123, %126 : vector<8x32xf32>
    %129 = arith.addf %127, %128 : vector<8x32xf32>
    %130 = math.tanh %129 : vector<8x32xf32>
    %131 = arith.mulf %125, %130 : vector<8x32xf32>
    %132 = arith.index_cast %c4_i32 : i32 to index
    %c0_46 = arith.constant 0 : index
    %c0_47 = arith.constant 0 : index
    %133 = vector.load %arg14[%132, %c0_46, %c0_47] : memref<8x8x32xf32, #tpu.memory_space<vmem>>, vector<1x8x32xf32>
    %134 = vector.shape_cast %133 : vector<1x8x32xf32> to vector<8x32xf32>
    %135 = vector.shape_cast %131 : vector<8x32xf32> to vector<1x8x32xf32>
    tpu.vector_store %arg14[%132, %c0_46, %c0_47], %135 {strides = array<i32>} : memref<8x8x32xf32, #tpu.memory_space<vmem>>, vector<1x8x32xf32>,
    %c5_i32 = arith.constant 5 : i32
    %136 = arith.index_cast %c5_i32 : i32 to index
    %c0_48 = arith.constant 0 : index
    %c0_49 = arith.constant 0 : index
    %137 = vector.load %arg15[%136, %c0_48, %c0_49] : memref<8x8x128xf32, #tpu.memory_space<vmem>>, vector<1x8x128xf32>
    %138 = vector.shape_cast %137 : vector<1x8x128xf32> to vector<8x128xf32>
    %cst_50 = arith.constant dense<0.000000e+00> : vector<8x128xf32>
    %139 = tpu.matmul %131, %7, %cst_50 {dimension_numbers = #tpu.dot_dimension_numbers<[1], [0], [0], [1], [0, 0, 1, 1], [], []>} : vector<8x32xf32>, vector<32x128xf32>, vector<8x128xf32> -> vector<8x128xf32>
    %140 = arith.addf %138, %139 : vector<8x128xf32>
    %141 = arith.negf %140 : vector<8x128xf32>
    %142 = math.exp %141 : vector<8x128xf32>
    %cst_51 = arith.constant 1.000000e+00 : f32
    %143 = vector.broadcast %cst_51 : f32 to vector<8x128xf32>
    %144 = arith.addf %143, %142 : vector<8x128xf32>
    %145 = arith.divf %143, %144 : vector<8x128xf32>
    %146 = math.tanh %140 : vector<8x128xf32>
    %147 = vector.extract_strided_slice %145 {offsets = [0, 0], sizes = [8, 32], strides = [1, 1]} : vector<8x128xf32> to vector<8x32xf32>
    %148 = vector.extract_strided_slice %145 {offsets = [0, 32], sizes = [8, 32], strides = [1, 1]} : vector<8x128xf32> to vector<8x32xf32>
    %149 = vector.extract_strided_slice %145 {offsets = [0, 96], sizes = [8, 32], strides = [1, 1]} : vector<8x128xf32> to vector<8x32xf32>
    %150 = vector.extract_strided_slice %146 {offsets = [0, 64], sizes = [8, 32], strides = [1, 1]} : vector<8x128xf32> to vector<8x32xf32>
    %151 = arith.mulf %148, %129 : vector<8x32xf32>
    %152 = arith.mulf %147, %150 : vector<8x32xf32>
    %153 = arith.addf %151, %152 : vector<8x32xf32>
    %154 = math.tanh %153 : vector<8x32xf32>
    %155 = arith.mulf %149, %154 : vector<8x32xf32>
    %156 = arith.index_cast %c5_i32 : i32 to index
    %c0_52 = arith.constant 0 : index
    %c0_53 = arith.constant 0 : index
    %157 = vector.load %arg14[%156, %c0_52, %c0_53] : memref<8x8x32xf32, #tpu.memory_space<vmem>>, vector<1x8x32xf32>
    %158 = vector.shape_cast %157 : vector<1x8x32xf32> to vector<8x32xf32>
    %159 = vector.shape_cast %155 : vector<8x32xf32> to vector<1x8x32xf32>
    tpu.vector_store %arg14[%156, %c0_52, %c0_53], %159 {strides = array<i32>} : memref<8x8x32xf32, #tpu.memory_space<vmem>>, vector<1x8x32xf32>,
    %c6_i32 = arith.constant 6 : i32
    %160 = arith.index_cast %c6_i32 : i32 to index
    %c0_54 = arith.constant 0 : index
    %c0_55 = arith.constant 0 : index
    %161 = vector.load %arg15[%160, %c0_54, %c0_55] : memref<8x8x128xf32, #tpu.memory_space<vmem>>, vector<1x8x128xf32>
    %162 = vector.shape_cast %161 : vector<1x8x128xf32> to vector<8x128xf32>
    %cst_56 = arith.constant dense<0.000000e+00> : vector<8x128xf32>
    %163 = tpu.matmul %155, %7, %cst_56 {dimension_numbers = #tpu.dot_dimension_numbers<[1], [0], [0], [1], [0, 0, 1, 1], [], []>} : vector<8x32xf32>, vector<32x128xf32>, vector<8x128xf32> -> vector<8x128xf32>
    %164 = arith.addf %162, %163 : vector<8x128xf32>
    %165 = arith.negf %164 : vector<8x128xf32>
    %166 = math.exp %165 : vector<8x128xf32>
    %cst_57 = arith.constant 1.000000e+00 : f32
    %167 = vector.broadcast %cst_57 : f32 to vector<8x128xf32>
    %168 = arith.addf %167, %166 : vector<8x128xf32>
    %169 = arith.divf %167, %168 : vector<8x128xf32>
    %170 = math.tanh %164 : vector<8x128xf32>
    %171 = vector.extract_strided_slice %169 {offsets = [0, 0], sizes = [8, 32], strides = [1, 1]} : vector<8x128xf32> to vector<8x32xf32>
    %172 = vector.extract_strided_slice %169 {offsets = [0, 32], sizes = [8, 32], strides = [1, 1]} : vector<8x128xf32> to vector<8x32xf32>
    %173 = vector.extract_strided_slice %169 {offsets = [0, 96], sizes = [8, 32], strides = [1, 1]} : vector<8x128xf32> to vector<8x32xf32>
    %174 = vector.extract_strided_slice %170 {offsets = [0, 64], sizes = [8, 32], strides = [1, 1]} : vector<8x128xf32> to vector<8x32xf32>
    %175 = arith.mulf %172, %153 : vector<8x32xf32>
    %176 = arith.mulf %171, %174 : vector<8x32xf32>
    %177 = arith.addf %175, %176 : vector<8x32xf32>
    %178 = math.tanh %177 : vector<8x32xf32>
    %179 = arith.mulf %173, %178 : vector<8x32xf32>
    %180 = arith.index_cast %c6_i32 : i32 to index
    %c0_58 = arith.constant 0 : index
    %c0_59 = arith.constant 0 : index
    %181 = vector.load %arg14[%180, %c0_58, %c0_59] : memref<8x8x32xf32, #tpu.memory_space<vmem>>, vector<1x8x32xf32>
    %182 = vector.shape_cast %181 : vector<1x8x32xf32> to vector<8x32xf32>
    %183 = vector.shape_cast %179 : vector<8x32xf32> to vector<1x8x32xf32>
    tpu.vector_store %arg14[%180, %c0_58, %c0_59], %183 {strides = array<i32>} : memref<8x8x32xf32, #tpu.memory_space<vmem>>, vector<1x8x32xf32>,
    %c7_i32 = arith.constant 7 : i32
    %184 = arith.index_cast %c7_i32 : i32 to index
    %c0_60 = arith.constant 0 : index
    %c0_61 = arith.constant 0 : index
    %185 = vector.load %arg15[%184, %c0_60, %c0_61] : memref<8x8x128xf32, #tpu.memory_space<vmem>>, vector<1x8x128xf32>
    %186 = vector.shape_cast %185 : vector<1x8x128xf32> to vector<8x128xf32>
    %cst_62 = arith.constant dense<0.000000e+00> : vector<8x128xf32>
    %187 = tpu.matmul %179, %7, %cst_62 {dimension_numbers = #tpu.dot_dimension_numbers<[1], [0], [0], [1], [0, 0, 1, 1], [], []>} : vector<8x32xf32>, vector<32x128xf32>, vector<8x128xf32> -> vector<8x128xf32>
    %188 = arith.addf %186, %187 : vector<8x128xf32>
    %189 = arith.negf %188 : vector<8x128xf32>
    %190 = math.exp %189 : vector<8x128xf32>
    %cst_63 = arith.constant 1.000000e+00 : f32
    %191 = vector.broadcast %cst_63 : f32 to vector<8x128xf32>
    %192 = arith.addf %191, %190 : vector<8x128xf32>
    %193 = arith.divf %191, %192 : vector<8x128xf32>
    %194 = math.tanh %188 : vector<8x128xf32>
    %195 = vector.extract_strided_slice %193 {offsets = [0, 0], sizes = [8, 32], strides = [1, 1]} : vector<8x128xf32> to vector<8x32xf32>
    %196 = vector.extract_strided_slice %193 {offsets = [0, 32], sizes = [8, 32], strides = [1, 1]} : vector<8x128xf32> to vector<8x32xf32>
    %197 = vector.extract_strided_slice %193 {offsets = [0, 96], sizes = [8, 32], strides = [1, 1]} : vector<8x128xf32> to vector<8x32xf32>
    %198 = vector.extract_strided_slice %194 {offsets = [0, 64], sizes = [8, 32], strides = [1, 1]} : vector<8x128xf32> to vector<8x32xf32>
    %199 = arith.mulf %196, %177 : vector<8x32xf32>
    %200 = arith.mulf %195, %198 : vector<8x32xf32>
    %201 = arith.addf %199, %200 : vector<8x32xf32>
    %202 = math.tanh %201 : vector<8x32xf32>
    %203 = arith.mulf %197, %202 : vector<8x32xf32>
    %204 = arith.index_cast %c7_i32 : i32 to index
    %c0_64 = arith.constant 0 : index
    %c0_65 = arith.constant 0 : index
    %205 = vector.load %arg14[%204, %c0_64, %c0_65] : memref<8x8x32xf32, #tpu.memory_space<vmem>>, vector<1x8x32xf32>
    %206 = vector.shape_cast %205 : vector<1x8x32xf32> to vector<8x32xf32>
    %207 = vector.shape_cast %203 : vector<8x32xf32> to vector<1x8x32xf32>
    tpu.vector_store %arg14[%204, %c0_64, %c0_65], %207 {strides = array<i32>} : memref<8x8x32xf32, #tpu.memory_space<vmem>>, vector<1x8x32xf32>,
    %c8_i32 = arith.constant 8 : i32
    %c0_66 = arith.constant 0 : index
    %c0_67 = arith.constant 0 : index
    %208 = vector.load %arg8[%c0_66, %c0_67] : memref<32x128xf32, #tpu.memory_space<vmem>>, vector<32x128xf32>
    %c0_68 = arith.constant 0 : index
    %c0_69 = arith.constant 0 : index
    %209 = vector.load %arg9[%c0_68, %c0_69] : memref<32x128xf32, #tpu.memory_space<vmem>>, vector<32x128xf32>
    %c0_70 = arith.constant 0 : index
    %c0_71 = arith.constant 0 : index
    %210 = vector.load %arg10[%c0_70, %c0_71] : memref<1x128xf32, #tpu.memory_space<vmem>>, vector<1x128xf32>
    %c0_72 = arith.constant 0 : index
    %c0_73 = arith.constant 0 : index
    %c0_74 = arith.constant 0 : index
    %211 = vector.load %arg14[%c0_72, %c0_73, %c0_74] : memref<8x8x32xf32, #tpu.memory_space<vmem>>, vector<8x8x32xf32>
    %212 = vector.shape_cast %211 : vector<8x8x32xf32> to vector<64x32xf32>
    %cst_75 = arith.constant dense<0.000000e+00> : vector<64x128xf32>
    %213 = tpu.matmul %212, %208, %cst_75 {dimension_numbers = #tpu.dot_dimension_numbers<[1], [0], [0], [1], [0, 0, 1, 1], [], []>} : vector<64x32xf32>, vector<32x128xf32>, vector<64x128xf32> -> vector<64x128xf32>
    %214 = vector.broadcast %210 : vector<1x128xf32> to vector<64x128xf32>
    %215 = arith.addf %213, %214 : vector<64x128xf32>
    %216 = vector.shape_cast %215 : vector<64x128xf32> to vector<8x8x128xf32>
    %c0_76 = arith.constant 0 : index
    %c0_77 = arith.constant 0 : index
    %c0_78 = arith.constant 0 : index
    %217 = vector.load %arg15[%c0_76, %c0_77, %c0_78] : memref<8x8x128xf32, #tpu.memory_space<vmem>>, vector<8x8x128xf32>
    tpu.vector_store %arg15[%c0_76, %c0_77, %c0_78], %216 {strides = array<i32>} : memref<8x8x128xf32, #tpu.memory_space<vmem>>, vector<8x8x128xf32>,
    %c0_i32_79 = arith.constant 0 : i32
    %218 = arith.index_cast %c0_i32_79 : i32 to index
    %c0_80 = arith.constant 0 : index
    %c0_81 = arith.constant 0 : index
    %219 = vector.load %arg15[%218, %c0_80, %c0_81] : memref<8x8x128xf32, #tpu.memory_space<vmem>>, vector<1x8x128xf32>
    %220 = vector.shape_cast %219 : vector<1x8x128xf32> to vector<8x128xf32>
    %cst_82 = arith.constant dense<0.000000e+00> : vector<8x128xf32>
    %221 = tpu.matmul %5, %209, %cst_82 {dimension_numbers = #tpu.dot_dimension_numbers<[1], [0], [0], [1], [0, 0, 1, 1], [], []>} : vector<8x32xf32>, vector<32x128xf32>, vector<8x128xf32> -> vector<8x128xf32>
    %222 = arith.addf %220, %221 : vector<8x128xf32>
    %223 = arith.negf %222 : vector<8x128xf32>
    %224 = math.exp %223 : vector<8x128xf32>
    %cst_83 = arith.constant 1.000000e+00 : f32
    %225 = vector.broadcast %cst_83 : f32 to vector<8x128xf32>
    %226 = arith.addf %225, %224 : vector<8x128xf32>
    %227 = arith.divf %225, %226 : vector<8x128xf32>
    %228 = math.tanh %222 : vector<8x128xf32>
    %229 = vector.extract_strided_slice %227 {offsets = [0, 0], sizes = [8, 32], strides = [1, 1]} : vector<8x128xf32> to vector<8x32xf32>
    %230 = vector.extract_strided_slice %227 {offsets = [0, 32], sizes = [8, 32], strides = [1, 1]} : vector<8x128xf32> to vector<8x32xf32>
    %231 = vector.extract_strided_slice %227 {offsets = [0, 96], sizes = [8, 32], strides = [1, 1]} : vector<8x128xf32> to vector<8x32xf32>
    %232 = vector.extract_strided_slice %228 {offsets = [0, 64], sizes = [8, 32], strides = [1, 1]} : vector<8x128xf32> to vector<8x32xf32>
    %233 = arith.mulf %230, %5 : vector<8x32xf32>
    %234 = arith.mulf %229, %232 : vector<8x32xf32>
    %235 = arith.addf %233, %234 : vector<8x32xf32>
    %236 = math.tanh %235 : vector<8x32xf32>
    %237 = arith.mulf %231, %236 : vector<8x32xf32>
    %238 = arith.index_cast %c0_i32_79 : i32 to index
    %c0_84 = arith.constant 0 : index
    %c0_85 = arith.constant 0 : index
    %239 = vector.load %arg14[%238, %c0_84, %c0_85] : memref<8x8x32xf32, #tpu.memory_space<vmem>>, vector<1x8x32xf32>
    %240 = vector.shape_cast %239 : vector<1x8x32xf32> to vector<8x32xf32>
    %241 = vector.shape_cast %237 : vector<8x32xf32> to vector<1x8x32xf32>
    tpu.vector_store %arg14[%238, %c0_84, %c0_85], %241 {strides = array<i32>} : memref<8x8x32xf32, #tpu.memory_space<vmem>>, vector<1x8x32xf32>,
    %c1_i32_86 = arith.constant 1 : i32
    %242 = arith.index_cast %c1_i32_86 : i32 to index
    %c0_87 = arith.constant 0 : index
    %c0_88 = arith.constant 0 : index
    %243 = vector.load %arg15[%242, %c0_87, %c0_88] : memref<8x8x128xf32, #tpu.memory_space<vmem>>, vector<1x8x128xf32>
    %244 = vector.shape_cast %243 : vector<1x8x128xf32> to vector<8x128xf32>
    %cst_89 = arith.constant dense<0.000000e+00> : vector<8x128xf32>
    %245 = tpu.matmul %237, %209, %cst_89 {dimension_numbers = #tpu.dot_dimension_numbers<[1], [0], [0], [1], [0, 0, 1, 1], [], []>} : vector<8x32xf32>, vector<32x128xf32>, vector<8x128xf32> -> vector<8x128xf32>
    %246 = arith.addf %244, %245 : vector<8x128xf32>
    %247 = arith.negf %246 : vector<8x128xf32>
    %248 = math.exp %247 : vector<8x128xf32>
    %cst_90 = arith.constant 1.000000e+00 : f32
    %249 = vector.broadcast %cst_90 : f32 to vector<8x128xf32>
    %250 = arith.addf %249, %248 : vector<8x128xf32>
    %251 = arith.divf %249, %250 : vector<8x128xf32>
    %252 = math.tanh %246 : vector<8x128xf32>
    %253 = vector.extract_strided_slice %251 {offsets = [0, 0], sizes = [8, 32], strides = [1, 1]} : vector<8x128xf32> to vector<8x32xf32>
    %254 = vector.extract_strided_slice %251 {offsets = [0, 32], sizes = [8, 32], strides = [1, 1]} : vector<8x128xf32> to vector<8x32xf32>
    %255 = vector.extract_strided_slice %251 {offsets = [0, 96], sizes = [8, 32], strides = [1, 1]} : vector<8x128xf32> to vector<8x32xf32>
    %256 = vector.extract_strided_slice %252 {offsets = [0, 64], sizes = [8, 32], strides = [1, 1]} : vector<8x128xf32> to vector<8x32xf32>
    %257 = arith.mulf %254, %235 : vector<8x32xf32>
    %258 = arith.mulf %253, %256 : vector<8x32xf32>
    %259 = arith.addf %257, %258 : vector<8x32xf32>
    %260 = math.tanh %259 : vector<8x32xf32>
    %261 = arith.mulf %255, %260 : vector<8x32xf32>
    %262 = arith.index_cast %c1_i32_86 : i32 to index
    %c0_91 = arith.constant 0 : index
    %c0_92 = arith.constant 0 : index
    %263 = vector.load %arg14[%262, %c0_91, %c0_92] : memref<8x8x32xf32, #tpu.memory_space<vmem>>, vector<1x8x32xf32>
    %264 = vector.shape_cast %263 : vector<1x8x32xf32> to vector<8x32xf32>
    %265 = vector.shape_cast %261 : vector<8x32xf32> to vector<1x8x32xf32>
    tpu.vector_store %arg14[%262, %c0_91, %c0_92], %265 {strides = array<i32>} : memref<8x8x32xf32, #tpu.memory_space<vmem>>, vector<1x8x32xf32>,
    %c2_i32_93 = arith.constant 2 : i32
    %266 = arith.index_cast %c2_i32_93 : i32 to index
    %c0_94 = arith.constant 0 : index
    %c0_95 = arith.constant 0 : index
    %267 = vector.load %arg15[%266, %c0_94, %c0_95] : memref<8x8x128xf32, #tpu.memory_space<vmem>>, vector<1x8x128xf32>
    %268 = vector.shape_cast %267 : vector<1x8x128xf32> to vector<8x128xf32>
    %cst_96 = arith.constant dense<0.000000e+00> : vector<8x128xf32>
    %269 = tpu.matmul %261, %209, %cst_96 {dimension_numbers = #tpu.dot_dimension_numbers<[1], [0], [0], [1], [0, 0, 1, 1], [], []>} : vector<8x32xf32>, vector<32x128xf32>, vector<8x128xf32> -> vector<8x128xf32>
    %270 = arith.addf %268, %269 : vector<8x128xf32>
    %271 = arith.negf %270 : vector<8x128xf32>
    %272 = math.exp %271 : vector<8x128xf32>
    %cst_97 = arith.constant 1.000000e+00 : f32
    %273 = vector.broadcast %cst_97 : f32 to vector<8x128xf32>
    %274 = arith.addf %273, %272 : vector<8x128xf32>
    %275 = arith.divf %273, %274 : vector<8x128xf32>
    %276 = math.tanh %270 : vector<8x128xf32>
    %277 = vector.extract_strided_slice %275 {offsets = [0, 0], sizes = [8, 32], strides = [1, 1]} : vector<8x128xf32> to vector<8x32xf32>
    %278 = vector.extract_strided_slice %275 {offsets = [0, 32], sizes = [8, 32], strides = [1, 1]} : vector<8x128xf32> to vector<8x32xf32>
    %279 = vector.extract_strided_slice %275 {offsets = [0, 96], sizes = [8, 32], strides = [1, 1]} : vector<8x128xf32> to vector<8x32xf32>
    %280 = vector.extract_strided_slice %276 {offsets = [0, 64], sizes = [8, 32], strides = [1, 1]} : vector<8x128xf32> to vector<8x32xf32>
    %281 = arith.mulf %278, %259 : vector<8x32xf32>
    %282 = arith.mulf %277, %280 : vector<8x32xf32>
    %283 = arith.addf %281, %282 : vector<8x32xf32>
    %284 = math.tanh %283 : vector<8x32xf32>
    %285 = arith.mulf %279, %284 : vector<8x32xf32>
    %286 = arith.index_cast %c2_i32_93 : i32 to index
    %c0_98 = arith.constant 0 : index
    %c0_99 = arith.constant 0 : index
    %287 = vector.load %arg14[%286, %c0_98, %c0_99] : memref<8x8x32xf32, #tpu.memory_space<vmem>>, vector<1x8x32xf32>
    %288 = vector.shape_cast %287 : vector<1x8x32xf32> to vector<8x32xf32>
    %289 = vector.shape_cast %285 : vector<8x32xf32> to vector<1x8x32xf32>
    tpu.vector_store %arg14[%286, %c0_98, %c0_99], %289 {strides = array<i32>} : memref<8x8x32xf32, #tpu.memory_space<vmem>>, vector<1x8x32xf32>,
    %c3_i32_100 = arith.constant 3 : i32
    %290 = arith.index_cast %c3_i32_100 : i32 to index
    %c0_101 = arith.constant 0 : index
    %c0_102 = arith.constant 0 : index
    %291 = vector.load %arg15[%290, %c0_101, %c0_102] : memref<8x8x128xf32, #tpu.memory_space<vmem>>, vector<1x8x128xf32>
    %292 = vector.shape_cast %291 : vector<1x8x128xf32> to vector<8x128xf32>
    %cst_103 = arith.constant dense<0.000000e+00> : vector<8x128xf32>
    %293 = tpu.matmul %285, %209, %cst_103 {dimension_numbers = #tpu.dot_dimension_numbers<[1], [0], [0], [1], [0, 0, 1, 1], [], []>} : vector<8x32xf32>, vector<32x128xf32>, vector<8x128xf32> -> vector<8x128xf32>
    %294 = arith.addf %292, %293 : vector<8x128xf32>
    %295 = arith.negf %294 : vector<8x128xf32>
    %296 = math.exp %295 : vector<8x128xf32>
    %cst_104 = arith.constant 1.000000e+00 : f32
    %297 = vector.broadcast %cst_104 : f32 to vector<8x128xf32>
    %298 = arith.addf %297, %296 : vector<8x128xf32>
    %299 = arith.divf %297, %298 : vector<8x128xf32>
    %300 = math.tanh %294 : vector<8x128xf32>
    %301 = vector.extract_strided_slice %299 {offsets = [0, 0], sizes = [8, 32], strides = [1, 1]} : vector<8x128xf32> to vector<8x32xf32>
    %302 = vector.extract_strided_slice %299 {offsets = [0, 32], sizes = [8, 32], strides = [1, 1]} : vector<8x128xf32> to vector<8x32xf32>
    %303 = vector.extract_strided_slice %299 {offsets = [0, 96], sizes = [8, 32], strides = [1, 1]} : vector<8x128xf32> to vector<8x32xf32>
    %304 = vector.extract_strided_slice %300 {offsets = [0, 64], sizes = [8, 32], strides = [1, 1]} : vector<8x128xf32> to vector<8x32xf32>
    %305 = arith.mulf %302, %283 : vector<8x32xf32>
    %306 = arith.mulf %301, %304 : vector<8x32xf32>
    %307 = arith.addf %305, %306 : vector<8x32xf32>
    %308 = math.tanh %307 : vector<8x32xf32>
    %309 = arith.mulf %303, %308 : vector<8x32xf32>
    %310 = arith.index_cast %c3_i32_100 : i32 to index
    %c0_105 = arith.constant 0 : index
    %c0_106 = arith.constant 0 : index
    %311 = vector.load %arg14[%310, %c0_105, %c0_106] : memref<8x8x32xf32, #tpu.memory_space<vmem>>, vector<1x8x32xf32>
    %312 = vector.shape_cast %311 : vector<1x8x32xf32> to vector<8x32xf32>
    %313 = vector.shape_cast %309 : vector<8x32xf32> to vector<1x8x32xf32>
    tpu.vector_store %arg14[%310, %c0_105, %c0_106], %313 {strides = array<i32>} : memref<8x8x32xf32, #tpu.memory_space<vmem>>, vector<1x8x32xf32>,
    %c4_i32_107 = arith.constant 4 : i32
    %314 = arith.index_cast %c4_i32_107 : i32 to index
    %c0_108 = arith.constant 0 : index
    %c0_109 = arith.constant 0 : index
    %315 = vector.load %arg15[%314, %c0_108, %c0_109] : memref<8x8x128xf32, #tpu.memory_space<vmem>>, vector<1x8x128xf32>
    %316 = vector.shape_cast %315 : vector<1x8x128xf32> to vector<8x128xf32>
    %cst_110 = arith.constant dense<0.000000e+00> : vector<8x128xf32>
    %317 = tpu.matmul %309, %209, %cst_110 {dimension_numbers = #tpu.dot_dimension_numbers<[1], [0], [0], [1], [0, 0, 1, 1], [], []>} : vector<8x32xf32>, vector<32x128xf32>, vector<8x128xf32> -> vector<8x128xf32>
    %318 = arith.addf %316, %317 : vector<8x128xf32>
    %319 = arith.negf %318 : vector<8x128xf32>
    %320 = math.exp %319 : vector<8x128xf32>
    %cst_111 = arith.constant 1.000000e+00 : f32
    %321 = vector.broadcast %cst_111 : f32 to vector<8x128xf32>
    %322 = arith.addf %321, %320 : vector<8x128xf32>
    %323 = arith.divf %321, %322 : vector<8x128xf32>
    %324 = math.tanh %318 : vector<8x128xf32>
    %325 = vector.extract_strided_slice %323 {offsets = [0, 0], sizes = [8, 32], strides = [1, 1]} : vector<8x128xf32> to vector<8x32xf32>
    %326 = vector.extract_strided_slice %323 {offsets = [0, 32], sizes = [8, 32], strides = [1, 1]} : vector<8x128xf32> to vector<8x32xf32>
    %327 = vector.extract_strided_slice %323 {offsets = [0, 96], sizes = [8, 32], strides = [1, 1]} : vector<8x128xf32> to vector<8x32xf32>
    %328 = vector.extract_strided_slice %324 {offsets = [0, 64], sizes = [8, 32], strides = [1, 1]} : vector<8x128xf32> to vector<8x32xf32>
    %329 = arith.mulf %326, %307 : vector<8x32xf32>
    %330 = arith.mulf %325, %328 : vector<8x32xf32>
    %331 = arith.addf %329, %330 : vector<8x32xf32>
    %332 = math.tanh %331 : vector<8x32xf32>
    %333 = arith.mulf %327, %332 : vector<8x32xf32>
    %334 = arith.index_cast %c4_i32_107 : i32 to index
    %c0_112 = arith.constant 0 : index
    %c0_113 = arith.constant 0 : index
    %335 = vector.load %arg14[%334, %c0_112, %c0_113] : memref<8x8x32xf32, #tpu.memory_space<vmem>>, vector<1x8x32xf32>
    %336 = vector.shape_cast %335 : vector<1x8x32xf32> to vector<8x32xf32>
    %337 = vector.shape_cast %333 : vector<8x32xf32> to vector<1x8x32xf32>
    tpu.vector_store %arg14[%334, %c0_112, %c0_113], %337 {strides = array<i32>} : memref<8x8x32xf32, #tpu.memory_space<vmem>>, vector<1x8x32xf32>,
    %c5_i32_114 = arith.constant 5 : i32
    %338 = arith.index_cast %c5_i32_114 : i32 to index
    %c0_115 = arith.constant 0 : index
    %c0_116 = arith.constant 0 : index
    %339 = vector.load %arg15[%338, %c0_115, %c0_116] : memref<8x8x128xf32, #tpu.memory_space<vmem>>, vector<1x8x128xf32>
    %340 = vector.shape_cast %339 : vector<1x8x128xf32> to vector<8x128xf32>
    %cst_117 = arith.constant dense<0.000000e+00> : vector<8x128xf32>
    %341 = tpu.matmul %333, %209, %cst_117 {dimension_numbers = #tpu.dot_dimension_numbers<[1], [0], [0], [1], [0, 0, 1, 1], [], []>} : vector<8x32xf32>, vector<32x128xf32>, vector<8x128xf32> -> vector<8x128xf32>
    %342 = arith.addf %340, %341 : vector<8x128xf32>
    %343 = arith.negf %342 : vector<8x128xf32>
    %344 = math.exp %343 : vector<8x128xf32>
    %cst_118 = arith.constant 1.000000e+00 : f32
    %345 = vector.broadcast %cst_118 : f32 to vector<8x128xf32>
    %346 = arith.addf %345, %344 : vector<8x128xf32>
    %347 = arith.divf %345, %346 : vector<8x128xf32>
    %348 = math.tanh %342 : vector<8x128xf32>
    %349 = vector.extract_strided_slice %347 {offsets = [0, 0], sizes = [8, 32], strides = [1, 1]} : vector<8x128xf32> to vector<8x32xf32>
    %350 = vector.extract_strided_slice %347 {offsets = [0, 32], sizes = [8, 32], strides = [1, 1]} : vector<8x128xf32> to vector<8x32xf32>
    %351 = vector.extract_strided_slice %347 {offsets = [0, 96], sizes = [8, 32], strides = [1, 1]} : vector<8x128xf32> to vector<8x32xf32>
    %352 = vector.extract_strided_slice %348 {offsets = [0, 64], sizes = [8, 32], strides = [1, 1]} : vector<8x128xf32> to vector<8x32xf32>
    %353 = arith.mulf %350, %331 : vector<8x32xf32>
    %354 = arith.mulf %349, %352 : vector<8x32xf32>
    %355 = arith.addf %353, %354 : vector<8x32xf32>
    %356 = math.tanh %355 : vector<8x32xf32>
    %357 = arith.mulf %351, %356 : vector<8x32xf32>
    %358 = arith.index_cast %c5_i32_114 : i32 to index
    %c0_119 = arith.constant 0 : index
    %c0_120 = arith.constant 0 : index
    %359 = vector.load %arg14[%358, %c0_119, %c0_120] : memref<8x8x32xf32, #tpu.memory_space<vmem>>, vector<1x8x32xf32>
    %360 = vector.shape_cast %359 : vector<1x8x32xf32> to vector<8x32xf32>
    %361 = vector.shape_cast %357 : vector<8x32xf32> to vector<1x8x32xf32>
    tpu.vector_store %arg14[%358, %c0_119, %c0_120], %361 {strides = array<i32>} : memref<8x8x32xf32, #tpu.memory_space<vmem>>, vector<1x8x32xf32>,
    %c6_i32_121 = arith.constant 6 : i32
    %362 = arith.index_cast %c6_i32_121 : i32 to index
    %c0_122 = arith.constant 0 : index
    %c0_123 = arith.constant 0 : index
    %363 = vector.load %arg15[%362, %c0_122, %c0_123] : memref<8x8x128xf32, #tpu.memory_space<vmem>>, vector<1x8x128xf32>
    %364 = vector.shape_cast %363 : vector<1x8x128xf32> to vector<8x128xf32>
    %cst_124 = arith.constant dense<0.000000e+00> : vector<8x128xf32>
    %365 = tpu.matmul %357, %209, %cst_124 {dimension_numbers = #tpu.dot_dimension_numbers<[1], [0], [0], [1], [0, 0, 1, 1], [], []>} : vector<8x32xf32>, vector<32x128xf32>, vector<8x128xf32> -> vector<8x128xf32>
    %366 = arith.addf %364, %365 : vector<8x128xf32>
    %367 = arith.negf %366 : vector<8x128xf32>
    %368 = math.exp %367 : vector<8x128xf32>
    %cst_125 = arith.constant 1.000000e+00 : f32
    %369 = vector.broadcast %cst_125 : f32 to vector<8x128xf32>
    %370 = arith.addf %369, %368 : vector<8x128xf32>
    %371 = arith.divf %369, %370 : vector<8x128xf32>
    %372 = math.tanh %366 : vector<8x128xf32>
    %373 = vector.extract_strided_slice %371 {offsets = [0, 0], sizes = [8, 32], strides = [1, 1]} : vector<8x128xf32> to vector<8x32xf32>
    %374 = vector.extract_strided_slice %371 {offsets = [0, 32], sizes = [8, 32], strides = [1, 1]} : vector<8x128xf32> to vector<8x32xf32>
    %375 = vector.extract_strided_slice %371 {offsets = [0, 96], sizes = [8, 32], strides = [1, 1]} : vector<8x128xf32> to vector<8x32xf32>
    %376 = vector.extract_strided_slice %372 {offsets = [0, 64], sizes = [8, 32], strides = [1, 1]} : vector<8x128xf32> to vector<8x32xf32>
    %377 = arith.mulf %374, %355 : vector<8x32xf32>
    %378 = arith.mulf %373, %376 : vector<8x32xf32>
    %379 = arith.addf %377, %378 : vector<8x32xf32>
    %380 = math.tanh %379 : vector<8x32xf32>
    %381 = arith.mulf %375, %380 : vector<8x32xf32>
    %382 = arith.index_cast %c6_i32_121 : i32 to index
    %c0_126 = arith.constant 0 : index
    %c0_127 = arith.constant 0 : index
    %383 = vector.load %arg14[%382, %c0_126, %c0_127] : memref<8x8x32xf32, #tpu.memory_space<vmem>>, vector<1x8x32xf32>
    %384 = vector.shape_cast %383 : vector<1x8x32xf32> to vector<8x32xf32>
    %385 = vector.shape_cast %381 : vector<8x32xf32> to vector<1x8x32xf32>
    tpu.vector_store %arg14[%382, %c0_126, %c0_127], %385 {strides = array<i32>} : memref<8x8x32xf32, #tpu.memory_space<vmem>>, vector<1x8x32xf32>,
    %c7_i32_128 = arith.constant 7 : i32
    %386 = arith.index_cast %c7_i32_128 : i32 to index
    %c0_129 = arith.constant 0 : index
    %c0_130 = arith.constant 0 : index
    %387 = vector.load %arg15[%386, %c0_129, %c0_130] : memref<8x8x128xf32, #tpu.memory_space<vmem>>, vector<1x8x128xf32>
    %388 = vector.shape_cast %387 : vector<1x8x128xf32> to vector<8x128xf32>
    %cst_131 = arith.constant dense<0.000000e+00> : vector<8x128xf32>
    %389 = tpu.matmul %381, %209, %cst_131 {dimension_numbers = #tpu.dot_dimension_numbers<[1], [0], [0], [1], [0, 0, 1, 1], [], []>} : vector<8x32xf32>, vector<32x128xf32>, vector<8x128xf32> -> vector<8x128xf32>
    %390 = arith.addf %388, %389 : vector<8x128xf32>
    %391 = arith.negf %390 : vector<8x128xf32>
    %392 = math.exp %391 : vector<8x128xf32>
    %cst_132 = arith.constant 1.000000e+00 : f32
    %393 = vector.broadcast %cst_132 : f32 to vector<8x128xf32>
    %394 = arith.addf %393, %392 : vector<8x128xf32>
    %395 = arith.divf %393, %394 : vector<8x128xf32>
    %396 = math.tanh %390 : vector<8x128xf32>
    %397 = vector.extract_strided_slice %395 {offsets = [0, 0], sizes = [8, 32], strides = [1, 1]} : vector<8x128xf32> to vector<8x32xf32>
    %398 = vector.extract_strided_slice %395 {offsets = [0, 32], sizes = [8, 32], strides = [1, 1]} : vector<8x128xf32> to vector<8x32xf32>
    %399 = vector.extract_strided_slice %395 {offsets = [0, 96], sizes = [8, 32], strides = [1, 1]} : vector<8x128xf32> to vector<8x32xf32>
    %400 = vector.extract_strided_slice %396 {offsets = [0, 64], sizes = [8, 32], strides = [1, 1]} : vector<8x128xf32> to vector<8x32xf32>
    %401 = arith.mulf %398, %379 : vector<8x32xf32>
    %402 = arith.mulf %397, %400 : vector<8x32xf32>
    %403 = arith.addf %401, %402 : vector<8x32xf32>
    %404 = math.tanh %403 : vector<8x32xf32>
    %405 = arith.mulf %399, %404 : vector<8x32xf32>
    %406 = arith.index_cast %c7_i32_128 : i32 to index
    %c0_133 = arith.constant 0 : index
    %c0_134 = arith.constant 0 : index
    %407 = vector.load %arg14[%406, %c0_133, %c0_134] : memref<8x8x32xf32, #tpu.memory_space<vmem>>, vector<1x8x32xf32>
    %408 = vector.shape_cast %407 : vector<1x8x32xf32> to vector<8x32xf32>
    %409 = vector.shape_cast %405 : vector<8x32xf32> to vector<1x8x32xf32>
    tpu.vector_store %arg14[%406, %c0_133, %c0_134], %409 {strides = array<i32>} : memref<8x8x32xf32, #tpu.memory_space<vmem>>, vector<1x8x32xf32>,
    %c8_i32_135 = arith.constant 8 : i32
    %c0_136 = arith.constant 0 : index
    %c0_137 = arith.constant 0 : index
    %c0_138 = arith.constant 0 : index
    %410 = vector.load %arg14[%c0_136, %c0_137, %c0_138] : memref<8x8x32xf32, #tpu.memory_space<vmem>>, vector<8x8x32xf32>
    %c0_139 = arith.constant 0 : index
    %c0_140 = arith.constant 0 : index
    %411 = vector.load %arg11[%c0_139, %c0_140] : memref<1x32xf32, #tpu.memory_space<vmem>>, vector<1x32xf32>
    %412 = vector.shape_cast %411 : vector<1x32xf32> to vector<1x1x32xf32>
    %413 = vector.broadcast %412 : vector<1x1x32xf32> to vector<8x8x32xf32>
    %414 = arith.mulf %410, %413 : vector<8x8x32xf32>
    %cst_141 = arith.constant dense<0.000000e+00> : vector<8x8xf32>
    %415 = vector.multi_reduction <add>, %414, %cst_141 [2] : vector<8x8x32xf32> to vector<8x8xf32>
    %c0_142 = arith.constant 0 : index
    %c0_143 = arith.constant 0 : index
    %416 = vector.load %arg12[%c0_142, %c0_143] : memref<1x1xf32, #tpu.memory_space<vmem>>, vector<1x1xf32>
    %417 = vector.extract %416[0, 0] : f32 from vector<1x1xf32>
    %418 = vector.broadcast %417 : f32 to vector<8x8xf32>
    %419 = arith.addf %415, %418 : vector<8x8xf32>
    %c0_144 = arith.constant 0 : index
    %c0_145 = arith.constant 0 : index
    %420 = vector.load %arg13[%c0_144, %c0_145] : memref<8x8xf32, #tpu.memory_space<vmem>>, vector<8x8xf32>
    tpu.vector_store %arg13[%c0_144, %c0_145], %419 {strides = array<i32>} : memref<8x8xf32, #tpu.memory_space<vmem>>, vector<8x8xf32>,
    return
  }
  func.func @transform_0(%arg0: i32) -> (i32, i32, i32) {
    %c0_i32 = arith.constant 0 : i32
    %c0_i32_0 = arith.constant 0 : i32
    %c0_i32_1 = arith.constant 0 : i32
    return %c0_i32, %arg0, %c0_i32_0 : i32, i32, i32
  }
  func.func @transform_1(%arg0: i32) -> (i32, i32) {
    %c0_i32 = arith.constant 0 : i32
    %c0_i32_0 = arith.constant 0 : i32
    return %arg0, %c0_i32 : i32, i32
  }
  func.func @transform_2(%arg0: i32) -> (i32, i32) {
    %c0_i32 = arith.constant 0 : i32
    %c0_i32_0 = arith.constant 0 : i32
    %c0_i32_1 = arith.constant 0 : i32
    return %c0_i32, %c0_i32_0 : i32, i32
  }
  func.func @transform_3(%arg0: i32) -> (i32, i32) {
    %c0_i32 = arith.constant 0 : i32
    %c0_i32_0 = arith.constant 0 : i32
    %c0_i32_1 = arith.constant 0 : i32
    return %c0_i32, %c0_i32_0 : i32, i32
  }
  func.func @transform_4(%arg0: i32) -> (i32, i32) {
    %c0_i32 = arith.constant 0 : i32
    %c0_i32_0 = arith.constant 0 : i32
    %c0_i32_1 = arith.constant 0 : i32
    return %c0_i32, %c0_i32_0 : i32, i32
  }
  func.func @transform_5(%arg0: i32) -> (i32, i32) {
    %c0_i32 = arith.constant 0 : i32
    %c0_i32_0 = arith.constant 0 : i32
    %c0_i32_1 = arith.constant 0 : i32
    return %c0_i32, %c0_i32_0 : i32, i32
  }
  func.func @transform_6(%arg0: i32) -> (i32, i32) {
    %c0_i32 = arith.constant 0 : i32
    %c0_i32_0 = arith.constant 0 : i32
    %c0_i32_1 = arith.constant 0 : i32
    return %c0_i32, %c0_i32_0 : i32, i32
  }
  func.func @transform_7(%arg0: i32) -> (i32, i32) {
    %c0_i32 = arith.constant 0 : i32
    %c0_i32_0 = arith.constant 0 : i32
    %c0_i32_1 = arith.constant 0 : i32
    return %c0_i32, %c0_i32_0 : i32, i32
  }
  func.func @transform_8(%arg0: i32) -> (i32, i32) {
    %c0_i32 = arith.constant 0 : i32
    %c0_i32_0 = arith.constant 0 : i32
    %c0_i32_1 = arith.constant 0 : i32
    return %c0_i32, %c0_i32_0 : i32, i32
  }
  func.func @transform_9(%arg0: i32) -> (i32, i32) {
    %c0_i32 = arith.constant 0 : i32
    %c0_i32_0 = arith.constant 0 : i32
    %c0_i32_1 = arith.constant 0 : i32
    return %c0_i32, %c0_i32_0 : i32, i32
  }
  func.func @transform_10(%arg0: i32) -> (i32, i32) {
    %c0_i32 = arith.constant 0 : i32
    %c0_i32_0 = arith.constant 0 : i32
    %c0_i32_1 = arith.constant 0 : i32
    return %c0_i32, %c0_i32_0 : i32, i32
  }
  func.func @transform_11(%arg0: i32) -> (i32, i32) {
    %c0_i32 = arith.constant 0 : i32
    %c0_i32_0 = arith.constant 0 : i32
    %c0_i32_1 = arith.constant 0 : i32
    return %c0_i32, %c0_i32_0 : i32, i32
  }
  func.func @transform_12(%arg0: i32) -> (i32, i32) {
    %c0_i32 = arith.constant 0 : i32
    %c0_i32_0 = arith.constant 0 : i32
    return %c0_i32, %arg0 : i32, i32
  }
}

</mosaic_0001>

<llo_original>
// kernel: tpu_custom_call.1
$region0: #{tpu_custom_call.1}
  #allocation0 [shape = 'u32[]', space=smem, size = 0x4, offset = 0x4, fixed_abs, tag = 'smem constant byte address 0x4 - core index']
  #allocation1 [shape = 'u32[144,128]{1,0:T(1,128)}', space=vmem, size = 0x12000, scoped, tag = 'internal scratch']
  #allocation2 [shape = 'f32[8,8,32]{2,1,0:T(8,128)}', space=vmem, size = 0x8000, scoped, tag = 'scratch operand']
  #allocation3 [shape = 'f32[8,8,128]{2,1,0:T(8,128)}', space=vmem, size = 0x8000, scoped, tag = 'scratch operand']
  #allocation4 [shape = 'f32[1,1]{1,0:T(1,128)S(1)}', space=vmem, size = 0x200, scoped, tag = 'scoped memory for tpu_custom_call.1']
  %s0 = inlined_call_operand.vmem [shape: f32[8,8,4], index: 0, kind: input, shape index: {}]
  %s1 = inlined_call_operand.hbm [shape: f32[8,6], index: 1, kind: input, shape index: {}]
  %s2 = inlined_call_operand.hbm [shape: f32[6,32], index: 2, kind: input, shape index: {}]
  %s3 = inlined_call_operand.vmem [shape: f32[1,32], index: 3, kind: input, shape index: {}]
  %s4 = inlined_call_operand.vmem [shape: f32[4,128], index: 4, kind: input, shape index: {}]
  %s5 = inlined_call_operand.vmem [shape: f32[32,128], index: 5, kind: input, shape index: {}]
  %s6 = inlined_call_operand.vmem [shape: f32[1,128], index: 6, kind: input, shape index: {}]
  %s7 = inlined_call_operand.vmem [shape: f32[32,128], index: 7, kind: input, shape index: {}]
  %s8 = inlined_call_operand.vmem [shape: f32[32,128], index: 8, kind: input, shape index: {}]
  %s9 = inlined_call_operand.vmem [shape: f32[1,128], index: 9, kind: input, shape index: {}]
  %s10 = inlined_call_operand.vmem [shape: f32[1,32], index: 10, kind: input, shape index: {}]
  %s11 = inlined_call_operand.<no memory space> [shape: f32[1,1], index: 11, kind: input, shape index: {}]
  %s12 = inlined_call_operand.hbm [shape: f32[8,8], index: 12, kind: output, shape index: {}]
  %s13 = sld [smem:[#allocation0]]
  $region66: #{tpu_custom_call.1} parent=0
    _
  %s15 = ssub.s32 1, %s13
  %s16 = scalar_select 0, %s15, %s13
  %v17 = vstv %s11
  %18 = vst [vmem:[#allocation4] sm:$0x1] %v17
  $region1: #{tpu_custom_call.1} parent=0
    #allocation5 [shape = 'u8[4096]{0}', space=vmem, size = 0x1000, scoped, tag = 'input window, operand 1, single buffered']
    #allocation6 [shape = 's32[1]{0}', space=sflag, size = 0x4, scoped, tag = 'scoped memory for tpu_custom_call.1']
    #allocation7 [shape = 's32[1]{0}', space=sflag, size = 0x4, scoped, tag = 'scoped memory for tpu_custom_call.1']
    #allocation8 [shape = 'u8[4096]{0}', space=vmem, size = 0x1000, scoped, tag = 'input window, operand 2, single buffered']
    #allocation9 [shape = 's32[1]{0}', space=sflag, size = 0x4, scoped, tag = 'scoped memory for tpu_custom_call.1']
    #allocation10 [shape = 'u8[4096]{0}', space=vmem, size = 0x1000, scoped, tag = 'output window, operand 0, single buffered']
    %19 = vsyncpa [#allocation6], 0
    %20 = vsyncpa [#allocation9], 0
    %21 = vsyncpa [#allocation7], 0
    // Predicated region
    $region2: #{tpu_custom_call.1} parent=1 // pred_check
      _
    $region3: #{tpu_custom_call.1} parent=1 // pred_check_branch
      %23 = sbr.rel (0) target = $region5
    $region4: #{tpu_custom_call.1} parent=1 // pred_region
      _
    $region5: #{tpu_custom_call.1} parent=1 // pred_fallthru
      _
    // Predicated region
    $region6: #{tpu_custom_call.1} parent=1 // pred_check
      _
    $region7: #{tpu_custom_call.1} parent=1 // pred_check_branch
      %25 = sbr.rel (0) target = $region9
    $region8: #{tpu_custom_call.1} parent=1 // pred_region
      %s27 = ssub.s32 128, 128
      %28 = vsyncadd [#allocation6], %s27
      %s30 = sshll.u32 [#allocation5], 4
      %s31 = int_to_ptr.vmem [resolvable:$true] %s30
      %33 = dma.hbm_to_vmem [thread:$0]  %s1, 128, %s31, [#allocation6]
    $region9: #{tpu_custom_call.1} parent=1 // pred_fallthru
      _
    // Predicated region
    $region10: #{tpu_custom_call.1} parent=1 // pred_check
      _
    $region11: #{tpu_custom_call.1} parent=1 // pred_check_branch
      %35 = sbr.rel (0) target = $region13
    $region12: #{tpu_custom_call.1} parent=1 // pred_region
      %s37 = ssub.s32 128, 128
      %38 = vsyncadd [#allocation9], %s37
      %s40 = sshll.u32 [#allocation8], 4
      %s41 = int_to_ptr.vmem [resolvable:$true] %s40
      %43 = dma.hbm_to_vmem [thread:$0]  %s2, 128, %s41, [#allocation9]
    $region13: #{tpu_custom_call.1} parent=1 // pred_fallthru
      _
    // Predicated region
    $region14: #{tpu_custom_call.1} parent=1 // pred_check
      _
    $region15: #{tpu_custom_call.1} parent=1 // pred_check_branch
      %45 = sbr.rel (0) target = $region17
    $region16: #{tpu_custom_call.1} parent=1 // pred_region
      _
    $region17: #{tpu_custom_call.1} parent=1 // pred_fallthru
      _
    // Predicated region
    $region18: #{tpu_custom_call.1} parent=1 // pred_check
      _
    $region19: #{tpu_custom_call.1} parent=1 // pred_check_branch
      %47 = sbr.rel (0) target = $region21
    $region20: #{tpu_custom_call.1} parent=1 // pred_region
      _
    $region21: #{tpu_custom_call.1} parent=1 // pred_fallthru
      _
    // Predicated region
    $region22: #{tpu_custom_call.1} parent=1 // pred_check
      _
    $region23: #{tpu_custom_call.1} parent=1 // pred_check_branch
      %49 = sbr.rel (0) target = $region25
    $region24: #{tpu_custom_call.1} parent=1 // pred_region
      _
    $region25: #{tpu_custom_call.1} parent=1 // pred_fallthru
      _
    // Predicated region
    $region26: #{tpu_custom_call.1} parent=1 // pred_check
      _
    $region27: #{tpu_custom_call.1} parent=1 // pred_check_branch
      %51 = sbr.rel (0) target = $region29
    $region28: #{tpu_custom_call.1} parent=1 // pred_region
      _
    $region29: #{tpu_custom_call.1} parent=1 // pred_fallthru
      _
    // Predicated region
    $region30: #{tpu_custom_call.1} parent=1 // pred_check
      _
    $region31: #{tpu_custom_call.1} parent=1 // pred_check_branch
      %53 = sbr.rel (0) target = $region33
    $region32: #{tpu_custom_call.1} parent=1 // pred_region
      _
    $region33: #{tpu_custom_call.1} parent=1 // pred_fallthru
      _
    // Predicated region
    $region34: #{tpu_custom_call.1} parent=1 // pred_check
      _
    $region35: #{tpu_custom_call.1} parent=1 // pred_check_branch
      %55 = sbr.rel (0) target = $region37
    $region36: #{tpu_custom_call.1} parent=1 // pred_region
      _
    $region37: #{tpu_custom_call.1} parent=1 // pred_fallthru
      _
    // Predicated region
    $region38: #{tpu_custom_call.1} parent=1 // pred_check
      _
    $region39: #{tpu_custom_call.1} parent=1 // pred_check_branch
      %57 = sbr.rel (0) target = $region41
    $region40: #{tpu_custom_call.1} parent=1 // pred_region
      _
    $region41: #{tpu_custom_call.1} parent=1 // pred_fallthru
      _
    // Predicated region
    $region42: #{tpu_custom_call.1} parent=1 // pred_check
      _
    $region43: #{tpu_custom_call.1} parent=1 // pred_check_branch
      %59 = sbr.rel (0) target = $region45
    $region44: #{tpu_custom_call.1} parent=1 // pred_region
      _
    $region45: #{tpu_custom_call.1} parent=1 // pred_fallthru
      _
    // Predicated region
    $region46: #{tpu_custom_call.1} parent=1 // pred_check
      _
    $region47: #{tpu_custom_call.1} parent=1 // pred_check_branch
      %61 = sbr.rel (0) target = $region49
    $region48: #{tpu_custom_call.1} parent=1 // pred_region
      _
    $region49: #{tpu_custom_call.1} parent=1 // pred_fallthru
      _
    // Predicated region
    $region50: #{tpu_custom_call.1} parent=1 // pred_check
      _
    $region51: #{tpu_custom_call.1} parent=1 // pred_check_branch
      %63 = sbr.rel (0) target = $region53
    $region52: #{tpu_custom_call.1} parent=1 // pred_region
      %64 = dma.done [#allocation6], 128
    $region53: #{tpu_custom_call.1} parent=1 // pred_fallthru
      _
    // Predicated region
    $region54: #{tpu_custom_call.1} parent=1 // pred_check
      _
    $region55: #{tpu_custom_call.1} parent=1 // pred_check_branch
      %66 = sbr.rel (0) target = $region57
    $region56: #{tpu_custom_call.1} parent=1 // pred_region
      %67 = dma.done [#allocation9], 128
    $region57: #{tpu_custom_call.1} parent=1 // pred_fallthru
      _
    %v68 = vld [vmem:[#allocation5] sm:$0xff]
    %v69 = vld [vmem:[#allocation8] sm:$0x3f]
    %v70 = vld [vmem:[%s3] sm:$0x1]
    %v72 = vlaneseq
    %v73 = vshrl.u32 %v72, 7
    %v74 = vsub.s32 0, %v73
    %v75 = vrot.slane %v70, %v74
    %vm77 = vcmask 48128
    %v79 = vsel %vm77, %v68, 0
    %vm81 = vcmask 1045504
    %v83 = vsel %vm81, %v69, 0
    %85 = vmatprep.subr.mxu0 0.0
    %86 = vmatpush1.msra.mxu0 0.0
    %87 = vmatprep.subr.mxu0 0.0
    %88 = vmatpush1.msra.mxu0 0.0
    %89 = vmatprep.subr.mxu0 0.0
    %90 = vmatpush1.msra.mxu0 0.0
    %91 = vmatprep.subr.mxu0 0.0
    %92 = vmatpush1.msra.mxu0 0.0
    %93 = vmatprep.subr.mxu0 0.0
    %94 = vmatpush1.msra.mxu0 0.0
    %95 = vmatprep.subr.mxu0 0.0
    %96 = vmatpush1.msra.mxu0 0.0
    %97 = vmatprep.subr.mxu0 0.0
    %98 = vmatpush1.msra.mxu0 0.0
    %99 = vmatprep.subr.mxu0 0.0
    %100 = vmatpush1.msra.mxu0 0.0
    %101 = vmatprep.subr.mxu0 0.0
    %102 = vmatpush1.msra.mxu0 0.0
    %103 = vmatprep.subr.mxu0 0.0
    %104 = vmatpush1.msra.mxu0 0.0
    %105 = vmatprep.subr.mxu0 0.0
    %106 = vmatpush1.msra.mxu0 0.0
    %107 = vmatprep.subr.mxu0 0.0
    %108 = vmatpush1.msra.mxu0 0.0
    %109 = vmatprep.subr.mxu0 0.0
    %110 = vmatpush1.msra.mxu0 0.0
    %111 = vmatprep.subr.mxu0 0.0
    %112 = vmatpush1.msra.mxu0 0.0
    %113 = vmatprep.subr.mxu0 0.0
    %114 = vmatpush1.msra.mxu0 0.0
    %115 = vmatprep.subr.mxu0 0.0
    %116 = vmatpush1.msra.mxu0 %v83
    %117 = vmatprep.subr.mxu0 0.0
    %118 = vmatpush2.msra.mxu0 0.0
    %119 = vmatprep.subr.mxu0 0.0
    %120 = vmatpush2.msra.mxu0 0.0
    %121 = vmatprep.subr.mxu0 0.0
    %122 = vmatpush2.msra.mxu0 0.0
    %123 = vmatprep.subr.mxu0 0.0
    %124 = vmatpush2.msra.mxu0 0.0
    %125 = vmatprep.subr.mxu0 0.0
    %126 = vmatpush2.msra.mxu0 0.0
    %127 = vmatprep.subr.mxu0 0.0
    %128 = vmatpush2.msra.mxu0 0.0
    %129 = vmatprep.subr.mxu0 0.0
    %130 = vmatpush2.msra.mxu0 0.0
    %131 = vmatprep.subr.mxu0 0.0
    %132 = vmatpush2.msra.mxu0 0.0
    %133 = vmatprep.subr.mxu0 0.0
    %134 = vmatpush2.msra.mxu0 0.0
    %135 = vmatprep.subr.mxu0 0.0
    %136 = vmatpush2.msra.mxu0 0.0
    %137 = vmatprep.subr.mxu0 0.0
    %138 = vmatpush2.msra.mxu0 0.0
    %139 = vmatprep.subr.mxu0 0.0
    %140 = vmatpush2.msra.mxu0 0.0
    %141 = vmatprep.subr.mxu0 0.0
    %142 = vmatpush2.msra.mxu0 0.0
    %143 = vmatprep.subr.mxu0 0.0
    %144 = vmatpush2.msra.mxu0 0.0
    %145 = vmatprep.subr.mxu0 0.0
    %146 = vmatpush2.msra.mxu0 0.0
    %147 = vmatprep.subr.mxu0 0.0
    %148 = vmatpush2.msra.mxu0 0.0
    %149 = vmatprep.mubr.f32.mxu0 0.0
    %150 = vmatmul.mubr.f32.gmra.mxu0 %v79
    %v151 = vpop.f32.mrf.mxu0
    %v152 = vadd.f32 %v75, %v151
    %v153 = vpop.f32.mrf.mxu0
    %154 = vdwg.mxu0
    %v155 = vld [vmem:[%s4] sm:$0xf]
    %v156 = vld [vmem:[%s5] sm:$0xff]
    %v157 = vld [vmem:[%s5 + $0x8] sm:$0xff]
    %v158 = vld [vmem:[%s5 + $0x10] sm:$0xff]
    %v159 = vld [vmem:[%s5 + $0x18] sm:$0xff]
    %v160 = vld [vmem:[%s6] sm:$0x1]
    %v161 = vld [vmem:[%s0] sm:$0xff]
    %v162 = vld [vmem:[%s0 + $0x8] sm:$0xff]
    %v163 = vld [vmem:[%s0 + $0x10] sm:$0xff]
    %v164 = vld [vmem:[%s0 + $0x18] sm:$0xff]
    %v165 = vld [vmem:[%s0 + $0x20] sm:$0xff]
    %v166 = vld [vmem:[%s0 + $0x28] sm:$0xff]
    %v167 = vld [vmem:[%s0 + $0x30] sm:$0xff]
    %v168 = vld [vmem:[%s0 + $0x38] sm:$0xff]
    %v170 = vlaneseq
    %v171 = vshrl.u32 %v170, 7
    %v172 = vsub.s32 0, %v171
    %v173 = vrot.slane %v160, %v172
    %vm175 = vcmask 31744
    %v177 = vsel %vm175, %v161, 0
    %v180 = vsel %vm175, %v162, 0
    %v183 = vsel %vm175, %v163, 0
    %v186 = vsel %vm175, %v164, 0
    %v189 = vsel %vm175, %v165, 0
    %v192 = vsel %vm175, %v166, 0
    %v195 = vsel %vm175, %v167, 0
    %v198 = vsel %vm175, %v168, 0
    %vm200 = vcmask 1043456
    %v202 = vsel %vm200, %v155, 0
    %204 = vmatprep.subr.mxu0 0.0
    %205 = vmatpush1.msra.mxu0 0.0
    %206 = vmatprep.subr.mxu0 0.0
    %207 = vmatpush1.msra.mxu0 0.0
    %208 = vmatprep.subr.mxu0 0.0
    %209 = vmatpush1.msra.mxu0 0.0
    %210 = vmatprep.subr.mxu0 0.0
    %211 = vmatpush1.msra.mxu0 0.0
    %212 = vmatprep.subr.mxu0 0.0
    %213 = vmatpush1.msra.mxu0 0.0
    %214 = vmatprep.subr.mxu0 0.0
    %215 = vmatpush1.msra.mxu0 0.0
    %216 = vmatprep.subr.mxu0 0.0
    %217 = vmatpush1.msra.mxu0 0.0
    %218 = vmatprep.subr.mxu0 0.0
    %219 = vmatpush1.msra.mxu0 0.0
    %220 = vmatprep.subr.mxu0 0.0
    %221 = vmatpush1.msra.mxu0 0.0
    %222 = vmatprep.subr.mxu0 0.0
    %223 = vmatpush1.msra.mxu0 0.0
    %224 = vmatprep.subr.mxu0 0.0
    %225 = vmatpush1.msra.mxu0 0.0
    %226 = vmatprep.subr.mxu0 0.0
    %227 = vmatpush1.msra.mxu0 0.0
    %228 = vmatprep.subr.mxu0 0.0
    %229 = vmatpush1.msra.mxu0 0.0
    %230 = vmatprep.subr.mxu0 0.0
    %231 = vmatpush1.msra.mxu0 0.0
    %232 = vmatprep.subr.mxu0 0.0
    %233 = vmatpush1.msra.mxu0 0.0
    %234 = vmatprep.subr.mxu0 0.0
    %235 = vmatpush1.msra.mxu0 %v202
    %236 = vmatprep.subr.mxu0 0.0
    %237 = vmatpush2.msra.mxu0 0.0
    %238 = vmatprep.subr.mxu0 0.0
    %239 = vmatpush2.msra.mxu0 0.0
    %240 = vmatprep.subr.mxu0 0.0
    %241 = vmatpush2.msra.mxu0 0.0
    %242 = vmatprep.subr.mxu0 0.0
    %243 = vmatpush2.msra.mxu0 0.0
    %244 = vmatprep.subr.mxu0 0.0
    %245 = vmatpush2.msra.mxu0 0.0
    %246 = vmatprep.subr.mxu0 0.0
    %247 = vmatpush2.msra.mxu0 0.0
    %248 = vmatprep.subr.mxu0 0.0
    %249 = vmatpush2.msra.mxu0 0.0
    %250 = vmatprep.subr.mxu0 0.0
    %251 = vmatpush2.msra.mxu0 0.0
    %252 = vmatprep.subr.mxu0 0.0
    %253 = vmatpush2.msra.mxu0 0.0
    %254 = vmatprep.subr.mxu0 0.0
    %255 = vmatpush2.msra.mxu0 0.0
    %256 = vmatprep.subr.mxu0 0.0
    %257 = vmatpush2.msra.mxu0 0.0
    %258 = vmatprep.subr.mxu0 0.0
    %259 = vmatpush2.msra.mxu0 0.0
    %260 = vmatprep.subr.mxu0 0.0
    %261 = vmatpush2.msra.mxu0 0.0
    %262 = vmatprep.subr.mxu0 0.0
    %263 = vmatpush2.msra.mxu0 0.0
    %264 = vmatprep.subr.mxu0 0.0
    %265 = vmatpush2.msra.mxu0 0.0
    %266 = vmatprep.subr.mxu0 0.0
    %267 = vmatpush2.msra.mxu0 0.0
    %268 = vmatprep.mubr.f32.mxu0 0.0
    %269 = vmatmul.mubr.f32.gmra.mxu0 %v177
    %v270 = vpop.f32.mrf.mxu0
    %v271 = vadd.f32 %v173, %v270
    %v272 = vpop.f32.mrf.mxu0
    %273 = vmatprep.mubr.f32.mxu0 0.0
    %274 = vmatmul.mubr.f32.gmra.mxu0 %v180
    %v275 = vpop.f32.mrf.mxu0
    %v276 = vadd.f32 %v173, %v275
    %v277 = vpop.f32.mrf.mxu0
    %278 = vmatprep.mubr.f32.mxu0 0.0
    %279 = vmatmul.mubr.f32.gmra.mxu0 %v183
    %v280 = vpop.f32.mrf.mxu0
    %v281 = vadd.f32 %v173, %v280
    %v282 = vpop.f32.mrf.mxu0
    %283 = vmatprep.mubr.f32.mxu0 0.0
    %284 = vmatmul.mubr.f32.gmra.mxu0 %v186
    %v285 = vpop.f32.mrf.mxu0
    %v286 = vadd.f32 %v173, %v285
    %v287 = vpop.f32.mrf.mxu0
    %288 = vmatprep.mubr.f32.mxu0 0.0
    %289 = vmatmul.mubr.f32.gmra.mxu0 %v189
    %v290 = vpop.f32.mrf.mxu0
    %v291 = vadd.f32 %v173, %v290
    %v292 = vpop.f32.mrf.mxu0
    %293 = vmatprep.mubr.f32.mxu0 0.0
    %294 = vmatmul.mubr.f32.gmra.mxu0 %v192
    %v295 = vpop.f32.mrf.mxu0
    %v296 = vadd.f32 %v173, %v295
    %v297 = vpop.f32.mrf.mxu0
    %298 = vmatprep.mubr.f32.mxu0 0.0
    %299 = vmatmul.mubr.f32.gmra.mxu0 %v195
    %v300 = vpop.f32.mrf.mxu0
    %v301 = vadd.f32 %v173, %v300
    %v302 = vpop.f32.mrf.mxu0
    %303 = vmatprep.mubr.f32.mxu0 0.0
    %304 = vmatmul.mubr.f32.gmra.mxu0 %v198
    %v305 = vpop.f32.mrf.mxu0
    %v306 = vadd.f32 %v173, %v305
    %v307 = vpop.f32.mrf.mxu0
    %308 = vdwg.mxu0
    %309 = vst [vmem:[#allocation3] sm:$0xff] %v271
    %310 = vst [vmem:[#allocation3 + $0x8] sm:$0xff] %v276
    %311 = vst [vmem:[#allocation3 + $0x10] sm:$0xff] %v281
    %312 = vst [vmem:[#allocation3 + $0x18] sm:$0xff] %v286
    %313 = vst [vmem:[#allocation3 + $0x20] sm:$0xff] %v291
    %314 = vst [vmem:[#allocation3 + $0x28] sm:$0xff] %v296
    %315 = vst [vmem:[#allocation3 + $0x30] sm:$0xff] %v301
    %316 = vst [vmem:[#allocation3 + $0x38] sm:$0xff] %v306
    %v317 = vld [vmem:[#allocation3] sm:$0xff]
    %vm318 = vcmask 261120
    %v320 = vsel %vm318, %v152, 0
    %322 = vmatprep.subr.mxu0 0.0
    %323 = vmatpush1.msra.mxu0 0.0
    %324 = vmatprep.subr.mxu0 0.0
    %325 = vmatpush1.msra.mxu0 0.0
    %326 = vmatprep.subr.mxu0 0.0
    %327 = vmatpush1.msra.mxu0 0.0
    %328 = vmatprep.subr.mxu0 0.0
    %329 = vmatpush1.msra.mxu0 0.0
    %330 = vmatprep.subr.mxu0 0.0
    %331 = vmatpush1.msra.mxu0 0.0
    %332 = vmatprep.subr.mxu0 0.0
    %333 = vmatpush1.msra.mxu0 0.0
    %334 = vmatprep.subr.mxu0 0.0
    %335 = vmatpush1.msra.mxu0 0.0
    %336 = vmatprep.subr.mxu0 0.0
    %337 = vmatpush1.msra.mxu0 0.0
    %338 = vmatprep.subr.mxu0 0.0
    %339 = vmatpush1.msra.mxu0 0.0
    %340 = vmatprep.subr.mxu0 0.0
    %341 = vmatpush1.msra.mxu0 0.0
    %342 = vmatprep.subr.mxu0 0.0
    %343 = vmatpush1.msra.mxu0 0.0
    %344 = vmatprep.subr.mxu0 0.0
    %345 = vmatpush1.msra.mxu0 0.0
    %346 = vmatprep.subr.mxu0 0.0
    %347 = vmatpush1.msra.mxu0 %v159
    %348 = vmatprep.subr.mxu0 0.0
    %349 = vmatpush1.msra.mxu0 %v158
    %350 = vmatprep.subr.mxu0 0.0
    %351 = vmatpush1.msra.mxu0 %v157
    %352 = vmatprep.subr.mxu0 0.0
    %353 = vmatpush1.msra.mxu0 %v156
    %354 = vmatprep.subr.mxu0 0.0
    %355 = vmatpush2.msra.mxu0 0.0
    %356 = vmatprep.subr.mxu0 0.0
    %357 = vmatpush2.msra.mxu0 0.0
    %358 = vmatprep.subr.mxu0 0.0
    %359 = vmatpush2.msra.mxu0 0.0
    %360 = vmatprep.subr.mxu0 0.0
    %361 = vmatpush2.msra.mxu0 0.0
    %362 = vmatprep.subr.mxu0 0.0
    %363 = vmatpush2.msra.mxu0 0.0
    %364 = vmatprep.subr.mxu0 0.0
    %365 = vmatpush2.msra.mxu0 0.0
    %366 = vmatprep.subr.mxu0 0.0
    %367 = vmatpush2.msra.mxu0 0.0
    %368 = vmatprep.subr.mxu0 0.0
    %369 = vmatpush2.msra.mxu0 0.0
    %370 = vmatprep.subr.mxu0 0.0
    %371 = vmatpush2.msra.mxu0 0.0
    %372 = vmatprep.subr.mxu0 0.0
    %373 = vmatpush2.msra.mxu0 0.0
    %374 = vmatprep.subr.mxu0 0.0
    %375 = vmatpush2.msra.mxu0 0.0
    %376 = vmatprep.subr.mxu0 0.0
    %377 = vmatpush2.msra.mxu0 0.0
    %378 = vmatprep.subr.mxu0 0.0
    %379 = vmatpush2.msra.mxu0 0.0
    %380 = vmatprep.subr.mxu0 0.0
    %381 = vmatpush2.msra.mxu0 0.0
    %382 = vmatprep.subr.mxu0 0.0
    %383 = vmatpush2.msra.mxu0 0.0
    %384 = vmatprep.subr.mxu0 0.0
    %385 = vmatpush2.msra.mxu0 0.0
    %386 = vmatprep.mubr.f32.mxu0 0.0
    %387 = vmatmul.mubr.f32.gmra.mxu0 %v320
    %v388 = vpop.f32.mrf.mxu0
    %v389 = vadd.f32 0.0, %v388
    %v390 = vpop.f32.mrf.mxu0
    %391 = vdwg.mxu0
    %v392 = vadd.f32 %v317, %v389
    %v393 = vxor.u32 %v392, 2147483648
    %v394 = vmul.f32 %v393, 1.442695
    %v395 = vpow.pop %v394
    %v396 = vadd.f32 %v395, 1.0
    %v397 = vrcp.pop %v396
    %v398 = vmul.f32 1.0, %v397
    %v399 = vtanh.pop %v392
    %400 = vrot.lane.b32.xlu0 %v152, 32
    %v401 = vpop.permute.xlu0 %400
    %v403 = vmul.f32 %v398, %v401
    %405 = vrot.lane.b32.xlu0 %v399, 64
    %v406 = vpop.permute.xlu0 %405
    %v408 = vmul.f32 %v398, %v406
    %410 = vrot.lane.b32.xlu0 %v408, 32
    %v411 = vpop.permute.xlu0 %410
    %v413 = vadd.f32 %v403, %v411
    %v414 = vtanh.pop %v413
    %416 = vrot.lane.b32.xlu0 %v414, 64
    %v417 = vpop.permute.xlu0 %416
    %v419 = vmul.f32 %v398, %v417
    %421 = vrot.lane.b32.xlu0 %v419, 32
    %v422 = vpop.permute.xlu0 %421
    %424 = vst.msk [vmem:[#allocation2] sm:$0xff] %vm318, %v422
    %s425 = scalar_lea.vmem [#allocation3], 8
    %v426 = vld [vmem:[%s425] sm:$0xff]
    %v427 = vsel %vm318, %v422, 0
    %429 = vmatprep.subr.mxu0 0.0
    %430 = vmatpush1.msra.mxu0 0.0
    %431 = vmatprep.subr.mxu0 0.0
    %432 = vmatpush1.msra.mxu0 0.0
    %433 = vmatprep.subr.mxu0 0.0
    %434 = vmatpush1.msra.mxu0 0.0
    %435 = vmatprep.subr.mxu0 0.0
    %436 = vmatpush1.msra.mxu0 0.0
    %437 = vmatprep.subr.mxu0 0.0
    %438 = vmatpush1.msra.mxu0 0.0
    %439 = vmatprep.subr.mxu0 0.0
    %440 = vmatpush1.msra.mxu0 0.0
    %441 = vmatprep.subr.mxu0 0.0
    %442 = vmatpush1.msra.mxu0 0.0
    %443 = vmatprep.subr.mxu0 0.0
    %444 = vmatpush1.msra.mxu0 0.0
    %445 = vmatprep.subr.mxu0 0.0
    %446 = vmatpush1.msra.mxu0 0.0
    %447 = vmatprep.subr.mxu0 0.0
    %448 = vmatpush1.msra.mxu0 0.0
    %449 = vmatprep.subr.mxu0 0.0
    %450 = vmatpush1.msra.mxu0 0.0
    %451 = vmatprep.subr.mxu0 0.0
    %452 = vmatpush1.msra.mxu0 0.0
    %453 = vmatprep.subr.mxu0 0.0
    %454 = vmatpush1.msra.mxu0 %v159
    %455 = vmatprep.subr.mxu0 0.0
    %456 = vmatpush1.msra.mxu0 %v158
    %457 = vmatprep.subr.mxu0 0.0
    %458 = vmatpush1.msra.mxu0 %v157
    %459 = vmatprep.subr.mxu0 0.0
    %460 = vmatpush1.msra.mxu0 %v156
    %461 = vmatprep.subr.mxu0 0.0
    %462 = vmatpush2.msra.mxu0 0.0
    %463 = vmatprep.subr.mxu0 0.0
    %464 = vmatpush2.msra.mxu0 0.0
    %465 = vmatprep.subr.mxu0 0.0
    %466 = vmatpush2.msra.mxu0 0.0
    %467 = vmatprep.subr.mxu0 0.0
    %468 = vmatpush2.msra.mxu0 0.0
    %469 = vmatprep.subr.mxu0 0.0
    %470 = vmatpush2.msra.mxu0 0.0
    %471 = vmatprep.subr.mxu0 0.0
    %472 = vmatpush2.msra.mxu0 0.0
    %473 = vmatprep.subr.mxu0 0.0
    %474 = vmatpush2.msra.mxu0 0.0
    %475 = vmatprep.subr.mxu0 0.0
    %476 = vmatpush2.msra.mxu0 0.0
    %477 = vmatprep.subr.mxu0 0.0
    %478 = vmatpush2.msra.mxu0 0.0
    %479 = vmatprep.subr.mxu0 0.0
    %480 = vmatpush2.msra.mxu0 0.0
    %481 = vmatprep.subr.mxu0 0.0
    %482 = vmatpush2.msra.mxu0 0.0
    %483 = vmatprep.subr.mxu0 0.0
    %484 = vmatpush2.msra.mxu0 0.0
    %485 = vmatprep.subr.mxu0 0.0
    %486 = vmatpush2.msra.mxu0 0.0
    %487 = vmatprep.subr.mxu0 0.0
    %488 = vmatpush2.msra.mxu0 0.0
    %489 = vmatprep.subr.mxu0 0.0
    %490 = vmatpush2.msra.mxu0 0.0
    %491 = vmatprep.subr.mxu0 0.0
    %492 = vmatpush2.msra.mxu0 0.0
    %493 = vmatprep.mubr.f32.mxu0 0.0
    %494 = vmatmul.mubr.f32.gmra.mxu0 %v427
    %v495 = vpop.f32.mrf.mxu0
    %v496 = vadd.f32 0.0, %v495
    %v497 = vpop.f32.mrf.mxu0
    %498 = vdwg.mxu0
    %v499 = vadd.f32 %v426, %v496
    %v500 = vxor.u32 %v499, 2147483648
    %v501 = vmul.f32 %v500, 1.442695
    %v502 = vpow.pop %v501
    %v503 = vadd.f32 %v502, 1.0
    %v504 = vrcp.pop %v503
    %v505 = vmul.f32 1.0, %v504
    %v506 = vtanh.pop %v499
    %v507 = vmul.f32 %v505, %v413
    %509 = vrot.lane.b32.xlu0 %v506, 64
    %v510 = vpop.permute.xlu0 %509
    %v512 = vmul.f32 %v505, %v510
    %514 = vrot.lane.b32.xlu0 %v512, 32
    %v515 = vpop.permute.xlu0 %514
    %v517 = vadd.f32 %v507, %v515
    %v518 = vtanh.pop %v517
    %520 = vrot.lane.b32.xlu0 %v518, 64
    %v521 = vpop.permute.xlu0 %520
    %v523 = vmul.f32 %v505, %v521
    %525 = vrot.lane.b32.xlu0 %v523, 32
    %v526 = vpop.permute.xlu0 %525
    %s528 = scalar_lea.vmem [#allocation2], 8
    %529 = vst.msk [vmem:[%s528] sm:$0xff] %vm318, %v526
    %s530 = scalar_lea.vmem [#allocation3], 16
    %v531 = vld [vmem:[%s530] sm:$0xff]
    %v532 = vsel %vm318, %v526, 0
    %534 = vmatprep.subr.mxu0 0.0
    %535 = vmatpush1.msra.mxu0 0.0
    %536 = vmatprep.subr.mxu0 0.0
    %537 = vmatpush1.msra.mxu0 0.0
    %538 = vmatprep.subr.mxu0 0.0
    %539 = vmatpush1.msra.mxu0 0.0
    %540 = vmatprep.subr.mxu0 0.0
    %541 = vmatpush1.msra.mxu0 0.0
    %542 = vmatprep.subr.mxu0 0.0
    %543 = vmatpush1.msra.mxu0 0.0
    %544 = vmatprep.subr.mxu0 0.0
    %545 = vmatpush1.msra.mxu0 0.0
    %546 = vmatprep.subr.mxu0 0.0
    %547 = vmatpush1.msra.mxu0 0.0
    %548 = vmatprep.subr.mxu0 0.0
    %549 = vmatpush1.msra.mxu0 0.0
    %550 = vmatprep.subr.mxu0 0.0
    %551 = vmatpush1.msra.mxu0 0.0
    %552 = vmatprep.subr.mxu0 0.0
    %553 = vmatpush1.msra.mxu0 0.0
    %554 = vmatprep.subr.mxu0 0.0
    %555 = vmatpush1.msra.mxu0 0.0
    %556 = vmatprep.subr.mxu0 0.0
    %557 = vmatpush1.msra.mxu0 0.0
    %558 = vmatprep.subr.mxu0 0.0
    %559 = vmatpush1.msra.mxu0 %v159
    %560 = vmatprep.subr.mxu0 0.0
    %561 = vmatpush1.msra.mxu0 %v158
    %562 = vmatprep.subr.mxu0 0.0
    %563 = vmatpush1.msra.mxu0 %v157
    %564 = vmatprep.subr.mxu0 0.0
    %565 = vmatpush1.msra.mxu0 %v156
    %566 = vmatprep.subr.mxu0 0.0
    %567 = vmatpush2.msra.mxu0 0.0
    %568 = vmatprep.subr.mxu0 0.0
    %569 = vmatpush2.msra.mxu0 0.0
    %570 = vmatprep.subr.mxu0 0.0
    %571 = vmatpush2.msra.mxu0 0.0
    %572 = vmatprep.subr.mxu0 0.0
    %573 = vmatpush2.msra.mxu0 0.0
    %574 = vmatprep.subr.mxu0 0.0
    %575 = vmatpush2.msra.mxu0 0.0
    %576 = vmatprep.subr.mxu0 0.0
    %577 = vmatpush2.msra.mxu0 0.0
    %578 = vmatprep.subr.mxu0 0.0
    %579 = vmatpush2.msra.mxu0 0.0
    %580 = vmatprep.subr.mxu0 0.0
    %581 = vmatpush2.msra.mxu0 0.0
    %582 = vmatprep.subr.mxu0 0.0
    %583 = vmatpush2.msra.mxu0 0.0
    %584 = vmatprep.subr.mxu0 0.0
    %585 = vmatpush2.msra.mxu0 0.0
    %586 = vmatprep.subr.mxu0 0.0
    %587 = vmatpush2.msra.mxu0 0.0
    %588 = vmatprep.subr.mxu0 0.0
    %589 = vmatpush2.msra.mxu0 0.0
    %590 = vmatprep.subr.mxu0 0.0
    %591 = vmatpush2.msra.mxu0 0.0
    %592 = vmatprep.subr.mxu0 0.0
    %593 = vmatpush2.msra.mxu0 0.0
    %594 = vmatprep.subr.mxu0 0.0
    %595 = vmatpush2.msra.mxu0 0.0
    %596 = vmatprep.subr.mxu0 0.0
    %597 = vmatpush2.msra.mxu0 0.0
    %598 = vmatprep.mubr.f32.mxu0 0.0
    %599 = vmatmul.mubr.f32.gmra.mxu0 %v532
    %v600 = vpop.f32.mrf.mxu0
    %v601 = vadd.f32 0.0, %v600
    %v602 = vpop.f32.mrf.mxu0
    %603 = vdwg.mxu0
    %v604 = vadd.f32 %v531, %v601
    %v605 = vxor.u32 %v604, 2147483648
    %v606 = vmul.f32 %v605, 1.442695
    %v607 = vpow.pop %v606
    %v608 = vadd.f32 %v607, 1.0
    %v609 = vrcp.pop %v608
    %v610 = vmul.f32 1.0, %v609
    %v611 = vtanh.pop %v604
    %v612 = vmul.f32 %v610, %v517
    %614 = vrot.lane.b32.xlu0 %v611, 64
    %v615 = vpop.permute.xlu0 %614
    %v617 = vmul.f32 %v610, %v615
    %619 = vrot.lane.b32.xlu0 %v617, 32
    %v620 = vpop.permute.xlu0 %619
    %v622 = vadd.f32 %v612, %v620
    %v623 = vtanh.pop %v622
    %625 = vrot.lane.b32.xlu0 %v623, 64
    %v626 = vpop.permute.xlu0 %625
    %v628 = vmul.f32 %v610, %v626
    %630 = vrot.lane.b32.xlu0 %v628, 32
    %v631 = vpop.permute.xlu0 %630
    %s633 = scalar_lea.vmem [#allocation2], 16
    %634 = vst.msk [vmem:[%s633] sm:$0xff] %vm318, %v631
    %s635 = scalar_lea.vmem [#allocation3], 24
    %v636 = vld [vmem:[%s635] sm:$0xff]
    %v637 = vsel %vm318, %v631, 0
    %639 = vmatprep.subr.mxu0 0.0
    %640 = vmatpush1.msra.mxu0 0.0
    %641 = vmatprep.subr.mxu0 0.0
    %642 = vmatpush1.msra.mxu0 0.0
    %643 = vmatprep.subr.mxu0 0.0
    %644 = vmatpush1.msra.mxu0 0.0
    %645 = vmatprep.subr.mxu0 0.0
    %646 = vmatpush1.msra.mxu0 0.0
    %647 = vmatprep.subr.mxu0 0.0
    %648 = vmatpush1.msra.mxu0 0.0
    %649 = vmatprep.subr.mxu0 0.0
    %650 = vmatpush1.msra.mxu0 0.0
    %651 = vmatprep.subr.mxu0 0.0
    %652 = vmatpush1.msra.mxu0 0.0
    %653 = vmatprep.subr.mxu0 0.0
    %654 = vmatpush1.msra.mxu0 0.0
    %655 = vmatprep.subr.mxu0 0.0
    %656 = vmatpush1.msra.mxu0 0.0
    %657 = vmatprep.subr.mxu0 0.0
    %658 = vmatpush1.msra.mxu0 0.0
    %659 = vmatprep.subr.mxu0 0.0
    %660 = vmatpush1.msra.mxu0 0.0
    %661 = vmatprep.subr.mxu0 0.0
    %662 = vmatpush1.msra.mxu0 0.0
    %663 = vmatprep.subr.mxu0 0.0
    %664 = vmatpush1.msra.mxu0 %v159
    %665 = vmatprep.subr.mxu0 0.0
    %666 = vmatpush1.msra.mxu0 %v158
    %667 = vmatprep.subr.mxu0 0.0
    %668 = vmatpush1.msra.mxu0 %v157
    %669 = vmatprep.subr.mxu0 0.0
    %670 = vmatpush1.msra.mxu0 %v156
    %671 = vmatprep.subr.mxu0 0.0
    %672 = vmatpush2.msra.mxu0 0.0
    %673 = vmatprep.subr.mxu0 0.0
    %674 = vmatpush2.msra.mxu0 0.0
    %675 = vmatprep.subr.mxu0 0.0
    %676 = vmatpush2.msra.mxu0 0.0
    %677 = vmatprep.subr.mxu0 0.0
    %678 = vmatpush2.msra.mxu0 0.0
    %679 = vmatprep.subr.mxu0 0.0
    %680 = vmatpush2.msra.mxu0 0.0
    %681 = vmatprep.subr.mxu0 0.0
    %682 = vmatpush2.msra.mxu0 0.0
    %683 = vmatprep.subr.mxu0 0.0
    %684 = vmatpush2.msra.mxu0 0.0
    %685 = vmatprep.subr.mxu0 0.0
    %686 = vmatpush2.msra.mxu0 0.0
    %687 = vmatprep.subr.mxu0 0.0
    %688 = vmatpush2.msra.mxu0 0.0
    %689 = vmatprep.subr.mxu0 0.0
    %690 = vmatpush2.msra.mxu0 0.0
    %691 = vmatprep.subr.mxu0 0.0
    %692 = vmatpush2.msra.mxu0 0.0
    %693 = vmatprep.subr.mxu0 0.0
    %694 = vmatpush2.msra.mxu0 0.0
    %695 = vmatprep.subr.mxu0 0.0
    %696 = vmatpush2.msra.mxu0 0.0
    %697 = vmatprep.subr.mxu0 0.0
    %698 = vmatpush2.msra.mxu0 0.0
    %699 = vmatprep.subr.mxu0 0.0
    %700 = vmatpush2.msra.mxu0 0.0
    %701 = vmatprep.subr.mxu0 0.0
    %702 = vmatpush2.msra.mxu0 0.0
    %703 = vmatprep.mubr.f32.mxu0 0.0
    %704 = vmatmul.mubr.f32.gmra.mxu0 %v637
    %v705 = vpop.f32.mrf.mxu0
    %v706 = vadd.f32 0.0, %v705
    %v707 = vpop.f32.mrf.mxu0
    %708 = vdwg.mxu0
    %v709 = vadd.f32 %v636, %v706
    %v710 = vxor.u32 %v709, 2147483648
    %v711 = vmul.f32 %v710, 1.442695
    %v712 = vpow.pop %v711
    %v713 = vadd.f32 %v712, 1.0
    %v714 = vrcp.pop %v713
    %v715 = vmul.f32 1.0, %v714
    %v716 = vtanh.pop %v709
    %v717 = vmul.f32 %v715, %v622
    %719 = vrot.lane.b32.xlu0 %v716, 64
    %v720 = vpop.permute.xlu0 %719
    %v722 = vmul.f32 %v715, %v720
    %724 = vrot.lane.b32.xlu0 %v722, 32
    %v725 = vpop.permute.xlu0 %724
    %v727 = vadd.f32 %v717, %v725
    %v728 = vtanh.pop %v727
    %730 = vrot.lane.b32.xlu0 %v728, 64
    %v731 = vpop.permute.xlu0 %730
    %v733 = vmul.f32 %v715, %v731
    %735 = vrot.lane.b32.xlu0 %v733, 32
    %v736 = vpop.permute.xlu0 %735
    %s738 = scalar_lea.vmem [#allocation2], 24
    %739 = vst.msk [vmem:[%s738] sm:$0xff] %vm318, %v736
    %s740 = scalar_lea.vmem [#allocation3], 32
    %v741 = vld [vmem:[%s740] sm:$0xff]
    %v742 = vsel %vm318, %v736, 0
    %744 = vmatprep.subr.mxu0 0.0
    %745 = vmatpush1.msra.mxu0 0.0
    %746 = vmatprep.subr.mxu0 0.0
    %747 = vmatpush1.msra.mxu0 0.0
    %748 = vmatprep.subr.mxu0 0.0
    %749 = vmatpush1.msra.mxu0 0.0
    %750 = vmatprep.subr.mxu0 0.0
    %751 = vmatpush1.msra.mxu0 0.0
    %752 = vmatprep.subr.mxu0 0.0
    %753 = vmatpush1.msra.mxu0 0.0
    %754 = vmatprep.subr.mxu0 0.0
    %755 = vmatpush1.msra.mxu0 0.0
    %756 = vmatprep.subr.mxu0 0.0
    %757 = vmatpush1.msra.mxu0 0.0
    %758 = vmatprep.subr.mxu0 0.0
    %759 = vmatpush1.msra.mxu0 0.0
    %760 = vmatprep.subr.mxu0 0.0
    %761 = vmatpush1.msra.mxu0 0.0
    %762 = vmatprep.subr.mxu0 0.0
    %763 = vmatpush1.msra.mxu0 0.0
    %764 = vmatprep.subr.mxu0 0.0
    %765 = vmatpush1.msra.mxu0 0.0
    %766 = vmatprep.subr.mxu0 0.0
    %767 = vmatpush1.msra.mxu0 0.0
    %768 = vmatprep.subr.mxu0 0.0
    %769 = vmatpush1.msra.mxu0 %v159
    %770 = vmatprep.subr.mxu0 0.0
    %771 = vmatpush1.msra.mxu0 %v158
    %772 = vmatprep.subr.mxu0 0.0
    %773 = vmatpush1.msra.mxu0 %v157
    %774 = vmatprep.subr.mxu0 0.0
    %775 = vmatpush1.msra.mxu0 %v156
    %776 = vmatprep.subr.mxu0 0.0
    %777 = vmatpush2.msra.mxu0 0.0
    %778 = vmatprep.subr.mxu0 0.0
    %779 = vmatpush2.msra.mxu0 0.0
    %780 = vmatprep.subr.mxu0 0.0
    %781 = vmatpush2.msra.mxu0 0.0
    %782 = vmatprep.subr.mxu0 0.0
    %783 = vmatpush2.msra.mxu0 0.0
    %784 = vmatprep.subr.mxu0 0.0
    %785 = vmatpush2.msra.mxu0 0.0
    %786 = vmatprep.subr.mxu0 0.0
    %787 = vmatpush2.msra.mxu0 0.0
    %788 = vmatprep.subr.mxu0 0.0
    %789 = vmatpush2.msra.mxu0 0.0
    %790 = vmatprep.subr.mxu0 0.0
    %791 = vmatpush2.msra.mxu0 0.0
    %792 = vmatprep.subr.mxu0 0.0
    %793 = vmatpush2.msra.mxu0 0.0
    %794 = vmatprep.subr.mxu0 0.0
    %795 = vmatpush2.msra.mxu0 0.0
    %796 = vmatprep.subr.mxu0 0.0
    %797 = vmatpush2.msra.mxu0 0.0
    %798 = vmatprep.subr.mxu0 0.0
    %799 = vmatpush2.msra.mxu0 0.0
    %800 = vmatprep.subr.mxu0 0.0
    %801 = vmatpush2.msra.mxu0 0.0
    %802 = vmatprep.subr.mxu0 0.0
    %803 = vmatpush2.msra.mxu0 0.0
    %804 = vmatprep.subr.mxu0 0.0
    %805 = vmatpush2.msra.mxu0 0.0
    %806 = vmatprep.subr.mxu0 0.0
    %807 = vmatpush2.msra.mxu0 0.0
    %808 = vmatprep.mubr.f32.mxu0 0.0
    %809 = vmatmul.mubr.f32.gmra.mxu0 %v742
    %v810 = vpop.f32.mrf.mxu0
    %v811 = vadd.f32 0.0, %v810
    %v812 = vpop.f32.mrf.mxu0
    %813 = vdwg.mxu0
    %v814 = vadd.f32 %v741, %v811
    %v815 = vxor.u32 %v814, 2147483648
    %v816 = vmul.f32 %v815, 1.442695
    %v817 = vpow.pop %v816
    %v818 = vadd.f32 %v817, 1.0
    %v819 = vrcp.pop %v818
    %v820 = vmul.f32 1.0, %v819
    %v821 = vtanh.pop %v814
    %v822 = vmul.f32 %v820, %v727
    %824 = vrot.lane.b32.xlu0 %v821, 64
    %v825 = vpop.permute.xlu0 %824
    %v827 = vmul.f32 %v820, %v825
    %829 = vrot.lane.b32.xlu0 %v827, 32
    %v830 = vpop.permute.xlu0 %829
    %v832 = vadd.f32 %v822, %v830
    %v833 = vtanh.pop %v832
    %835 = vrot.lane.b32.xlu0 %v833, 64
    %v836 = vpop.permute.xlu0 %835
    %v838 = vmul.f32 %v820, %v836
    %840 = vrot.lane.b32.xlu0 %v838, 32
    %v841 = vpop.permute.xlu0 %840
    %s843 = scalar_lea.vmem [#allocation2], 32
    %844 = vst.msk [vmem:[%s843] sm:$0xff] %vm318, %v841
    %s845 = scalar_lea.vmem [#allocation3], 40
    %v846 = vld [vmem:[%s845] sm:$0xff]
    %v847 = vsel %vm318, %v841, 0
    %849 = vmatprep.subr.mxu0 0.0
    %850 = vmatpush1.msra.mxu0 0.0
    %851 = vmatprep.subr.mxu0 0.0
    %852 = vmatpush1.msra.mxu0 0.0
    %853 = vmatprep.subr.mxu0 0.0
    %854 = vmatpush1.msra.mxu0 0.0
    %855 = vmatprep.subr.mxu0 0.0
    %856 = vmatpush1.msra.mxu0 0.0
    %857 = vmatprep.subr.mxu0 0.0
    %858 = vmatpush1.msra.mxu0 0.0
    %859 = vmatprep.subr.mxu0 0.0
    %860 = vmatpush1.msra.mxu0 0.0
    %861 = vmatprep.subr.mxu0 0.0
    %862 = vmatpush1.msra.mxu0 0.0
    %863 = vmatprep.subr.mxu0 0.0
    %864 = vmatpush1.msra.mxu0 0.0
    %865 = vmatprep.subr.mxu0 0.0
    %866 = vmatpush1.msra.mxu0 0.0
    %867 = vmatprep.subr.mxu0 0.0
    %868 = vmatpush1.msra.mxu0 0.0
    %869 = vmatprep.subr.mxu0 0.0
    %870 = vmatpush1.msra.mxu0 0.0
    %871 = vmatprep.subr.mxu0 0.0
    %872 = vmatpush1.msra.mxu0 0.0
    %873 = vmatprep.subr.mxu0 0.0
    %874 = vmatpush1.msra.mxu0 %v159
    %875 = vmatprep.subr.mxu0 0.0
    %876 = vmatpush1.msra.mxu0 %v158
    %877 = vmatprep.subr.mxu0 0.0
    %878 = vmatpush1.msra.mxu0 %v157
    %879 = vmatprep.subr.mxu0 0.0
    %880 = vmatpush1.msra.mxu0 %v156
    %881 = vmatprep.subr.mxu0 0.0
    %882 = vmatpush2.msra.mxu0 0.0
    %883 = vmatprep.subr.mxu0 0.0
    %884 = vmatpush2.msra.mxu0 0.0
    %885 = vmatprep.subr.mxu0 0.0
    %886 = vmatpush2.msra.mxu0 0.0
    %887 = vmatprep.subr.mxu0 0.0
    %888 = vmatpush2.msra.mxu0 0.0
    %889 = vmatprep.subr.mxu0 0.0
    %890 = vmatpush2.msra.mxu0 0.0
    %891 = vmatprep.subr.mxu0 0.0
    %892 = vmatpush2.msra.mxu0 0.0
    %893 = vmatprep.subr.mxu0 0.0
    %894 = vmatpush2.msra.mxu0 0.0
    %895 = vmatprep.subr.mxu0 0.0
    %896 = vmatpush2.msra.mxu0 0.0
    %897 = vmatprep.subr.mxu0 0.0
    %898 = vmatpush2.msra.mxu0 0.0
    %899 = vmatprep.subr.mxu0 0.0
    %900 = vmatpush2.msra.mxu0 0.0
    %901 = vmatprep.subr.mxu0 0.0
    %902 = vmatpush2.msra.mxu0 0.0
    %903 = vmatprep.subr.mxu0 0.0
    %904 = vmatpush2.msra.mxu0 0.0
    %905 = vmatprep.subr.mxu0 0.0
    %906 = vmatpush2.msra.mxu0 0.0
    %907 = vmatprep.subr.mxu0 0.0
    %908 = vmatpush2.msra.mxu0 0.0
    %909 = vmatprep.subr.mxu0 0.0
    %910 = vmatpush2.msra.mxu0 0.0
    %911 = vmatprep.subr.mxu0 0.0
    %912 = vmatpush2.msra.mxu0 0.0
    %913 = vmatprep.mubr.f32.mxu0 0.0
    %914 = vmatmul.mubr.f32.gmra.mxu0 %v847
    %v915 = vpop.f32.mrf.mxu0
    %v916 = vadd.f32 0.0, %v915
    %v917 = vpop.f32.mrf.mxu0
    %918 = vdwg.mxu0
    %v919 = vadd.f32 %v846, %v916
    %v920 = vxor.u32 %v919, 2147483648
    %v921 = vmul.f32 %v920, 1.442695
    %v922 = vpow.pop %v921
    %v923 = vadd.f32 %v922, 1.0
    %v924 = vrcp.pop %v923
    %v925 = vmul.f32 1.0, %v924
    %v926 = vtanh.pop %v919
    %v927 = vmul.f32 %v925, %v832
    %929 = vrot.lane.b32.xlu0 %v926, 64
    %v930 = vpop.permute.xlu0 %929
    %v932 = vmul.f32 %v925, %v930
    %934 = vrot.lane.b32.xlu0 %v932, 32
    %v935 = vpop.permute.xlu0 %934
    %v937 = vadd.f32 %v927, %v935
    %v938 = vtanh.pop %v937
    %940 = vrot.lane.b32.xlu0 %v938, 64
    %v941 = vpop.permute.xlu0 %940
    %v943 = vmul.f32 %v925, %v941
    %945 = vrot.lane.b32.xlu0 %v943, 32
    %v946 = vpop.permute.xlu0 %945
    %s948 = scalar_lea.vmem [#allocation2], 40
    %949 = vst.msk [vmem:[%s948] sm:$0xff] %vm318, %v946
    %s950 = scalar_lea.vmem [#allocation3], 48
    %v951 = vld [vmem:[%s950] sm:$0xff]
    %v952 = vsel %vm318, %v946, 0
    %954 = vmatprep.subr.mxu0 0.0
    %955 = vmatpush1.msra.mxu0 0.0
    %956 = vmatprep.subr.mxu0 0.0
    %957 = vmatpush1.msra.mxu0 0.0
    %958 = vmatprep.subr.mxu0 0.0
    %959 = vmatpush1.msra.mxu0 0.0
    %960 = vmatprep.subr.mxu0 0.0
    %961 = vmatpush1.msra.mxu0 0.0
    %962 = vmatprep.subr.mxu0 0.0
    %963 = vmatpush1.msra.mxu0 0.0
    %964 = vmatprep.subr.mxu0 0.0
    %965 = vmatpush1.msra.mxu0 0.0
    %966 = vmatprep.subr.mxu0 0.0
    %967 = vmatpush1.msra.mxu0 0.0
    %968 = vmatprep.subr.mxu0 0.0
    %969 = vmatpush1.msra.mxu0 0.0
    %970 = vmatprep.subr.mxu0 0.0
    %971 = vmatpush1.msra.mxu0 0.0
    %972 = vmatprep.subr.mxu0 0.0
    %973 = vmatpush1.msra.mxu0 0.0
    %974 = vmatprep.subr.mxu0 0.0
    %975 = vmatpush1.msra.mxu0 0.0
    %976 = vmatprep.subr.mxu0 0.0
    %977 = vmatpush1.msra.mxu0 0.0
    %978 = vmatprep.subr.mxu0 0.0
    %979 = vmatpush1.msra.mxu0 %v159
    %980 = vmatprep.subr.mxu0 0.0
    %981 = vmatpush1.msra.mxu0 %v158
    %982 = vmatprep.subr.mxu0 0.0
    %983 = vmatpush1.msra.mxu0 %v157
    %984 = vmatprep.subr.mxu0 0.0
    %985 = vmatpush1.msra.mxu0 %v156
    %986 = vmatprep.subr.mxu0 0.0
    %987 = vmatpush2.msra.mxu0 0.0
    %988 = vmatprep.subr.mxu0 0.0
    %989 = vmatpush2.msra.mxu0 0.0
    %990 = vmatprep.subr.mxu0 0.0
    %991 = vmatpush2.msra.mxu0 0.0
    %992 = vmatprep.subr.mxu0 0.0
    %993 = vmatpush2.msra.mxu0 0.0
    %994 = vmatprep.subr.mxu0 0.0
    %995 = vmatpush2.msra.mxu0 0.0
    %996 = vmatprep.subr.mxu0 0.0
    %997 = vmatpush2.msra.mxu0 0.0
    %998 = vmatprep.subr.mxu0 0.0
    %999 = vmatpush2.msra.mxu0 0.0
    %1000 = vmatprep.subr.mxu0 0.0
    %1001 = vmatpush2.msra.mxu0 0.0
    %1002 = vmatprep.subr.mxu0 0.0
    %1003 = vmatpush2.msra.mxu0 0.0
    %1004 = vmatprep.subr.mxu0 0.0
    %1005 = vmatpush2.msra.mxu0 0.0
    %1006 = vmatprep.subr.mxu0 0.0
    %1007 = vmatpush2.msra.mxu0 0.0
    %1008 = vmatprep.subr.mxu0 0.0
    %1009 = vmatpush2.msra.mxu0 0.0
    %1010 = vmatprep.subr.mxu0 0.0
    %1011 = vmatpush2.msra.mxu0 0.0
    %1012 = vmatprep.subr.mxu0 0.0
    %1013 = vmatpush2.msra.mxu0 0.0
    %1014 = vmatprep.subr.mxu0 0.0
    %1015 = vmatpush2.msra.mxu0 0.0
    %1016 = vmatprep.subr.mxu0 0.0
    %1017 = vmatpush2.msra.mxu0 0.0
    %1018 = vmatprep.mubr.f32.mxu0 0.0
    %1019 = vmatmul.mubr.f32.gmra.mxu0 %v952
    %v1020 = vpop.f32.mrf.mxu0
    %v1021 = vadd.f32 0.0, %v1020
    %v1022 = vpop.f32.mrf.mxu0
    %1023 = vdwg.mxu0
    %v1024 = vadd.f32 %v951, %v1021
    %v1025 = vxor.u32 %v1024, 2147483648
    %v1026 = vmul.f32 %v1025, 1.442695
    %v1027 = vpow.pop %v1026
    %v1028 = vadd.f32 %v1027, 1.0
    %v1029 = vrcp.pop %v1028
    %v1030 = vmul.f32 1.0, %v1029
    %v1031 = vtanh.pop %v1024
    %v1032 = vmul.f32 %v1030, %v937
    %1034 = vrot.lane.b32.xlu0 %v1031, 64
    %v1035 = vpop.permute.xlu0 %1034
    %v1037 = vmul.f32 %v1030, %v1035
    %1039 = vrot.lane.b32.xlu0 %v1037, 32
    %v1040 = vpop.permute.xlu0 %1039
    %v1042 = vadd.f32 %v1032, %v1040
    %v1043 = vtanh.pop %v1042
    %1045 = vrot.lane.b32.xlu0 %v1043, 64
    %v1046 = vpop.permute.xlu0 %1045
    %v1048 = vmul.f32 %v1030, %v1046
    %1050 = vrot.lane.b32.xlu0 %v1048, 32
    %v1051 = vpop.permute.xlu0 %1050
    %s1053 = scalar_lea.vmem [#allocation2], 48
    %1054 = vst.msk [vmem:[%s1053] sm:$0xff] %vm318, %v1051
    %s1055 = scalar_lea.vmem [#allocation3], 56
    %v1056 = vld [vmem:[%s1055] sm:$0xff]
    %v1057 = vsel %vm318, %v1051, 0
    %1059 = vmatprep.subr.mxu0 0.0
    %1060 = vmatpush1.msra.mxu0 0.0
    %1061 = vmatprep.subr.mxu0 0.0
    %1062 = vmatpush1.msra.mxu0 0.0
    %1063 = vmatprep.subr.mxu0 0.0
    %1064 = vmatpush1.msra.mxu0 0.0
    %1065 = vmatprep.subr.mxu0 0.0
    %1066 = vmatpush1.msra.mxu0 0.0
    %1067 = vmatprep.subr.mxu0 0.0
    %1068 = vmatpush1.msra.mxu0 0.0
    %1069 = vmatprep.subr.mxu0 0.0
    %1070 = vmatpush1.msra.mxu0 0.0
    %1071 = vmatprep.subr.mxu0 0.0
    %1072 = vmatpush1.msra.mxu0 0.0
    %1073 = vmatprep.subr.mxu0 0.0
    %1074 = vmatpush1.msra.mxu0 0.0
    %1075 = vmatprep.subr.mxu0 0.0
    %1076 = vmatpush1.msra.mxu0 0.0
    %1077 = vmatprep.subr.mxu0 0.0
    %1078 = vmatpush1.msra.mxu0 0.0
    %1079 = vmatprep.subr.mxu0 0.0
    %1080 = vmatpush1.msra.mxu0 0.0
    %1081 = vmatprep.subr.mxu0 0.0
    %1082 = vmatpush1.msra.mxu0 0.0
    %1083 = vmatprep.subr.mxu0 0.0
    %1084 = vmatpush1.msra.mxu0 %v159
    %1085 = vmatprep.subr.mxu0 0.0
    %1086 = vmatpush1.msra.mxu0 %v158
    %1087 = vmatprep.subr.mxu0 0.0
    %1088 = vmatpush1.msra.mxu0 %v157
    %1089 = vmatprep.subr.mxu0 0.0
    %1090 = vmatpush1.msra.mxu0 %v156
    %1091 = vmatprep.subr.mxu0 0.0
    %1092 = vmatpush2.msra.mxu0 0.0
    %1093 = vmatprep.subr.mxu0 0.0
    %1094 = vmatpush2.msra.mxu0 0.0
    %1095 = vmatprep.subr.mxu0 0.0
    %1096 = vmatpush2.msra.mxu0 0.0
    %1097 = vmatprep.subr.mxu0 0.0
    %1098 = vmatpush2.msra.mxu0 0.0
    %1099 = vmatprep.subr.mxu0 0.0
    %1100 = vmatpush2.msra.mxu0 0.0
    %1101 = vmatprep.subr.mxu0 0.0
    %1102 = vmatpush2.msra.mxu0 0.0
    %1103 = vmatprep.subr.mxu0 0.0
    %1104 = vmatpush2.msra.mxu0 0.0
    %1105 = vmatprep.subr.mxu0 0.0
    %1106 = vmatpush2.msra.mxu0 0.0
    %1107 = vmatprep.subr.mxu0 0.0
    %1108 = vmatpush2.msra.mxu0 0.0
    %1109 = vmatprep.subr.mxu0 0.0
    %1110 = vmatpush2.msra.mxu0 0.0
    %1111 = vmatprep.subr.mxu0 0.0
    %1112 = vmatpush2.msra.mxu0 0.0
    %1113 = vmatprep.subr.mxu0 0.0
    %1114 = vmatpush2.msra.mxu0 0.0
    %1115 = vmatprep.subr.mxu0 0.0
    %1116 = vmatpush2.msra.mxu0 0.0
    %1117 = vmatprep.subr.mxu0 0.0
    %1118 = vmatpush2.msra.mxu0 0.0
    %1119 = vmatprep.subr.mxu0 0.0
    %1120 = vmatpush2.msra.mxu0 0.0
    %1121 = vmatprep.subr.mxu0 0.0
    %1122 = vmatpush2.msra.mxu0 0.0
    %1123 = vmatprep.mubr.f32.mxu0 0.0
    %1124 = vmatmul.mubr.f32.gmra.mxu0 %v1057
    %v1125 = vpop.f32.mrf.mxu0
    %v1126 = vadd.f32 0.0, %v1125
    %v1127 = vpop.f32.mrf.mxu0
    %1128 = vdwg.mxu0
    %v1129 = vadd.f32 %v1056, %v1126
    %v1130 = vxor.u32 %v1129, 2147483648
    %v1131 = vmul.f32 %v1130, 1.442695
    %v1132 = vpow.pop %v1131
    %v1133 = vadd.f32 %v1132, 1.0
    %v1134 = vrcp.pop %v1133
    %v1135 = vmul.f32 1.0, %v1134
    %v1136 = vtanh.pop %v1129
    %v1137 = vmul.f32 %v1135, %v1042
    %1139 = vrot.lane.b32.xlu0 %v1136, 64
    %v1140 = vpop.permute.xlu0 %1139
    %v1142 = vmul.f32 %v1135, %v1140
    %1144 = vrot.lane.b32.xlu0 %v1142, 32
    %v1145 = vpop.permute.xlu0 %1144
    %v1147 = vadd.f32 %v1137, %v1145
    %v1148 = vtanh.pop %v1147
    %1150 = vrot.lane.b32.xlu0 %v1148, 64
    %v1151 = vpop.permute.xlu0 %1150
    %v1153 = vmul.f32 %v1135, %v1151
    %1155 = vrot.lane.b32.xlu0 %v1153, 32
    %v1156 = vpop.permute.xlu0 %1155
    %s1158 = scalar_lea.vmem [#allocation2], 56
    %1159 = vst.msk [vmem:[%s1158] sm:$0xff] %vm318, %v1156
    %v1160 = vld [vmem:[%s7] sm:$0xff]
    %v1161 = vld [vmem:[%s7 + $0x8] sm:$0xff]
    %v1162 = vld [vmem:[%s7 + $0x10] sm:$0xff]
    %v1163 = vld [vmem:[%s7 + $0x18] sm:$0xff]
    %v1164 = vld [vmem:[%s8] sm:$0xff]
    %v1165 = vld [vmem:[%s8 + $0x8] sm:$0xff]
    %v1166 = vld [vmem:[%s8 + $0x10] sm:$0xff]
    %v1167 = vld [vmem:[%s8 + $0x18] sm:$0xff]
    %v1168 = vld [vmem:[%s9] sm:$0x1]
    %v1169 = vld [vmem:[#allocation2] sm:$0xff]
    %v1170 = vld [vmem:[#allocation2 + $0x8] sm:$0xff]
    %v1171 = vld [vmem:[#allocation2 + $0x10] sm:$0xff]
    %v1172 = vld [vmem:[#allocation2 + $0x18] sm:$0xff]
    %v1173 = vld [vmem:[#allocation2 + $0x20] sm:$0xff]
    %v1174 = vld [vmem:[#allocation2 + $0x28] sm:$0xff]
    %v1175 = vld [vmem:[#allocation2 + $0x30] sm:$0xff]
    %v1176 = vld [vmem:[#allocation2 + $0x38] sm:$0xff]
    %v1178 = vlaneseq
    %v1179 = vshrl.u32 %v1178, 7
    %v1180 = vsub.s32 0, %v1179
    %v1181 = vrot.slane %v1168, %v1180
    %v1184 = vsel %vm318, %v1169, 0
    %v1187 = vsel %vm318, %v1170, 0
    %v1190 = vsel %vm318, %v1171, 0
    %v1193 = vsel %vm318, %v1172, 0
    %v1196 = vsel %vm318, %v1173, 0
    %v1199 = vsel %vm318, %v1174, 0
    %v1202 = vsel %vm318, %v1175, 0
    %v1205 = vsel %vm318, %v1176, 0
    %1207 = vmatprep.subr.mxu0 0.0
    %1208 = vmatpush1.msra.mxu0 0.0
    %1209 = vmatprep.subr.mxu0 0.0
    %1210 = vmatpush1.msra.mxu0 0.0
    %1211 = vmatprep.subr.mxu0 0.0
    %1212 = vmatpush1.msra.mxu0 0.0
    %1213 = vmatprep.subr.mxu0 0.0
    %1214 = vmatpush1.msra.mxu0 0.0
    %1215 = vmatprep.subr.mxu0 0.0
    %1216 = vmatpush1.msra.mxu0 0.0
    %1217 = vmatprep.subr.mxu0 0.0
    %1218 = vmatpush1.msra.mxu0 0.0
    %1219 = vmatprep.subr.mxu0 0.0
    %1220 = vmatpush1.msra.mxu0 0.0
    %1221 = vmatprep.subr.mxu0 0.0
    %1222 = vmatpush1.msra.mxu0 0.0
    %1223 = vmatprep.subr.mxu0 0.0
    %1224 = vmatpush1.msra.mxu0 0.0
    %1225 = vmatprep.subr.mxu0 0.0
    %1226 = vmatpush1.msra.mxu0 0.0
    %1227 = vmatprep.subr.mxu0 0.0
    %1228 = vmatpush1.msra.mxu0 0.0
    %1229 = vmatprep.subr.mxu0 0.0
    %1230 = vmatpush1.msra.mxu0 0.0
    %1231 = vmatprep.subr.mxu0 0.0
    %1232 = vmatpush1.msra.mxu0 %v1163
    %1233 = vmatprep.subr.mxu0 0.0
    %1234 = vmatpush1.msra.mxu0 %v1162
    %1235 = vmatprep.subr.mxu0 0.0
    %1236 = vmatpush1.msra.mxu0 %v1161
    %1237 = vmatprep.subr.mxu0 0.0
    %1238 = vmatpush1.msra.mxu0 %v1160
    %1239 = vmatprep.subr.mxu0 0.0
    %1240 = vmatpush2.msra.mxu0 0.0
    %1241 = vmatprep.subr.mxu0 0.0
    %1242 = vmatpush2.msra.mxu0 0.0
    %1243 = vmatprep.subr.mxu0 0.0
    %1244 = vmatpush2.msra.mxu0 0.0
    %1245 = vmatprep.subr.mxu0 0.0
    %1246 = vmatpush2.msra.mxu0 0.0
    %1247 = vmatprep.subr.mxu0 0.0
    %1248 = vmatpush2.msra.mxu0 0.0
    %1249 = vmatprep.subr.mxu0 0.0
    %1250 = vmatpush2.msra.mxu0 0.0
    %1251 = vmatprep.subr.mxu0 0.0
    %1252 = vmatpush2.msra.mxu0 0.0
    %1253 = vmatprep.subr.mxu0 0.0
    %1254 = vmatpush2.msra.mxu0 0.0
    %1255 = vmatprep.subr.mxu0 0.0
    %1256 = vmatpush2.msra.mxu0 0.0
    %1257 = vmatprep.subr.mxu0 0.0
    %1258 = vmatpush2.msra.mxu0 0.0
    %1259 = vmatprep.subr.mxu0 0.0
    %1260 = vmatpush2.msra.mxu0 0.0
    %1261 = vmatprep.subr.mxu0 0.0
    %1262 = vmatpush2.msra.mxu0 0.0
    %1263 = vmatprep.subr.mxu0 0.0
    %1264 = vmatpush2.msra.mxu0 0.0
    %1265 = vmatprep.subr.mxu0 0.0
    %1266 = vmatpush2.msra.mxu0 0.0
    %1267 = vmatprep.subr.mxu0 0.0
    %1268 = vmatpush2.msra.mxu0 0.0
    %1269 = vmatprep.subr.mxu0 0.0
    %1270 = vmatpush2.msra.mxu0 0.0
    %1271 = vmatprep.mubr.f32.mxu0 0.0
    %1272 = vmatmul.mubr.f32.gmra.mxu0 %v1184
    %v1273 = vpop.f32.mrf.mxu0
    %v1274 = vadd.f32 %v1181, %v1273
    %v1275 = vpop.f32.mrf.mxu0
    %1276 = vmatprep.mubr.f32.mxu0 0.0
    %1277 = vmatmul.mubr.f32.gmra.mxu0 %v1187
    %v1278 = vpop.f32.mrf.mxu0
    %v1279 = vadd.f32 %v1181, %v1278
    %v1280 = vpop.f32.mrf.mxu0
    %1281 = vmatprep.mubr.f32.mxu0 0.0
    %1282 = vmatmul.mubr.f32.gmra.mxu0 %v1190
    %v1283 = vpop.f32.mrf.mxu0
    %v1284 = vadd.f32 %v1181, %v1283
    %v1285 = vpop.f32.mrf.mxu0
    %1286 = vmatprep.mubr.f32.mxu0 0.0
    %1287 = vmatmul.mubr.f32.gmra.mxu0 %v1193
    %v1288 = vpop.f32.mrf.mxu0
    %v1289 = vadd.f32 %v1181, %v1288
    %v1290 = vpop.f32.mrf.mxu0
    %1291 = vmatprep.mubr.f32.mxu0 0.0
    %1292 = vmatmul.mubr.f32.gmra.mxu0 %v1196
    %v1293 = vpop.f32.mrf.mxu0
    %v1294 = vadd.f32 %v1181, %v1293
    %v1295 = vpop.f32.mrf.mxu0
    %1296 = vmatprep.mubr.f32.mxu0 0.0
    %1297 = vmatmul.mubr.f32.gmra.mxu0 %v1199
    %v1298 = vpop.f32.mrf.mxu0
    %v1299 = vadd.f32 %v1181, %v1298
    %v1300 = vpop.f32.mrf.mxu0
    %1301 = vmatprep.mubr.f32.mxu0 0.0
    %1302 = vmatmul.mubr.f32.gmra.mxu0 %v1202
    %v1303 = vpop.f32.mrf.mxu0
    %v1304 = vadd.f32 %v1181, %v1303
    %v1305 = vpop.f32.mrf.mxu0
    %1306 = vmatprep.mubr.f32.mxu0 0.0
    %1307 = vmatmul.mubr.f32.gmra.mxu0 %v1205
    %v1308 = vpop.f32.mrf.mxu0
    %v1309 = vadd.f32 %v1181, %v1308
    %v1310 = vpop.f32.mrf.mxu0
    %1311 = vdwg.mxu0
    %1312 = vst [vmem:[#allocation3] sm:$0xff] %v1274
    %1313 = vst [vmem:[#allocation3 + $0x8] sm:$0xff] %v1279
    %1314 = vst [vmem:[#allocation3 + $0x10] sm:$0xff] %v1284
    %1315 = vst [vmem:[#allocation3 + $0x18] sm:$0xff] %v1289
    %1316 = vst [vmem:[#allocation3 + $0x20] sm:$0xff] %v1294
    %1317 = vst [vmem:[#allocation3 + $0x28] sm:$0xff] %v1299
    %1318 = vst [vmem:[#allocation3 + $0x30] sm:$0xff] %v1304
    %1319 = vst [vmem:[#allocation3 + $0x38] sm:$0xff] %v1309
    %v1320 = vld [vmem:[#allocation3] sm:$0xff]
    %1321 = vmatprep.subr.mxu0 0.0
    %1322 = vmatpush1.msra.mxu0 0.0
    %1323 = vmatprep.subr.mxu0 0.0
    %1324 = vmatpush1.msra.mxu0 0.0
    %1325 = vmatprep.subr.mxu0 0.0
    %1326 = vmatpush1.msra.mxu0 0.0
    %1327 = vmatprep.subr.mxu0 0.0
    %1328 = vmatpush1.msra.mxu0 0.0
    %1329 = vmatprep.subr.mxu0 0.0
    %1330 = vmatpush1.msra.mxu0 0.0
    %1331 = vmatprep.subr.mxu0 0.0
    %1332 = vmatpush1.msra.mxu0 0.0
    %1333 = vmatprep.subr.mxu0 0.0
    %1334 = vmatpush1.msra.mxu0 0.0
    %1335 = vmatprep.subr.mxu0 0.0
    %1336 = vmatpush1.msra.mxu0 0.0
    %1337 = vmatprep.subr.mxu0 0.0
    %1338 = vmatpush1.msra.mxu0 0.0
    %1339 = vmatprep.subr.mxu0 0.0
    %1340 = vmatpush1.msra.mxu0 0.0
    %1341 = vmatprep.subr.mxu0 0.0
    %1342 = vmatpush1.msra.mxu0 0.0
    %1343 = vmatprep.subr.mxu0 0.0
    %1344 = vmatpush1.msra.mxu0 0.0
    %1345 = vmatprep.subr.mxu0 0.0
    %1346 = vmatpush1.msra.mxu0 %v1167
    %1347 = vmatprep.subr.mxu0 0.0
    %1348 = vmatpush1.msra.mxu0 %v1166
    %1349 = vmatprep.subr.mxu0 0.0
    %1350 = vmatpush1.msra.mxu0 %v1165
    %1351 = vmatprep.subr.mxu0 0.0
    %1352 = vmatpush1.msra.mxu0 %v1164
    %1353 = vmatprep.subr.mxu0 0.0
    %1354 = vmatpush2.msra.mxu0 0.0
    %1355 = vmatprep.subr.mxu0 0.0
    %1356 = vmatpush2.msra.mxu0 0.0
    %1357 = vmatprep.subr.mxu0 0.0
    %1358 = vmatpush2.msra.mxu0 0.0
    %1359 = vmatprep.subr.mxu0 0.0
    %1360 = vmatpush2.msra.mxu0 0.0
    %1361 = vmatprep.subr.mxu0 0.0
    %1362 = vmatpush2.msra.mxu0 0.0
    %1363 = vmatprep.subr.mxu0 0.0
    %1364 = vmatpush2.msra.mxu0 0.0
    %1365 = vmatprep.subr.mxu0 0.0
    %1366 = vmatpush2.msra.mxu0 0.0
    %1367 = vmatprep.subr.mxu0 0.0
    %1368 = vmatpush2.msra.mxu0 0.0
    %1369 = vmatprep.subr.mxu0 0.0
    %1370 = vmatpush2.msra.mxu0 0.0
    %1371 = vmatprep.subr.mxu0 0.0
    %1372 = vmatpush2.msra.mxu0 0.0
    %1373 = vmatprep.subr.mxu0 0.0
    %1374 = vmatpush2.msra.mxu0 0.0
    %1375 = vmatprep.subr.mxu0 0.0
    %1376 = vmatpush2.msra.mxu0 0.0
    %1377 = vmatprep.subr.mxu0 0.0
    %1378 = vmatpush2.msra.mxu0 0.0
    %1379 = vmatprep.subr.mxu0 0.0
    %1380 = vmatpush2.msra.mxu0 0.0
    %1381 = vmatprep.subr.mxu0 0.0
    %1382 = vmatpush2.msra.mxu0 0.0
    %1383 = vmatprep.subr.mxu0 0.0
    %1384 = vmatpush2.msra.mxu0 0.0
    %1385 = vmatprep.mubr.f32.mxu0 0.0
    %1386 = vmatmul.mubr.f32.gmra.mxu0 %v320
    %v1387 = vpop.f32.mrf.mxu0
    %v1388 = vadd.f32 0.0, %v1387
    %v1389 = vpop.f32.mrf.mxu0
    %1390 = vdwg.mxu0
    %v1391 = vadd.f32 %v1320, %v1388
    %v1392 = vxor.u32 %v1391, 2147483648
    %v1393 = vmul.f32 %v1392, 1.442695
    %v1394 = vpow.pop %v1393
    %v1395 = vadd.f32 %v1394, 1.0
    %v1396 = vrcp.pop %v1395
    %v1397 = vmul.f32 1.0, %v1396
    %v1398 = vtanh.pop %v1391
    %v1399 = vmul.f32 %v1397, %v401
    %1401 = vrot.lane.b32.xlu0 %v1398, 64
    %v1402 = vpop.permute.xlu0 %1401
    %v1404 = vmul.f32 %v1397, %v1402
    %1406 = vrot.lane.b32.xlu0 %v1404, 32
    %v1407 = vpop.permute.xlu0 %1406
    %v1409 = vadd.f32 %v1399, %v1407
    %v1410 = vtanh.pop %v1409
    %1412 = vrot.lane.b32.xlu0 %v1410, 64
    %v1413 = vpop.permute.xlu0 %1412
    %v1415 = vmul.f32 %v1397, %v1413
    %1417 = vrot.lane.b32.xlu0 %v1415, 32
    %v1418 = vpop.permute.xlu0 %1417
    %1420 = vst.msk [vmem:[#allocation2] sm:$0xff] %vm318, %v1418
    %v1421 = vld [vmem:[%s425] sm:$0xff]
    %v1422 = vsel %vm318, %v1418, 0
    %1424 = vmatprep.subr.mxu0 0.0
    %1425 = vmatpush1.msra.mxu0 0.0
    %1426 = vmatprep.subr.mxu0 0.0
    %1427 = vmatpush1.msra.mxu0 0.0
    %1428 = vmatprep.subr.mxu0 0.0
    %1429 = vmatpush1.msra.mxu0 0.0
    %1430 = vmatprep.subr.mxu0 0.0
    %1431 = vmatpush1.msra.mxu0 0.0
    %1432 = vmatprep.subr.mxu0 0.0
    %1433 = vmatpush1.msra.mxu0 0.0
    %1434 = vmatprep.subr.mxu0 0.0
    %1435 = vmatpush1.msra.mxu0 0.0
    %1436 = vmatprep.subr.mxu0 0.0
    %1437 = vmatpush1.msra.mxu0 0.0
    %1438 = vmatprep.subr.mxu0 0.0
    %1439 = vmatpush1.msra.mxu0 0.0
    %1440 = vmatprep.subr.mxu0 0.0
    %1441 = vmatpush1.msra.mxu0 0.0
    %1442 = vmatprep.subr.mxu0 0.0
    %1443 = vmatpush1.msra.mxu0 0.0
    %1444 = vmatprep.subr.mxu0 0.0
    %1445 = vmatpush1.msra.mxu0 0.0
    %1446 = vmatprep.subr.mxu0 0.0
    %1447 = vmatpush1.msra.mxu0 0.0
    %1448 = vmatprep.subr.mxu0 0.0
    %1449 = vmatpush1.msra.mxu0 %v1167
    %1450 = vmatprep.subr.mxu0 0.0
    %1451 = vmatpush1.msra.mxu0 %v1166
    %1452 = vmatprep.subr.mxu0 0.0
    %1453 = vmatpush1.msra.mxu0 %v1165
    %1454 = vmatprep.subr.mxu0 0.0
    %1455 = vmatpush1.msra.mxu0 %v1164
    %1456 = vmatprep.subr.mxu0 0.0
    %1457 = vmatpush2.msra.mxu0 0.0
    %1458 = vmatprep.subr.mxu0 0.0
    %1459 = vmatpush2.msra.mxu0 0.0
    %1460 = vmatprep.subr.mxu0 0.0
    %1461 = vmatpush2.msra.mxu0 0.0
    %1462 = vmatprep.subr.mxu0 0.0
    %1463 = vmatpush2.msra.mxu0 0.0
    %1464 = vmatprep.subr.mxu0 0.0
    %1465 = vmatpush2.msra.mxu0 0.0
    %1466 = vmatprep.subr.mxu0 0.0
    %1467 = vmatpush2.msra.mxu0 0.0
    %1468 = vmatprep.subr.mxu0 0.0
    %1469 = vmatpush2.msra.mxu0 0.0
    %1470 = vmatprep.subr.mxu0 0.0
    %1471 = vmatpush2.msra.mxu0 0.0
    %1472 = vmatprep.subr.mxu0 0.0
    %1473 = vmatpush2.msra.mxu0 0.0
    %1474 = vmatprep.subr.mxu0 0.0
    %1475 = vmatpush2.msra.mxu0 0.0
    %1476 = vmatprep.subr.mxu0 0.0
    %1477 = vmatpush2.msra.mxu0 0.0
    %1478 = vmatprep.subr.mxu0 0.0
    %1479 = vmatpush2.msra.mxu0 0.0
    %1480 = vmatprep.subr.mxu0 0.0
    %1481 = vmatpush2.msra.mxu0 0.0
    %1482 = vmatprep.subr.mxu0 0.0
    %1483 = vmatpush2.msra.mxu0 0.0
    %1484 = vmatprep.subr.mxu0 0.0
    %1485 = vmatpush2.msra.mxu0 0.0
    %1486 = vmatprep.subr.mxu0 0.0
    %1487 = vmatpush2.msra.mxu0 0.0
    %1488 = vmatprep.mubr.f32.mxu0 0.0
    %1489 = vmatmul.mubr.f32.gmra.mxu0 %v1422
    %v1490 = vpop.f32.mrf.mxu0
    %v1491 = vadd.f32 0.0, %v1490
    %v1492 = vpop.f32.mrf.mxu0
    %1493 = vdwg.mxu0
    %v1494 = vadd.f32 %v1421, %v1491
    %v1495 = vxor.u32 %v1494, 2147483648
    %v1496 = vmul.f32 %v1495, 1.442695
    %v1497 = vpow.pop %v1496
    %v1498 = vadd.f32 %v1497, 1.0
    %v1499 = vrcp.pop %v1498
    %v1500 = vmul.f32 1.0, %v1499
    %v1501 = vtanh.pop %v1494
    %v1502 = vmul.f32 %v1500, %v1409
    %1504 = vrot.lane.b32.xlu0 %v1501, 64
    %v1505 = vpop.permute.xlu0 %1504
    %v1507 = vmul.f32 %v1500, %v1505
    %1509 = vrot.lane.b32.xlu0 %v1507, 32
    %v1510 = vpop.permute.xlu0 %1509
    %v1512 = vadd.f32 %v1502, %v1510
    %v1513 = vtanh.pop %v1512
    %1515 = vrot.lane.b32.xlu0 %v1513, 64
    %v1516 = vpop.permute.xlu0 %1515
    %v1518 = vmul.f32 %v1500, %v1516
    %1520 = vrot.lane.b32.xlu0 %v1518, 32
    %v1521 = vpop.permute.xlu0 %1520
    %1523 = vst.msk [vmem:[%s528] sm:$0xff] %vm318, %v1521
    %v1524 = vld [vmem:[%s530] sm:$0xff]
    %v1525 = vsel %vm318, %v1521, 0
    %1527 = vmatprep.subr.mxu0 0.0
    %1528 = vmatpush1.msra.mxu0 0.0
    %1529 = vmatprep.subr.mxu0 0.0
    %1530 = vmatpush1.msra.mxu0 0.0
    %1531 = vmatprep.subr.mxu0 0.0
    %1532 = vmatpush1.msra.mxu0 0.0
    %1533 = vmatprep.subr.mxu0 0.0
    %1534 = vmatpush1.msra.mxu0 0.0
    %1535 = vmatprep.subr.mxu0 0.0
    %1536 = vmatpush1.msra.mxu0 0.0
    %1537 = vmatprep.subr.mxu0 0.0
    %1538 = vmatpush1.msra.mxu0 0.0
    %1539 = vmatprep.subr.mxu0 0.0
    %1540 = vmatpush1.msra.mxu0 0.0
    %1541 = vmatprep.subr.mxu0 0.0
    %1542 = vmatpush1.msra.mxu0 0.0
    %1543 = vmatprep.subr.mxu0 0.0
    %1544 = vmatpush1.msra.mxu0 0.0
    %1545 = vmatprep.subr.mxu0 0.0
    %1546 = vmatpush1.msra.mxu0 0.0
    %1547 = vmatprep.subr.mxu0 0.0
    %1548 = vmatpush1.msra.mxu0 0.0
    %1549 = vmatprep.subr.mxu0 0.0
    %1550 = vmatpush1.msra.mxu0 0.0
    %1551 = vmatprep.subr.mxu0 0.0
    %1552 = vmatpush1.msra.mxu0 %v1167
    %1553 = vmatprep.subr.mxu0 0.0
    %1554 = vmatpush1.msra.mxu0 %v1166
    %1555 = vmatprep.subr.mxu0 0.0
    %1556 = vmatpush1.msra.mxu0 %v1165
    %1557 = vmatprep.subr.mxu0 0.0
    %1558 = vmatpush1.msra.mxu0 %v1164
    %1559 = vmatprep.subr.mxu0 0.0
    %1560 = vmatpush2.msra.mxu0 0.0
    %1561 = vmatprep.subr.mxu0 0.0
    %1562 = vmatpush2.msra.mxu0 0.0
    %1563 = vmatprep.subr.mxu0 0.0
    %1564 = vmatpush2.msra.mxu0 0.0
    %1565 = vmatprep.subr.mxu0 0.0
    %1566 = vmatpush2.msra.mxu0 0.0
    %1567 = vmatprep.subr.mxu0 0.0
    %1568 = vmatpush2.msra.mxu0 0.0
    %1569 = vmatprep.subr.mxu0 0.0
    %1570 = vmatpush2.msra.mxu0 0.0
    %1571 = vmatprep.subr.mxu0 0.0
    %1572 = vmatpush2.msra.mxu0 0.0
    %1573 = vmatprep.subr.mxu0 0.0
    %1574 = vmatpush2.msra.mxu0 0.0
    %1575 = vmatprep.subr.mxu0 0.0
    %1576 = vmatpush2.msra.mxu0 0.0
    %1577 = vmatprep.subr.mxu0 0.0
    %1578 = vmatpush2.msra.mxu0 0.0
    %1579 = vmatprep.subr.mxu0 0.0
    %1580 = vmatpush2.msra.mxu0 0.0
    %1581 = vmatprep.subr.mxu0 0.0
    %1582 = vmatpush2.msra.mxu0 0.0
    %1583 = vmatprep.subr.mxu0 0.0
    %1584 = vmatpush2.msra.mxu0 0.0
    %1585 = vmatprep.subr.mxu0 0.0
    %1586 = vmatpush2.msra.mxu0 0.0
    %1587 = vmatprep.subr.mxu0 0.0
    %1588 = vmatpush2.msra.mxu0 0.0
    %1589 = vmatprep.subr.mxu0 0.0
    %1590 = vmatpush2.msra.mxu0 0.0
    %1591 = vmatprep.mubr.f32.mxu0 0.0
    %1592 = vmatmul.mubr.f32.gmra.mxu0 %v1525
    %v1593 = vpop.f32.mrf.mxu0
    %v1594 = vadd.f32 0.0, %v1593
    %v1595 = vpop.f32.mrf.mxu0
    %1596 = vdwg.mxu0
    %v1597 = vadd.f32 %v1524, %v1594
    %v1598 = vxor.u32 %v1597, 2147483648
    %v1599 = vmul.f32 %v1598, 1.442695
    %v1600 = vpow.pop %v1599
    %v1601 = vadd.f32 %v1600, 1.0
    %v1602 = vrcp.pop %v1601
    %v1603 = vmul.f32 1.0, %v1602
    %v1604 = vtanh.pop %v1597
    %v1605 = vmul.f32 %v1603, %v1512
    %1607 = vrot.lane.b32.xlu0 %v1604, 64
    %v1608 = vpop.permute.xlu0 %1607
    %v1610 = vmul.f32 %v1603, %v1608
    %1612 = vrot.lane.b32.xlu0 %v1610, 32
    %v1613 = vpop.permute.xlu0 %1612
    %v1615 = vadd.f32 %v1605, %v1613
    %v1616 = vtanh.pop %v1615
    %1618 = vrot.lane.b32.xlu0 %v1616, 64
    %v1619 = vpop.permute.xlu0 %1618
    %v1621 = vmul.f32 %v1603, %v1619
    %1623 = vrot.lane.b32.xlu0 %v1621, 32
    %v1624 = vpop.permute.xlu0 %1623
    %1626 = vst.msk [vmem:[%s633] sm:$0xff] %vm318, %v1624
    %v1627 = vld [vmem:[%s635] sm:$0xff]
    %v1628 = vsel %vm318, %v1624, 0
    %1630 = vmatprep.subr.mxu0 0.0
    %1631 = vmatpush1.msra.mxu0 0.0
    %1632 = vmatprep.subr.mxu0 0.0
    %1633 = vmatpush1.msra.mxu0 0.0
    %1634 = vmatprep.subr.mxu0 0.0
    %1635 = vmatpush1.msra.mxu0 0.0
    %1636 = vmatprep.subr.mxu0 0.0
    %1637 = vmatpush1.msra.mxu0 0.0
    %1638 = vmatprep.subr.mxu0 0.0
    %1639 = vmatpush1.msra.mxu0 0.0
    %1640 = vmatprep.subr.mxu0 0.0
    %1641 = vmatpush1.msra.mxu0 0.0
    %1642 = vmatprep.subr.mxu0 0.0
    %1643 = vmatpush1.msra.mxu0 0.0
    %1644 = vmatprep.subr.mxu0 0.0
    %1645 = vmatpush1.msra.mxu0 0.0
    %1646 = vmatprep.subr.mxu0 0.0
    %1647 = vmatpush1.msra.mxu0 0.0
    %1648 = vmatprep.subr.mxu0 0.0
    %1649 = vmatpush1.msra.mxu0 0.0
    %1650 = vmatprep.subr.mxu0 0.0
    %1651 = vmatpush1.msra.mxu0 0.0
    %1652 = vmatprep.subr.mxu0 0.0
    %1653 = vmatpush1.msra.mxu0 0.0
    %1654 = vmatprep.subr.mxu0 0.0
    %1655 = vmatpush1.msra.mxu0 %v1167
    %1656 = vmatprep.subr.mxu0 0.0
    %1657 = vmatpush1.msra.mxu0 %v1166
    %1658 = vmatprep.subr.mxu0 0.0
    %1659 = vmatpush1.msra.mxu0 %v1165
    %1660 = vmatprep.subr.mxu0 0.0
    %1661 = vmatpush1.msra.mxu0 %v1164
    %1662 = vmatprep.subr.mxu0 0.0
    %1663 = vmatpush2.msra.mxu0 0.0
    %1664 = vmatprep.subr.mxu0 0.0
    %1665 = vmatpush2.msra.mxu0 0.0
    %1666 = vmatprep.subr.mxu0 0.0
    %1667 = vmatpush2.msra.mxu0 0.0
    %1668 = vmatprep.subr.mxu0 0.0
    %1669 = vmatpush2.msra.mxu0 0.0
    %1670 = vmatprep.subr.mxu0 0.0
    %1671 = vmatpush2.msra.mxu0 0.0
    %1672 = vmatprep.subr.mxu0 0.0
    %1673 = vmatpush2.msra.mxu0 0.0
    %1674 = vmatprep.subr.mxu0 0.0
    %1675 = vmatpush2.msra.mxu0 0.0
    %1676 = vmatprep.subr.mxu0 0.0
    %1677 = vmatpush2.msra.mxu0 0.0
    %1678 = vmatprep.subr.mxu0 0.0
    %1679 = vmatpush2.msra.mxu0 0.0
    %1680 = vmatprep.subr.mxu0 0.0
    %1681 = vmatpush2.msra.mxu0 0.0
    %1682 = vmatprep.subr.mxu0 0.0
    %1683 = vmatpush2.msra.mxu0 0.0
    %1684 = vmatprep.subr.mxu0 0.0
    %1685 = vmatpush2.msra.mxu0 0.0
    %1686 = vmatprep.subr.mxu0 0.0
    %1687 = vmatpush2.msra.mxu0 0.0
    %1688 = vmatprep.subr.mxu0 0.0
    %1689 = vmatpush2.msra.mxu0 0.0
    %1690 = vmatprep.subr.mxu0 0.0
    %1691 = vmatpush2.msra.mxu0 0.0
    %1692 = vmatprep.subr.mxu0 0.0
    %1693 = vmatpush2.msra.mxu0 0.0
    %1694 = vmatprep.mubr.f32.mxu0 0.0
    %1695 = vmatmul.mubr.f32.gmra.mxu0 %v1628
    %v1696 = vpop.f32.mrf.mxu0
    %v1697 = vadd.f32 0.0, %v1696
    %v1698 = vpop.f32.mrf.mxu0
    %1699 = vdwg.mxu0
    %v1700 = vadd.f32 %v1627, %v1697
    %v1701 = vxor.u32 %v1700, 2147483648
    %v1702 = vmul.f32 %v1701, 1.442695
    %v1703 = vpow.pop %v1702
    %v1704 = vadd.f32 %v1703, 1.0
    %v1705 = vrcp.pop %v1704
    %v1706 = vmul.f32 1.0, %v1705
    %v1707 = vtanh.pop %v1700
    %v1708 = vmul.f32 %v1706, %v1615
    %1710 = vrot.lane.b32.xlu0 %v1707, 64
    %v1711 = vpop.permute.xlu0 %1710
    %v1713 = vmul.f32 %v1706, %v1711
    %1715 = vrot.lane.b32.xlu0 %v1713, 32
    %v1716 = vpop.permute.xlu0 %1715
    %v1718 = vadd.f32 %v1708, %v1716
    %v1719 = vtanh.pop %v1718
    %1721 = vrot.lane.b32.xlu0 %v1719, 64
    %v1722 = vpop.permute.xlu0 %1721
    %v1724 = vmul.f32 %v1706, %v1722
    %1726 = vrot.lane.b32.xlu0 %v1724, 32
    %v1727 = vpop.permute.xlu0 %1726
    %1729 = vst.msk [vmem:[%s738] sm:$0xff] %vm318, %v1727
    %v1730 = vld [vmem:[%s740] sm:$0xff]
    %v1731 = vsel %vm318, %v1727, 0
    %1733 = vmatprep.subr.mxu0 0.0
    %1734 = vmatpush1.msra.mxu0 0.0
    %1735 = vmatprep.subr.mxu0 0.0
    %1736 = vmatpush1.msra.mxu0 0.0
    %1737 = vmatprep.subr.mxu0 0.0
    %1738 = vmatpush1.msra.mxu0 0.0
    %1739 = vmatprep.subr.mxu0 0.0
    %1740 = vmatpush1.msra.mxu0 0.0
    %1741 = vmatprep.subr.mxu0 0.0
    %1742 = vmatpush1.msra.mxu0 0.0
    %1743 = vmatprep.subr.mxu0 0.0
    %1744 = vmatpush1.msra.mxu0 0.0
    %1745 = vmatprep.subr.mxu0 0.0
    %1746 = vmatpush1.msra.mxu0 0.0
    %1747 = vmatprep.subr.mxu0 0.0
    %1748 = vmatpush1.msra.mxu0 0.0
    %1749 = vmatprep.subr.mxu0 0.0
    %1750 = vmatpush1.msra.mxu0 0.0
    %1751 = vmatprep.subr.mxu0 0.0
    %1752 = vmatpush1.msra.mxu0 0.0
    %1753 = vmatprep.subr.mxu0 0.0
    %1754 = vmatpush1.msra.mxu0 0.0
    %1755 = vmatprep.subr.mxu0 0.0
    %1756 = vmatpush1.msra.mxu0 0.0
    %1757 = vmatprep.subr.mxu0 0.0
    %1758 = vmatpush1.msra.mxu0 %v1167
    %1759 = vmatprep.subr.mxu0 0.0
    %1760 = vmatpush1.msra.mxu0 %v1166
    %1761 = vmatprep.subr.mxu0 0.0
    %1762 = vmatpush1.msra.mxu0 %v1165
    %1763 = vmatprep.subr.mxu0 0.0
    %1764 = vmatpush1.msra.mxu0 %v1164
    %1765 = vmatprep.subr.mxu0 0.0
    %1766 = vmatpush2.msra.mxu0 0.0
    %1767 = vmatprep.subr.mxu0 0.0
    %1768 = vmatpush2.msra.mxu0 0.0
    %1769 = vmatprep.subr.mxu0 0.0
    %1770 = vmatpush2.msra.mxu0 0.0
    %1771 = vmatprep.subr.mxu0 0.0
    %1772 = vmatpush2.msra.mxu0 0.0
    %1773 = vmatprep.subr.mxu0 0.0
    %1774 = vmatpush2.msra.mxu0 0.0
    %1775 = vmatprep.subr.mxu0 0.0
    %1776 = vmatpush2.msra.mxu0 0.0
    %1777 = vmatprep.subr.mxu0 0.0
    %1778 = vmatpush2.msra.mxu0 0.0
    %1779 = vmatprep.subr.mxu0 0.0
    %1780 = vmatpush2.msra.mxu0 0.0
    %1781 = vmatprep.subr.mxu0 0.0
    %1782 = vmatpush2.msra.mxu0 0.0
    %1783 = vmatprep.subr.mxu0 0.0
    %1784 = vmatpush2.msra.mxu0 0.0
    %1785 = vmatprep.subr.mxu0 0.0
    %1786 = vmatpush2.msra.mxu0 0.0
    %1787 = vmatprep.subr.mxu0 0.0
    %1788 = vmatpush2.msra.mxu0 0.0
    %1789 = vmatprep.subr.mxu0 0.0
    %1790 = vmatpush2.msra.mxu0 0.0
    %1791 = vmatprep.subr.mxu0 0.0
    %1792 = vmatpush2.msra.mxu0 0.0
    %1793 = vmatprep.subr.mxu0 0.0
    %1794 = vmatpush2.msra.mxu0 0.0
    %1795 = vmatprep.subr.mxu0 0.0
    %1796 = vmatpush2.msra.mxu0 0.0
    %1797 = vmatprep.mubr.f32.mxu0 0.0
    %1798 = vmatmul.mubr.f32.gmra.mxu0 %v1731
    %v1799 = vpop.f32.mrf.mxu0
    %v1800 = vadd.f32 0.0, %v1799
    %v1801 = vpop.f32.mrf.mxu0
    %1802 = vdwg.mxu0
    %v1803 = vadd.f32 %v1730, %v1800
    %v1804 = vxor.u32 %v1803, 2147483648
    %v1805 = vmul.f32 %v1804, 1.442695
    %v1806 = vpow.pop %v1805
    %v1807 = vadd.f32 %v1806, 1.0
    %v1808 = vrcp.pop %v1807
    %v1809 = vmul.f32 1.0, %v1808
    %v1810 = vtanh.pop %v1803
    %v1811 = vmul.f32 %v1809, %v1718
    %1813 = vrot.lane.b32.xlu0 %v1810, 64
    %v1814 = vpop.permute.xlu0 %1813
    %v1816 = vmul.f32 %v1809, %v1814
    %1818 = vrot.lane.b32.xlu0 %v1816, 32
    %v1819 = vpop.permute.xlu0 %1818
    %v1821 = vadd.f32 %v1811, %v1819
    %v1822 = vtanh.pop %v1821
    %1824 = vrot.lane.b32.xlu0 %v1822, 64
    %v1825 = vpop.permute.xlu0 %1824
    %v1827 = vmul.f32 %v1809, %v1825
    %1829 = vrot.lane.b32.xlu0 %v1827, 32
    %v1830 = vpop.permute.xlu0 %1829
    %1832 = vst.msk [vmem:[%s843] sm:$0xff] %vm318, %v1830
    %v1833 = vld [vmem:[%s845] sm:$0xff]
    %v1834 = vsel %vm318, %v1830, 0
    %1836 = vmatprep.subr.mxu0 0.0
    %1837 = vmatpush1.msra.mxu0 0.0
    %1838 = vmatprep.subr.mxu0 0.0
    %1839 = vmatpush1.msra.mxu0 0.0
    %1840 = vmatprep.subr.mxu0 0.0
    %1841 = vmatpush1.msra.mxu0 0.0
    %1842 = vmatprep.subr.mxu0 0.0
    %1843 = vmatpush1.msra.mxu0 0.0
    %1844 = vmatprep.subr.mxu0 0.0
    %1845 = vmatpush1.msra.mxu0 0.0
    %1846 = vmatprep.subr.mxu0 0.0
    %1847 = vmatpush1.msra.mxu0 0.0
    %1848 = vmatprep.subr.mxu0 0.0
    %1849 = vmatpush1.msra.mxu0 0.0
    %1850 = vmatprep.subr.mxu0 0.0
    %1851 = vmatpush1.msra.mxu0 0.0
    %1852 = vmatprep.subr.mxu0 0.0
    %1853 = vmatpush1.msra.mxu0 0.0
    %1854 = vmatprep.subr.mxu0 0.0
    %1855 = vmatpush1.msra.mxu0 0.0
    %1856 = vmatprep.subr.mxu0 0.0
    %1857 = vmatpush1.msra.mxu0 0.0
    %1858 = vmatprep.subr.mxu0 0.0
    %1859 = vmatpush1.msra.mxu0 0.0
    %1860 = vmatprep.subr.mxu0 0.0
    %1861 = vmatpush1.msra.mxu0 %v1167
    %1862 = vmatprep.subr.mxu0 0.0
    %1863 = vmatpush1.msra.mxu0 %v1166
    %1864 = vmatprep.subr.mxu0 0.0
    %1865 = vmatpush1.msra.mxu0 %v1165
    %1866 = vmatprep.subr.mxu0 0.0
    %1867 = vmatpush1.msra.mxu0 %v1164
    %1868 = vmatprep.subr.mxu0 0.0
    %1869 = vmatpush2.msra.mxu0 0.0
    %1870 = vmatprep.subr.mxu0 0.0
    %1871 = vmatpush2.msra.mxu0 0.0
    %1872 = vmatprep.subr.mxu0 0.0
    %1873 = vmatpush2.msra.mxu0 0.0
    %1874 = vmatprep.subr.mxu0 0.0
    %1875 = vmatpush2.msra.mxu0 0.0
    %1876 = vmatprep.subr.mxu0 0.0
    %1877 = vmatpush2.msra.mxu0 0.0
    %1878 = vmatprep.subr.mxu0 0.0
    %1879 = vmatpush2.msra.mxu0 0.0
    %1880 = vmatprep.subr.mxu0 0.0
    %1881 = vmatpush2.msra.mxu0 0.0
    %1882 = vmatprep.subr.mxu0 0.0
    %1883 = vmatpush2.msra.mxu0 0.0
    %1884 = vmatprep.subr.mxu0 0.0
    %1885 = vmatpush2.msra.mxu0 0.0
    %1886 = vmatprep.subr.mxu0 0.0
    %1887 = vmatpush2.msra.mxu0 0.0
    %1888 = vmatprep.subr.mxu0 0.0
    %1889 = vmatpush2.msra.mxu0 0.0
    %1890 = vmatprep.subr.mxu0 0.0
    %1891 = vmatpush2.msra.mxu0 0.0
    %1892 = vmatprep.subr.mxu0 0.0
    %1893 = vmatpush2.msra.mxu0 0.0
    %1894 = vmatprep.subr.mxu0 0.0
    %1895 = vmatpush2.msra.mxu0 0.0
    %1896 = vmatprep.subr.mxu0 0.0
    %1897 = vmatpush2.msra.mxu0 0.0
    %1898 = vmatprep.subr.mxu0 0.0
    %1899 = vmatpush2.msra.mxu0 0.0
    %1900 = vmatprep.mubr.f32.mxu0 0.0
    %1901 = vmatmul.mubr.f32.gmra.mxu0 %v1834
    %v1902 = vpop.f32.mrf.mxu0
    %v1903 = vadd.f32 0.0, %v1902
    %v1904 = vpop.f32.mrf.mxu0
    %1905 = vdwg.mxu0
    %v1906 = vadd.f32 %v1833, %v1903
    %v1907 = vxor.u32 %v1906, 2147483648
    %v1908 = vmul.f32 %v1907, 1.442695
    %v1909 = vpow.pop %v1908
    %v1910 = vadd.f32 %v1909, 1.0
    %v1911 = vrcp.pop %v1910
    %v1912 = vmul.f32 1.0, %v1911
    %v1913 = vtanh.pop %v1906
    %v1914 = vmul.f32 %v1912, %v1821
    %1916 = vrot.lane.b32.xlu0 %v1913, 64
    %v1917 = vpop.permute.xlu0 %1916
    %v1919 = vmul.f32 %v1912, %v1917
    %1921 = vrot.lane.b32.xlu0 %v1919, 32
    %v1922 = vpop.permute.xlu0 %1921
    %v1924 = vadd.f32 %v1914, %v1922
    %v1925 = vtanh.pop %v1924
    %1927 = vrot.lane.b32.xlu0 %v1925, 64
    %v1928 = vpop.permute.xlu0 %1927
    %v1930 = vmul.f32 %v1912, %v1928
    %1932 = vrot.lane.b32.xlu0 %v1930, 32
    %v1933 = vpop.permute.xlu0 %1932
    %1935 = vst.msk [vmem:[%s948] sm:$0xff] %vm318, %v1933
    %v1936 = vld [vmem:[%s950] sm:$0xff]
    %v1937 = vsel %vm318, %v1933, 0
    %1939 = vmatprep.subr.mxu0 0.0
    %1940 = vmatpush1.msra.mxu0 0.0
    %1941 = vmatprep.subr.mxu0 0.0
    %1942 = vmatpush1.msra.mxu0 0.0
    %1943 = vmatprep.subr.mxu0 0.0
    %1944 = vmatpush1.msra.mxu0 0.0
    %1945 = vmatprep.subr.mxu0 0.0
    %1946 = vmatpush1.msra.mxu0 0.0
    %1947 = vmatprep.subr.mxu0 0.0
    %1948 = vmatpush1.msra.mxu0 0.0
    %1949 = vmatprep.subr.mxu0 0.0
    %1950 = vmatpush1.msra.mxu0 0.0
    %1951 = vmatprep.subr.mxu0 0.0
    %1952 = vmatpush1.msra.mxu0 0.0
    %1953 = vmatprep.subr.mxu0 0.0
    %1954 = vmatpush1.msra.mxu0 0.0
    %1955 = vmatprep.subr.mxu0 0.0
    %1956 = vmatpush1.msra.mxu0 0.0
    %1957 = vmatprep.subr.mxu0 0.0
    %1958 = vmatpush1.msra.mxu0 0.0
    %1959 = vmatprep.subr.mxu0 0.0
    %1960 = vmatpush1.msra.mxu0 0.0
    %1961 = vmatprep.subr.mxu0 0.0
    %1962 = vmatpush1.msra.mxu0 0.0
    %1963 = vmatprep.subr.mxu0 0.0
    %1964 = vmatpush1.msra.mxu0 %v1167
    %1965 = vmatprep.subr.mxu0 0.0
    %1966 = vmatpush1.msra.mxu0 %v1166
    %1967 = vmatprep.subr.mxu0 0.0
    %1968 = vmatpush1.msra.mxu0 %v1165
    %1969 = vmatprep.subr.mxu0 0.0
    %1970 = vmatpush1.msra.mxu0 %v1164
    %1971 = vmatprep.subr.mxu0 0.0
    %1972 = vmatpush2.msra.mxu0 0.0
    %1973 = vmatprep.subr.mxu0 0.0
    %1974 = vmatpush2.msra.mxu0 0.0
    %1975 = vmatprep.subr.mxu0 0.0
    %1976 = vmatpush2.msra.mxu0 0.0
    %1977 = vmatprep.subr.mxu0 0.0
    %1978 = vmatpush2.msra.mxu0 0.0
    %1979 = vmatprep.subr.mxu0 0.0
    %1980 = vmatpush2.msra.mxu0 0.0
    %1981 = vmatprep.subr.mxu0 0.0
    %1982 = vmatpush2.msra.mxu0 0.0
    %1983 = vmatprep.subr.mxu0 0.0
    %1984 = vmatpush2.msra.mxu0 0.0
    %1985 = vmatprep.subr.mxu0 0.0
    %1986 = vmatpush2.msra.mxu0 0.0
    %1987 = vmatprep.subr.mxu0 0.0
    %1988 = vmatpush2.msra.mxu0 0.0
    %1989 = vmatprep.subr.mxu0 0.0
    %1990 = vmatpush2.msra.mxu0 0.0
    %1991 = vmatprep.subr.mxu0 0.0
    %1992 = vmatpush2.msra.mxu0 0.0
    %1993 = vmatprep.subr.mxu0 0.0
    %1994 = vmatpush2.msra.mxu0 0.0
    %1995 = vmatprep.subr.mxu0 0.0
    %1996 = vmatpush2.msra.mxu0 0.0
    %1997 = vmatprep.subr.mxu0 0.0
    %1998 = vmatpush2.msra.mxu0 0.0
    %1999 = vmatprep.subr.mxu0 0.0
    %2000 = vmatpush2.msra.mxu0 0.0
    %2001 = vmatprep.subr.mxu0 0.0
    %2002 = vmatpush2.msra.mxu0 0.0
    %2003 = vmatprep.mubr.f32.mxu0 0.0
    %2004 = vmatmul.mubr.f32.gmra.mxu0 %v1937
    %v2005 = vpop.f32.mrf.mxu0
    %v2006 = vadd.f32 0.0, %v2005
    %v2007 = vpop.f32.mrf.mxu0
    %2008 = vdwg.mxu0
    %v2009 = vadd.f32 %v1936, %v2006
    %v2010 = vxor.u32 %v2009, 2147483648
    %v2011 = vmul.f32 %v2010, 1.442695
    %v2012 = vpow.pop %v2011
    %v2013 = vadd.f32 %v2012, 1.0
    %v2014 = vrcp.pop %v2013
    %v2015 = vmul.f32 1.0, %v2014
    %v2016 = vtanh.pop %v2009
    %v2017 = vmul.f32 %v2015, %v1924
    %2019 = vrot.lane.b32.xlu0 %v2016, 64
    %v2020 = vpop.permute.xlu0 %2019
    %v2022 = vmul.f32 %v2015, %v2020
    %2024 = vrot.lane.b32.xlu0 %v2022, 32
    %v2025 = vpop.permute.xlu0 %2024
    %v2027 = vadd.f32 %v2017, %v2025
    %v2028 = vtanh.pop %v2027
    %2030 = vrot.lane.b32.xlu0 %v2028, 64
    %v2031 = vpop.permute.xlu0 %2030
    %v2033 = vmul.f32 %v2015, %v2031
    %2035 = vrot.lane.b32.xlu0 %v2033, 32
    %v2036 = vpop.permute.xlu0 %2035
    %2038 = vst.msk [vmem:[%s1053] sm:$0xff] %vm318, %v2036
    %v2039 = vld [vmem:[%s1055] sm:$0xff]
    %v2040 = vsel %vm318, %v2036, 0
    %2042 = vmatprep.subr.mxu0 0.0
    %2043 = vmatpush1.msra.mxu0 0.0
    %2044 = vmatprep.subr.mxu0 0.0
    %2045 = vmatpush1.msra.mxu0 0.0
    %2046 = vmatprep.subr.mxu0 0.0
    %2047 = vmatpush1.msra.mxu0 0.0
    %2048 = vmatprep.subr.mxu0 0.0
    %2049 = vmatpush1.msra.mxu0 0.0
    %2050 = vmatprep.subr.mxu0 0.0
    %2051 = vmatpush1.msra.mxu0 0.0
    %2052 = vmatprep.subr.mxu0 0.0
    %2053 = vmatpush1.msra.mxu0 0.0
    %2054 = vmatprep.subr.mxu0 0.0
    %2055 = vmatpush1.msra.mxu0 0.0
    %2056 = vmatprep.subr.mxu0 0.0
    %2057 = vmatpush1.msra.mxu0 0.0
    %2058 = vmatprep.subr.mxu0 0.0
    %2059 = vmatpush1.msra.mxu0 0.0
    %2060 = vmatprep.subr.mxu0 0.0
    %2061 = vmatpush1.msra.mxu0 0.0
    %2062 = vmatprep.subr.mxu0 0.0
    %2063 = vmatpush1.msra.mxu0 0.0
    %2064 = vmatprep.subr.mxu0 0.0
    %2065 = vmatpush1.msra.mxu0 0.0
    %2066 = vmatprep.subr.mxu0 0.0
    %2067 = vmatpush1.msra.mxu0 %v1167
    %2068 = vmatprep.subr.mxu0 0.0
    %2069 = vmatpush1.msra.mxu0 %v1166
    %2070 = vmatprep.subr.mxu0 0.0
    %2071 = vmatpush1.msra.mxu0 %v1165
    %2072 = vmatprep.subr.mxu0 0.0
    %2073 = vmatpush1.msra.mxu0 %v1164
    %2074 = vmatprep.subr.mxu0 0.0
    %2075 = vmatpush2.msra.mxu0 0.0
    %2076 = vmatprep.subr.mxu0 0.0
    %2077 = vmatpush2.msra.mxu0 0.0
    %2078 = vmatprep.subr.mxu0 0.0
    %2079 = vmatpush2.msra.mxu0 0.0
    %2080 = vmatprep.subr.mxu0 0.0
    %2081 = vmatpush2.msra.mxu0 0.0
    %2082 = vmatprep.subr.mxu0 0.0
    %2083 = vmatpush2.msra.mxu0 0.0
    %2084 = vmatprep.subr.mxu0 0.0
    %2085 = vmatpush2.msra.mxu0 0.0
    %2086 = vmatprep.subr.mxu0 0.0
    %2087 = vmatpush2.msra.mxu0 0.0
    %2088 = vmatprep.subr.mxu0 0.0
    %2089 = vmatpush2.msra.mxu0 0.0
    %2090 = vmatprep.subr.mxu0 0.0
    %2091 = vmatpush2.msra.mxu0 0.0
    %2092 = vmatprep.subr.mxu0 0.0
    %2093 = vmatpush2.msra.mxu0 0.0
    %2094 = vmatprep.subr.mxu0 0.0
    %2095 = vmatpush2.msra.mxu0 0.0
    %2096 = vmatprep.subr.mxu0 0.0
    %2097 = vmatpush2.msra.mxu0 0.0
    %2098 = vmatprep.subr.mxu0 0.0
    %2099 = vmatpush2.msra.mxu0 0.0
    %2100 = vmatprep.subr.mxu0 0.0
    %2101 = vmatpush2.msra.mxu0 0.0
    %2102 = vmatprep.subr.mxu0 0.0
    %2103 = vmatpush2.msra.mxu0 0.0
    %2104 = vmatprep.subr.mxu0 0.0
    %2105 = vmatpush2.msra.mxu0 0.0
    %2106 = vmatprep.mubr.f32.mxu0 0.0
    %2107 = vmatmul.mubr.f32.gmra.mxu0 %v2040
    %v2108 = vpop.f32.mrf.mxu0
    %v2109 = vadd.f32 0.0, %v2108
    %v2110 = vpop.f32.mrf.mxu0
    %2111 = vdwg.mxu0
    %v2112 = vadd.f32 %v2039, %v2109
    %v2113 = vxor.u32 %v2112, 2147483648
    %v2114 = vmul.f32 %v2113, 1.442695
    %v2115 = vpow.pop %v2114
    %v2116 = vadd.f32 %v2115, 1.0
    %v2117 = vrcp.pop %v2116
    %v2118 = vmul.f32 1.0, %v2117
    %v2119 = vtanh.pop %v2112
    %v2120 = vmul.f32 %v2118, %v2027
    %2122 = vrot.lane.b32.xlu0 %v2119, 64
    %v2123 = vpop.permute.xlu0 %2122
    %v2125 = vmul.f32 %v2118, %v2123
    %2127 = vrot.lane.b32.xlu0 %v2125, 32
    %v2128 = vpop.permute.xlu0 %2127
    %v2130 = vadd.f32 %v2120, %v2128
    %v2131 = vtanh.pop %v2130
    %2133 = vrot.lane.b32.xlu0 %v2131, 64
    %v2134 = vpop.permute.xlu0 %2133
    %v2136 = vmul.f32 %v2118, %v2134
    %2138 = vrot.lane.b32.xlu0 %v2136, 32
    %v2139 = vpop.permute.xlu0 %2138
    %2141 = vst.msk [vmem:[%s1158] sm:$0xff] %vm318, %v2139
    %v2142 = vld [vmem:[#allocation2] sm:$0xff]
    %v2143 = vld [vmem:[#allocation2 + $0x8] sm:$0xff]
    %v2144 = vld [vmem:[#allocation2 + $0x10] sm:$0xff]
    %v2145 = vld [vmem:[#allocation2 + $0x18] sm:$0xff]
    %v2146 = vld [vmem:[#allocation2 + $0x20] sm:$0xff]
    %v2147 = vld [vmem:[#allocation2 + $0x28] sm:$0xff]
    %v2148 = vld [vmem:[#allocation2 + $0x30] sm:$0xff]
    %v2149 = vld [vmem:[#allocation2 + $0x38] sm:$0xff]
    %v2150 = vld [vmem:[%s10] sm:$0x1]
    %v2152 = vlaneseq
    %v2153 = vshrl.u32 %v2152, 7
    %v2154 = vsub.s32 0, %v2153
    %v2155 = vrot.slane %v2150, %v2154
    %v2157 = vmul.f32 %v2142, %v2155
    %v2158 = vmul.f32 %v2143, %v2155
    %v2159 = vmul.f32 %v2144, %v2155
    %v2160 = vmul.f32 %v2145, %v2155
    %v2161 = vmul.f32 %v2146, %v2155
    %v2162 = vmul.f32 %v2147, %v2155
    %v2163 = vmul.f32 %v2148, %v2155
    %v2164 = vmul.f32 %v2149, %v2155
    %v2165 = vsel %vm318, %v2157, 0.0
    %2166 = vadd.xlane.f32.xlu0 %v2165
    %v2167 = vpop.xlane.xlu0 %2166
    %v2168 = vsel %vm318, %v2158, 0.0
    %2169 = vadd.xlane.f32.xlu0 %v2168
    %v2170 = vpop.xlane.xlu0 %2169
    %v2171 = vsel %vm318, %v2159, 0.0
    %2172 = vadd.xlane.f32.xlu0 %v2171
    %v2173 = vpop.xlane.xlu0 %2172
    %v2174 = vsel %vm318, %v2160, 0.0
    %2175 = vadd.xlane.f32.xlu0 %v2174
    %v2176 = vpop.xlane.xlu0 %2175
    %v2177 = vsel %vm318, %v2161, 0.0
    %2178 = vadd.xlane.f32.xlu0 %v2177
    %v2179 = vpop.xlane.xlu0 %2178
    %v2180 = vsel %vm318, %v2162, 0.0
    %2181 = vadd.xlane.f32.xlu0 %v2180
    %v2182 = vpop.xlane.xlu0 %2181
    %v2183 = vsel %vm318, %v2163, 0.0
    %2184 = vadd.xlane.f32.xlu0 %v2183
    %v2185 = vpop.xlane.xlu0 %2184
    %v2186 = vsel %vm318, %v2164, 0.0
    %2187 = vadd.xlane.f32.xlu0 %v2186
    %v2188 = vpop.xlane.xlu0 %2187
    %v2189 = vld [vmem:[#allocation4] sm:$0x1]
    %s2190 = vtos %v2189
    %v2191 = vstv %s2190
    %v2192 = vadd.f32 %v2167, %v2191
    %v2193 = vadd.f32 %v2170, %v2191
    %v2194 = vadd.f32 %v2173, %v2191
    %v2195 = vadd.f32 %v2176, %v2191
    %v2196 = vadd.f32 %v2179, %v2191
    %v2197 = vadd.f32 %v2182, %v2191
    %v2198 = vadd.f32 %v2185, %v2191
    %v2199 = vadd.f32 %v2188, %v2191
    %v2208 = vlaneseq
    %v2209 = vand.u32 %v2208, 127
    %v2210 = vlaneseq
    %v2211 = vshrl.u32 %v2210, 7
    %v2212 = vsub.s32 %v2209, %v2211
    %v2213 = vrot.slane %v2192, %v2212
    %v2214 = vlaneseq
    %v2215 = vshrl.u32 %v2214, 7
    %v2216 = vsub.s32 %v2209, %v2215
    %v2217 = vrot.slane %v2193, %v2216
    %v2218 = vlaneseq
    %v2219 = vshrl.u32 %v2218, 7
    %v2220 = vsub.s32 %v2209, %v2219
    %v2221 = vrot.slane %v2194, %v2220
    %v2222 = vlaneseq
    %v2223 = vshrl.u32 %v2222, 7
    %v2224 = vsub.s32 %v2209, %v2223
    %v2225 = vrot.slane %v2195, %v2224
    %v2226 = vlaneseq
    %v2227 = vshrl.u32 %v2226, 7
    %v2228 = vsub.s32 %v2209, %v2227
    %v2229 = vrot.slane %v2196, %v2228
    %v2230 = vlaneseq
    %v2231 = vshrl.u32 %v2230, 7
    %v2232 = vsub.s32 %v2209, %v2231
    %v2233 = vrot.slane %v2197, %v2232
    %v2234 = vlaneseq
    %v2235 = vshrl.u32 %v2234, 7
    %v2236 = vsub.s32 %v2209, %v2235
    %v2237 = vrot.slane %v2198, %v2236
    %v2238 = vlaneseq
    %v2239 = vshrl.u32 %v2238, 7
    %v2240 = vsub.s32 %v2209, %v2239
    %v2241 = vrot.slane %v2199, %v2240
    %vm2242 = vcmask 1041409
    %v2243 = vsel %vm2242, %v2217, %v2213
    %vm2244 = vcmask 1042434
    %v2245 = vsel %vm2244, %v2221, %v2243
    %vm2246 = vcmask 1043459
    %v2247 = vsel %vm2246, %v2225, %v2245
    %vm2248 = vcmask 1044484
    %v2249 = vsel %vm2248, %v2229, %v2247
    %vm2250 = vcmask 1045509
    %v2251 = vsel %vm2250, %v2233, %v2249
    %vm2252 = vcmask 1046534
    %v2253 = vsel %vm2252, %v2237, %v2251
    %vm2254 = vcmask 1047559
    %v2255 = vsel %vm2254, %v2241, %v2253
    %vm2257 = vcmask 64512
    %2258 = vst.msk [vmem:[#allocation10] sm:$0xff] %vm2257, %v2255
    // Predicated region
    $region58: #{tpu_custom_call.1} parent=1 // pred_check
      _
    $region59: #{tpu_custom_call.1} parent=1 // pred_check_branch
      %2260 = sbr.rel (0) target = $region61
    $region60: #{tpu_custom_call.1} parent=1 // pred_region
      %s2262 = ssub.s32 128, 128
      %2263 = vsyncadd [#allocation7], %s2262
      %s2265 = sshll.u32 [#allocation10], 4
      %s2266 = int_to_ptr.vmem [resolvable:$true] %s2265
      %2268 = dma.vmem_to_hbm [thread:$0]  %s2266, 128, %s12, [#allocation7]
    $region61: #{tpu_custom_call.1} parent=1 // pred_fallthru
      _
    // Predicated region
    $region62: #{tpu_custom_call.1} parent=1 // pred_check
      _
    $region63: #{tpu_custom_call.1} parent=1 // pred_check_branch
      %2270 = sbr.rel (0) target = $region65
    $region64: #{tpu_custom_call.1} parent=1 // pred_region
      %2271 = dma.done [#allocation7], 128
    $region65: #{tpu_custom_call.1} parent=1 // pred_fallthru
      _
    %2272 = vsyncpa [#allocation6], 1
    %2273 = vsyncpa [#allocation9], 1
    %2274 = vsyncpa [#allocation7], 1

</llo_original>
